<compile_context>
chip_gen: v7x
topology: tpu7x:2x2x1
jax: 0.10.0
libtpu: 0.0.40
codegen_flags: <defaults>
</compile_context>

<pallas_src>
import jax
import jax.numpy as jnp
from jax.experimental import pallas as pl
from jax.experimental.pallas import tpu as pltpu


def _spec(shape):
    # Full-array block resident in VMEM (used for the grid-less calls).
    return pl.BlockSpec(shape, lambda: (0,) * len(shape))


def _pick_tile(n, target=512):
    """Largest row tile <= target that divides n and keeps 8-sublane alignment."""
    if n <= target:
        return n
    t = target - (target % 8)
    while t >= 8:
        if n % t == 0:
            return t
        t -= 8
    return n  # fall back to a single full block


# ---------------------------------------------------------------------------
# Kernel 1: conv (single fused K=3*Cin matmul) + per-tile BN statistics.
# ---------------------------------------------------------------------------
def _conv_stats_kernel(xc_ref, w_ref, y_ref, s1_ref, s2_ref):
    # xc: (TR, 3*Cin) im2col rows; w: (3*Cin, Cout); y: (TR, Cout) pre-BN output;
    # s1/s2: (1, 1, Cout) per-tile sum / sum-of-squares (reduced in the wrapper).
    acc = jnp.dot(xc_ref[...], w_ref[...], preferred_element_type=jnp.float32)
    y_ref[...] = acc
    s1_ref[0] = jnp.sum(acc, axis=0, keepdims=True)
    s2_ref[0] = jnp.sum(acc * acc, axis=0, keepdims=True)


# ---------------------------------------------------------------------------
# Kernel 2a: BatchNorm(batch stats) + ReLU + MaxPool1d(2), fused.
# Adjacent length positions are packed as [even | odd] along lanes (free reshape
# in the wrapper), so loads/stores stay dense and no 2-sublane padding appears.
# ---------------------------------------------------------------------------
def _bn_relu_pool_kernel(y2_ref, mean_ref, invstd_ref, o_ref):
    c = o_ref.shape[1]
    y2 = y2_ref[...]
    ymax = jnp.maximum(y2[:, 0:c], y2[:, c:2 * c])          # pool first: exact since
    o_ref[...] = jnp.maximum(                               # BN scale>0 and ReLU are monotone
        (ymax - mean_ref[...]) * invstd_ref[...], 0.0)


# Kernel 2b: BatchNorm + ReLU (no pool) -- used for non-final convs of a block.
def _bn_relu_kernel(y_ref, mean_ref, invstd_ref, o_ref):
    o_ref[...] = jnp.maximum((y_ref[...] - mean_ref[...]) * invstd_ref[...], 0.0)


def conv_bn_relu_maybe_pool(x, w, *, pool):
    # x: (B, L, Cin) NLC;  w: (3, Cin, Cout)  (no conv bias: cancelled by train-mode BN)
    B, L, Cin = x.shape
    Cout = w.shape[-1]

    # im2col once: single (B*L, 3*Cin) operand -> one fused K=3*Cin matmul per tile.
    xp = jnp.pad(x, ((0, 0), (1, 1), (0, 0)))
    xc = jnp.concatenate(
        [xp[:, 0:L, :], xp[:, 1:L + 1, :], xp[:, 2:L + 2, :]], axis=-1
    ).reshape(B * L, 3 * Cin)
    w2 = w.reshape(3 * Cin, Cout)

    nrows = B * L
    tr = _pick_tile(nrows)
    nt = nrows // tr

    y, s1, s2 = pl.pallas_call(
        _conv_stats_kernel,
        grid=(nt,),
        out_shape=(jax.ShapeDtypeStruct((nrows, Cout), jnp.float32),
                   jax.ShapeDtypeStruct((nt, 1, Cout), jnp.float32),
                   jax.ShapeDtypeStruct((nt, 1, Cout), jnp.float32)),
        in_specs=[pl.BlockSpec((tr, 3 * Cin), lambda i: (i, 0)),
                  pl.BlockSpec((3 * Cin, Cout), lambda i: (0, 0))],
        out_specs=(pl.BlockSpec((tr, Cout), lambda i: (i, 0)),
                   pl.BlockSpec((1, 1, Cout), lambda i: (i, 0, 0)),
                   pl.BlockSpec((1, 1, Cout), lambda i: (i, 0, 0))),
        compiler_params=pltpu.CompilerParams(dimension_semantics=("parallel",)),
    )(xc, w2)

    # BatchNorm1d training-mode statistics (one-pass): mean, E[x^2]-mean^2.
    n = jnp.float32(nrows)
    mean = jnp.sum(s1, axis=0) / n                 # (1, Cout)
    var = jnp.sum(s2, axis=0) / n - mean * mean
    invstd = jax.lax.rsqrt(var + 1e-5)

    if pool:
        nout = nrows // 2
        trp = _pick_tile(nout)
        ntp = nout // trp
        y2 = y.reshape(nout, 2 * Cout)             # free, contiguous reshape
        out = pl.pallas_call(
            _bn_relu_pool_kernel,
            grid=(ntp,),
            out_shape=jax.ShapeDtypeStruct((nout, Cout), jnp.float32),
            in_specs=[pl.BlockSpec((trp, 2 * Cout), lambda i: (i, 0)),
                      pl.BlockSpec((1, Cout), lambda i: (0, 0)),
                      pl.BlockSpec((1, Cout), lambda i: (0, 0))],
            out_specs=pl.BlockSpec((trp, Cout), lambda i: (i, 0)),
            compiler_params=pltpu.CompilerParams(dimension_semantics=("parallel",)),
        )(y2, mean, invstd)
        return out.reshape(B, L // 2, Cout)
    else:
        trp = _pick_tile(nrows)
        ntp = nrows // trp
        out = pl.pallas_call(
            _bn_relu_kernel,
            grid=(ntp,),
            out_shape=jax.ShapeDtypeStruct((nrows, Cout), jnp.float32),
            in_specs=[pl.BlockSpec((trp, Cout), lambda i: (i, 0)),
                      pl.BlockSpec((1, Cout), lambda i: (0, 0)),
                      pl.BlockSpec((1, Cout), lambda i: (0, 0))],
            out_specs=pl.BlockSpec((trp, Cout), lambda i: (i, 0)),
            compiler_params=pltpu.CompilerParams(dimension_semantics=("parallel",)),
        )(y, mean, invstd)
        return out.reshape(B, L, Cout)


# ---------------------------------------------------------------------------
# Kernel 3a: GRU input projection hoisted out of the recurrence (one big matmul).
# ---------------------------------------------------------------------------
def _gru_inproj_kernel(xf_ref, wih_ref, bih_ref, gx_ref):
    gx_ref[...] = (jnp.dot(xf_ref[...], wih_ref[...],
                           preferred_element_type=jnp.float32) + bih_ref[...])


# Kernel 3b: GRU recurrence only (PyTorch gate order r, z, n).  Runs a dynamic
# number of steps (t_samples + 1) so the call shape never depends on t_samples.
def _gru_rec_kernel(t_ref, gxr_ref, gxz_ref, gxn_ref, whh_ref, bhh_ref, h0_ref, hT_ref):
    # gx*: (Lz, B, H) precomputed input-gate activations; whh: (3, H, H); bhh: (3, 1, H)
    def step(t, h):
        ghr = jnp.dot(h, whh_ref[0], preferred_element_type=jnp.float32) + bhh_ref[0]
        ghz = jnp.dot(h, whh_ref[1], preferred_element_type=jnp.float32) + bhh_ref[1]
        ghn = jnp.dot(h, whh_ref[2], preferred_element_type=jnp.float32) + bhh_ref[2]
        r = jax.nn.sigmoid(gxr_ref[t] + ghr)
        z = jax.nn.sigmoid(gxz_ref[t] + ghz)
        n = jnp.tanh(gxn_ref[t] + r * ghn)
        return (1.0 - z) * n + z * h

    num_steps = t_ref[0] + 1                      # t_samples + 1 (dynamic, from SMEM)
    hT_ref[...] = jax.lax.fori_loop(0, num_steps, step, h0_ref[...])


def gru_forward(params, z, hidden, t_samples):
    # z: (B, Lz, 256);  hidden: (1, B, H);  returns hidden state after t_samples+1 steps.
    B, Lz, Din = z.shape
    H = params["whh"].shape[1]

    xf = jnp.transpose(z, (1, 0, 2)).reshape(Lz * B, Din)   # time-major rows
    gx = pl.pallas_call(
        _gru_inproj_kernel,
        out_shape=jax.ShapeDtypeStruct((Lz * B, 3 * H), jnp.float32),
        in_specs=[_spec(xf.shape), _spec(params["wih_t"].shape), _spec(params["b_ih"].shape)],
        out_specs=_spec((Lz * B, 3 * H)),
    )(xf, params["wih_t"], params["b_ih"])

    gx = gx.reshape(Lz, B, 3 * H)
    gxr, gxz, gxn = gx[..., 0:H], gx[..., H:2 * H], gx[..., 2 * H:3 * H]  # one-time split

    t_arr = jnp.reshape(t_samples, (1,)).astype(jnp.int32)
    h0 = hidden[0].astype(jnp.float32)
    hT = pl.pallas_call(
        _gru_rec_kernel,
        out_shape=jax.ShapeDtypeStruct((B, H), jnp.float32),
        in_specs=[pl.BlockSpec(memory_space=pltpu.MemorySpace.SMEM),
                  _spec(gxr.shape), _spec(gxz.shape), _spec(gxn.shape),
                  _spec(params["whh"].shape), _spec(params["b_hh"].shape),
                  _spec(h0.shape)],
        out_specs=_spec((B, H)),
    )(t_arr, gxr, gxz, gxn, params["whh"], params["b_hh"], h0)
    return hT


# ---------------------------------------------------------------------------
# Kernel 4: batched Wk projection + CPC/NCE loss + per-step "correct" counts.
# ---------------------------------------------------------------------------
def _nce_kernel(enc_ref, ct_ref, wk_ref, bk_ref, nce_ref, corr_ref):
    # enc: (ts, B, 256)  ct: (B, H)  wk: (H, ts*256)  bk: (1, ts*256)
    ts, B, D = enc_ref.shape
    row = jax.lax.broadcasted_iota(jnp.int32, (B, B), 0)
    col = jax.lax.broadcasted_iota(jnp.int32, (B, B), 1)
    eye = (row == col).astype(jnp.float32)
    colv = jax.lax.broadcasted_iota(jnp.int32, (1, B), 1)
    ts_ids = jax.lax.broadcasted_iota(jnp.int32, (1, ts), 1)

    # All ts Wk projections as ONE lane-dense matmul.
    pred_all = jnp.dot(ct_ref[...], wk_ref[...],
                       preferred_element_type=jnp.float32) + bk_ref[...]

    nce = jnp.zeros((1, 1), jnp.float32)
    corr_acc = jnp.zeros((1, ts), jnp.float32)
    for i in range(ts):                            # ts is small; static unroll
        pred = pred_all[:, i * D:(i + 1) * D]      # 256-aligned lane slice
        # total = encode_samples[i] @ pred.T       (B, B)
        total = jax.lax.dot_general(enc_ref[i], pred, (((1,), (1,)), ((), ())),
                                    preferred_element_type=jnp.float32)
        # softmax(dim=1) then argmax(dim=0), compared with arange(B)
        m1 = jnp.max(total, axis=1, keepdims=True)
        e = jnp.exp(total - m1)
        s = jnp.sum(e, axis=1, keepdims=True)
        sm = e / s
        mx0 = jnp.max(sm, axis=0, keepdims=True)
        am = jnp.min(jnp.where(sm >= mx0, row, B), axis=0, keepdims=True)   # (1, B)
        corr_i = jnp.sum((am == colv).astype(jnp.float32))
        corr_acc = corr_acc + corr_i * (ts_ids == i).astype(jnp.float32)
        # log_softmax(dim=1), sum of diagonal
        lsm = (total - m1) - jnp.log(s)
        nce = nce + jnp.sum(lsm * eye)

    nce_ref[...] = nce / (-1.0 * B * ts)
    corr_ref[...] = corr_acc


# ---------------------------------------------------------------------------
# Parameters (deterministic synthetic init, kaiming-fan_out-style scales).
# Conv bias omitted: it is cancelled exactly by train-mode BatchNorm.
# ---------------------------------------------------------------------------
def init_params(key, conv_arch, in_channels, hidden_gru, timestep):
    params = {}
    convs = []
    in_ch = in_channels
    for (num_convs, out_ch) in conv_arch:
        block = []
        for _ in range(num_convs):
            key, k1 = jax.random.split(key)
            fan_out = out_ch * 3
            w = jax.random.normal(k1, (3, in_ch, out_ch), jnp.float32) * jnp.sqrt(2.0 / fan_out)
            block.append(w)
            in_ch = out_ch
        convs.append(block)
    params["convs"] = convs

    H = hidden_gru
    key, k1, k2, k3, k4, k5, k6 = jax.random.split(key, 7)
    params["wih_t"] = (jax.random.normal(k1, (3 * H, 256), jnp.float32)
                       * jnp.sqrt(2.0 / (3 * H))).T                          # (256, 3H)
    whh = jax.random.normal(k2, (3, H, H), jnp.float32) * jnp.sqrt(2.0 / (3 * H))
    params["whh"] = jnp.transpose(whh, (0, 2, 1))                            # (3, H, H)
    params["b_ih"] = jax.random.uniform(k3, (1, 3 * H), jnp.float32, -0.1, 0.1)
    params["b_hh"] = jax.random.uniform(k4, (3, 1, H), jnp.float32, -0.1, 0.1)
    # Wk[i]: Linear(H, 256); stored stacked+transposed as one (H, ts*256) block.
    wk = jax.random.normal(k5, (timestep, 256, H), jnp.float32) * jnp.sqrt(2.0 / 256.0)
    params["wk_all"] = jnp.transpose(wk, (2, 0, 1)).reshape(H, timestep * 256)
    params["bk_all"] = jax.random.uniform(k6, (1, timestep * 256), jnp.float32, -0.1, 0.1)
    return params


# ---------------------------------------------------------------------------
# Forward pass (matches G_enc_original.forward semantics).  Fully device-side
# (no int()/device_get inside), so it is wrapped in jax.jit by the caller.
# ---------------------------------------------------------------------------
def g_enc_forward(params, x, hidden, key, *, timestep):
    B = x.shape[0]

    # encoder (vgg): NCW -> NLC
    z = jnp.transpose(x, (0, 2, 1)).astype(jnp.float32)
    for block in params["convs"]:
        nconv = len(block)
        for li, w in enumerate(block):
            z = conv_bn_relu_maybe_pool(z, w, pool=(li == nconv - 1))
    # z: (B, Lz, 256) == encoder(x).transpose(1, 2)
    Lz = z.shape[1]

    # t_samples = torch.randint(Lz - timestep, size=(1,))  -- kept on device.
    t_samples = jax.random.randint(key, (), 0, Lz - timestep)

    # encode_samples[i-1] = z[:, t_samples + i, :], i = 1..timestep  -> (ts, B, 256)
    enc = jnp.transpose(
        jax.lax.dynamic_slice_in_dim(z, t_samples + 1, timestep, axis=1), (1, 0, 2))

    # GRU over forward_seq = z[:, :t_samples+1, :]; c_t == final hidden state.
    hT = gru_forward(params, z, hidden, t_samples)
    c_t = hT
    hidden_out = hT[None, :, :]                                # (1, B, H)

    nce, corr = pl.pallas_call(
        _nce_kernel,
        out_shape=(jax.ShapeDtypeStruct((1, 1), jnp.float32),
                   jax.ShapeDtypeStruct((1, timestep), jnp.float32)),
        in_specs=[_spec(enc.shape), _spec(c_t.shape),
                  _spec(params["wk_all"].shape), _spec(params["bk_all"].shape)],
        out_specs=(_spec((1, 1)), _spec((1, timestep))),
    )(enc, c_t, params["wk_all"], params["bk_all"])

    accuracies = corr[0] / B          # device array (one entry per timestep)
    accuracy = corr[0, -1] / B        # device scalar (last timestep, like the reference)
    return accuracy, nce[0, 0], hidden_out, accuracies


if __name__ == "__main__":
    batch = 2
    in_channels = 12
    seq_len = 64
    conv_arch = [(1, 32), (1, 64), (1, 256)]   # last block must emit 256 (GRU input)
    timestep = 3
    hidden_gru = 32

    key = jax.random.PRNGKey(0)
    key, kx, kp, kt = jax.random.split(key, 4)
    x = jax.random.normal(kx, (batch, in_channels, seq_len), jnp.float32)   # NCW like PyTorch
    hidden = jnp.zeros((1, batch, hidden_gru), jnp.float32)
    params = init_params(kp, conv_arch, in_channels, hidden_gru, timestep)

    fwd = jax.jit(g_enc_forward, static_argnames=("timestep",))
    accuracy, nce, hidden_out, accuracies = fwd(params, x, hidden, kt, timestep=timestep)
    jax.block_until_ready((accuracy, nce, hidden_out, accuracies))
    print("KERNEL_OK")
</pallas_src>

<mosaic_0001>
module attributes {stable_mosaic.version = 11 : i64} {
  func.func @_conv_stats_kernel(%arg0: i32, %arg1: memref<128x36xf32, #tpu.memory_space<vmem>>, %arg2: memref<36x32xf32, #tpu.memory_space<vmem>>, %arg3: memref<128x32xf32, #tpu.memory_space<vmem>>, %arg4: memref<1x1x32xf32, #tpu.memory_space<vmem>>, %arg5: memref<1x1x32xf32, #tpu.memory_space<vmem>>) attributes {dimension_semantics = [#tpu.dimension_semantics<parallel>], iteration_bounds = array<i64: 1>, scalar_prefetch = 0 : i64, scratch_operands = 0 : i64, tpu.core_type = #tpu.core_type<tc>, window_params = [{transform_indices = @transform_0, window_bounds = array<i64: 128, 36>}, {pipeline_mode = #tpu.pipeline_mode<synchronous>, transform_indices = @transform_1, window_bounds = array<i64: 36, 32>}, {transform_indices = @transform_2, window_bounds = array<i64: 128, 32>}, {transform_indices = @transform_3, window_bounds = array<i64: 1, 1, 32>}, {transform_indices = @transform_4, window_bounds = array<i64: 1, 1, 32>}]} {
    %c0 = arith.constant 0 : index
    %c0_0 = arith.constant 0 : index
    %0 = vector.load %arg1[%c0, %c0_0] : memref<128x36xf32, #tpu.memory_space<vmem>>, vector<128x36xf32>
    %c0_1 = arith.constant 0 : index
    %c0_2 = arith.constant 0 : index
    %1 = vector.load %arg2[%c0_1, %c0_2] : memref<36x32xf32, #tpu.memory_space<vmem>>, vector<36x32xf32>
    %cst = arith.constant dense<0.000000e+00> : vector<128x32xf32>
    %2 = tpu.matmul %0, %1, %cst {dimension_numbers = #tpu.dot_dimension_numbers<[1], [0], [0], [1], [0, 0, 1, 1], [], []>} : vector<128x36xf32>, vector<36x32xf32>, vector<128x32xf32> -> vector<128x32xf32>
    %c0_3 = arith.constant 0 : index
    %c0_4 = arith.constant 0 : index
    %3 = vector.load %arg3[%c0_3, %c0_4] : memref<128x32xf32, #tpu.memory_space<vmem>>, vector<128x32xf32>
    tpu.vector_store %arg3[%c0_3, %c0_4], %2 {strides = array<i32>} : memref<128x32xf32, #tpu.memory_space<vmem>>, vector<128x32xf32>,
    %cst_5 = arith.constant dense<0.000000e+00> : vector<32xf32>
    %4 = vector.multi_reduction <add>, %2, %cst_5 [0] : vector<128x32xf32> to vector<32xf32>
    %5 = vector.shape_cast %4 : vector<32xf32> to vector<1x32xf32>
    %c0_6 = arith.constant 0 : index
    %c0_7 = arith.constant 0 : index
    %c0_8 = arith.constant 0 : index
    %6 = vector.load %arg4[%c0_6, %c0_7, %c0_8] : memref<1x1x32xf32, #tpu.memory_space<vmem>>, vector<1x1x32xf32>
    %7 = vector.shape_cast %6 : vector<1x1x32xf32> to vector<1x32xf32>
    %8 = vector.shape_cast %5 : vector<1x32xf32> to vector<1x1x32xf32>
    tpu.vector_store %arg4[%c0_6, %c0_7, %c0_8], %8 {strides = array<i32>} : memref<1x1x32xf32, #tpu.memory_space<vmem>>, vector<1x1x32xf32>,
    %9 = arith.mulf %2, %2 : vector<128x32xf32>
    %cst_9 = arith.constant dense<0.000000e+00> : vector<32xf32>
    %10 = vector.multi_reduction <add>, %9, %cst_9 [0] : vector<128x32xf32> to vector<32xf32>
    %11 = vector.shape_cast %10 : vector<32xf32> to vector<1x32xf32>
    %c0_10 = arith.constant 0 : index
    %c0_11 = arith.constant 0 : index
    %c0_12 = arith.constant 0 : index
    %12 = vector.load %arg5[%c0_10, %c0_11, %c0_12] : memref<1x1x32xf32, #tpu.memory_space<vmem>>, vector<1x1x32xf32>
    %13 = vector.shape_cast %12 : vector<1x1x32xf32> to vector<1x32xf32>
    %14 = vector.shape_cast %11 : vector<1x32xf32> to vector<1x1x32xf32>
    tpu.vector_store %arg5[%c0_10, %c0_11, %c0_12], %14 {strides = array<i32>} : memref<1x1x32xf32, #tpu.memory_space<vmem>>, vector<1x1x32xf32>,
    return
  }
  func.func @transform_0(%arg0: i32) -> (i32, i32) {
    %c0_i32 = arith.constant 0 : i32
    %c0_i32_0 = arith.constant 0 : i32
    return %arg0, %c0_i32 : i32, i32
  }
  func.func @transform_1(%arg0: i32) -> (i32, i32) {
    %c0_i32 = arith.constant 0 : i32
    %c0_i32_0 = arith.constant 0 : i32
    %c0_i32_1 = arith.constant 0 : i32
    return %c0_i32, %c0_i32_0 : i32, i32
  }
  func.func @transform_2(%arg0: i32) -> (i32, i32) {
    %c0_i32 = arith.constant 0 : i32
    %c0_i32_0 = arith.constant 0 : i32
    return %arg0, %c0_i32 : i32, i32
  }
  func.func @transform_3(%arg0: i32) -> (i32, i32, i32) {
    %c0_i32 = arith.constant 0 : i32
    %c0_i32_0 = arith.constant 0 : i32
    %c0_i32_1 = arith.constant 0 : i32
    return %arg0, %c0_i32, %c0_i32_0 : i32, i32, i32
  }
  func.func @transform_4(%arg0: i32) -> (i32, i32, i32) {
    %c0_i32 = arith.constant 0 : i32
    %c0_i32_0 = arith.constant 0 : i32
    %c0_i32_1 = arith.constant 0 : i32
    return %arg0, %c0_i32, %c0_i32_0 : i32, i32, i32
  }
}

module attributes {stable_mosaic.version = 11 : i64} {
  func.func @_bn_relu_pool_kernel(%arg0: i32, %arg1: memref<64x64xf32, #tpu.memory_space<vmem>>, %arg2: memref<1x32xf32, #tpu.memory_space<vmem>>, %arg3: memref<1x32xf32, #tpu.memory_space<vmem>>, %arg4: memref<64x32xf32, #tpu.memory_space<vmem>>) attributes {dimension_semantics = [#tpu.dimension_semantics<parallel>], iteration_bounds = array<i64: 1>, scalar_prefetch = 0 : i64, scratch_operands = 0 : i64, tpu.core_type = #tpu.core_type<tc>, window_params = [{transform_indices = @transform_0, window_bounds = array<i64: 64, 64>}, {pipeline_mode = #tpu.pipeline_mode<synchronous>, transform_indices = @transform_1, window_bounds = array<i64: 1, 32>}, {pipeline_mode = #tpu.pipeline_mode<synchronous>, transform_indices = @transform_2, window_bounds = array<i64: 1, 32>}, {transform_indices = @transform_3, window_bounds = array<i64: 64, 32>}]} {
    %c0 = arith.constant 0 : index
    %c0_0 = arith.constant 0 : index
    %0 = vector.load %arg1[%c0, %c0_0] : memref<64x64xf32, #tpu.memory_space<vmem>>, vector<64x64xf32>
    %1 = vector.extract_strided_slice %0 {offsets = [0, 0], sizes = [64, 32], strides = [1, 1]} : vector<64x64xf32> to vector<64x32xf32>
    %2 = vector.extract_strided_slice %0 {offsets = [0, 32], sizes = [64, 32], strides = [1, 1]} : vector<64x64xf32> to vector<64x32xf32>
    %3 = arith.maximumf %1, %2 : vector<64x32xf32>
    %c0_1 = arith.constant 0 : index
    %c0_2 = arith.constant 0 : index
    %4 = vector.load %arg2[%c0_1, %c0_2] : memref<1x32xf32, #tpu.memory_space<vmem>>, vector<1x32xf32>
    %5 = vector.broadcast %4 : vector<1x32xf32> to vector<64x32xf32>
    %6 = arith.subf %3, %5 : vector<64x32xf32>
    %c0_3 = arith.constant 0 : index
    %c0_4 = arith.constant 0 : index
    %7 = vector.load %arg3[%c0_3, %c0_4] : memref<1x32xf32, #tpu.memory_space<vmem>>, vector<1x32xf32>
    %8 = vector.broadcast %7 : vector<1x32xf32> to vector<64x32xf32>
    %9 = arith.mulf %6, %8 : vector<64x32xf32>
    %cst = arith.constant 0.000000e+00 : f32
    %10 = vector.broadcast %cst : f32 to vector<64x32xf32>
    %11 = arith.maximumf %9, %10 : vector<64x32xf32>
    %c0_5 = arith.constant 0 : index
    %c0_6 = arith.constant 0 : index
    %12 = vector.load %arg4[%c0_5, %c0_6] : memref<64x32xf32, #tpu.memory_space<vmem>>, vector<64x32xf32>
    tpu.vector_store %arg4[%c0_5, %c0_6], %11 {strides = array<i32>} : memref<64x32xf32, #tpu.memory_space<vmem>>, vector<64x32xf32>,
    return
  }
  func.func @transform_0(%arg0: i32) -> (i32, i32) {
    %c0_i32 = arith.constant 0 : i32
    %c0_i32_0 = arith.constant 0 : i32
    return %arg0, %c0_i32 : i32, i32
  }
  func.func @transform_1(%arg0: i32) -> (i32, i32) {
    %c0_i32 = arith.constant 0 : i32
    %c0_i32_0 = arith.constant 0 : i32
    %c0_i32_1 = arith.constant 0 : i32
    return %c0_i32, %c0_i32_0 : i32, i32
  }
  func.func @transform_2(%arg0: i32) -> (i32, i32) {
    %c0_i32 = arith.constant 0 : i32
    %c0_i32_0 = arith.constant 0 : i32
    %c0_i32_1 = arith.constant 0 : i32
    return %c0_i32, %c0_i32_0 : i32, i32
  }
  func.func @transform_3(%arg0: i32) -> (i32, i32) {
    %c0_i32 = arith.constant 0 : i32
    %c0_i32_0 = arith.constant 0 : i32
    return %arg0, %c0_i32 : i32, i32
  }
}

module attributes {stable_mosaic.version = 11 : i64} {
  func.func @_conv_stats_kernel(%arg0: i32, %arg1: memref<64x96xf32, #tpu.memory_space<vmem>>, %arg2: memref<96x64xf32, #tpu.memory_space<vmem>>, %arg3: memref<64x64xf32, #tpu.memory_space<vmem>>, %arg4: memref<1x1x64xf32, #tpu.memory_space<vmem>>, %arg5: memref<1x1x64xf32, #tpu.memory_space<vmem>>) attributes {dimension_semantics = [#tpu.dimension_semantics<parallel>], iteration_bounds = array<i64: 1>, scalar_prefetch = 0 : i64, scratch_operands = 0 : i64, tpu.core_type = #tpu.core_type<tc>, window_params = [{transform_indices = @transform_0, window_bounds = array<i64: 64, 96>}, {pipeline_mode = #tpu.pipeline_mode<synchronous>, transform_indices = @transform_1, window_bounds = array<i64: 96, 64>}, {transform_indices = @transform_2, window_bounds = array<i64: 64, 64>}, {transform_indices = @transform_3, window_bounds = array<i64: 1, 1, 64>}, {transform_indices = @transform_4, window_bounds = array<i64: 1, 1, 64>}]} {
    %c0 = arith.constant 0 : index
    %c0_0 = arith.constant 0 : index
    %0 = vector.load %arg1[%c0, %c0_0] : memref<64x96xf32, #tpu.memory_space<vmem>>, vector<64x96xf32>
    %c0_1 = arith.constant 0 : index
    %c0_2 = arith.constant 0 : index
    %1 = vector.load %arg2[%c0_1, %c0_2] : memref<96x64xf32, #tpu.memory_space<vmem>>, vector<96x64xf32>
    %cst = arith.constant dense<0.000000e+00> : vector<64x64xf32>
    %2 = tpu.matmul %0, %1, %cst {dimension_numbers = #tpu.dot_dimension_numbers<[1], [0], [0], [1], [0, 0, 1, 1], [], []>} : vector<64x96xf32>, vector<96x64xf32>, vector<64x64xf32> -> vector<64x64xf32>
    %c0_3 = arith.constant 0 : index
    %c0_4 = arith.constant 0 : index
    %3 = vector.load %arg3[%c0_3, %c0_4] : memref<64x64xf32, #tpu.memory_space<vmem>>, vector<64x64xf32>
    tpu.vector_store %arg3[%c0_3, %c0_4], %2 {strides = array<i32>} : memref<64x64xf32, #tpu.memory_space<vmem>>, vector<64x64xf32>,
    %cst_5 = arith.constant dense<0.000000e+00> : vector<64xf32>
    %4 = vector.multi_reduction <add>, %2, %cst_5 [0] : vector<64x64xf32> to vector<64xf32>
    %5 = vector.shape_cast %4 : vector<64xf32> to vector<1x64xf32>
    %c0_6 = arith.constant 0 : index
    %c0_7 = arith.constant 0 : index
    %c0_8 = arith.constant 0 : index
    %6 = vector.load %arg4[%c0_6, %c0_7, %c0_8] : memref<1x1x64xf32, #tpu.memory_space<vmem>>, vector<1x1x64xf32>
    %7 = vector.shape_cast %6 : vector<1x1x64xf32> to vector<1x64xf32>
    %8 = vector.shape_cast %5 : vector<1x64xf32> to vector<1x1x64xf32>
    tpu.vector_store %arg4[%c0_6, %c0_7, %c0_8], %8 {strides = array<i32>} : memref<1x1x64xf32, #tpu.memory_space<vmem>>, vector<1x1x64xf32>,
    %9 = arith.mulf %2, %2 : vector<64x64xf32>
    %cst_9 = arith.constant dense<0.000000e+00> : vector<64xf32>
    %10 = vector.multi_reduction <add>, %9, %cst_9 [0] : vector<64x64xf32> to vector<64xf32>
    %11 = vector.shape_cast %10 : vector<64xf32> to vector<1x64xf32>
    %c0_10 = arith.constant 0 : index
    %c0_11 = arith.constant 0 : index
    %c0_12 = arith.constant 0 : index
    %12 = vector.load %arg5[%c0_10, %c0_11, %c0_12] : memref<1x1x64xf32, #tpu.memory_space<vmem>>, vector<1x1x64xf32>
    %13 = vector.shape_cast %12 : vector<1x1x64xf32> to vector<1x64xf32>
    %14 = vector.shape_cast %11 : vector<1x64xf32> to vector<1x1x64xf32>
    tpu.vector_store %arg5[%c0_10, %c0_11, %c0_12], %14 {strides = array<i32>} : memref<1x1x64xf32, #tpu.memory_space<vmem>>, vector<1x1x64xf32>,
    return
  }
  func.func @transform_0(%arg0: i32) -> (i32, i32) {
    %c0_i32 = arith.constant 0 : i32
    %c0_i32_0 = arith.constant 0 : i32
    return %arg0, %c0_i32 : i32, i32
  }
  func.func @transform_1(%arg0: i32) -> (i32, i32) {
    %c0_i32 = arith.constant 0 : i32
    %c0_i32_0 = arith.constant 0 : i32
    %c0_i32_1 = arith.constant 0 : i32
    return %c0_i32, %c0_i32_0 : i32, i32
  }
  func.func @transform_2(%arg0: i32) -> (i32, i32) {
    %c0_i32 = arith.constant 0 : i32
    %c0_i32_0 = arith.constant 0 : i32
    return %arg0, %c0_i32 : i32, i32
  }
  func.func @transform_3(%arg0: i32) -> (i32, i32, i32) {
    %c0_i32 = arith.constant 0 : i32
    %c0_i32_0 = arith.constant 0 : i32
    %c0_i32_1 = arith.constant 0 : i32
    return %arg0, %c0_i32, %c0_i32_0 : i32, i32, i32
  }
  func.func @transform_4(%arg0: i32) -> (i32, i32, i32) {
    %c0_i32 = arith.constant 0 : i32
    %c0_i32_0 = arith.constant 0 : i32
    %c0_i32_1 = arith.constant 0 : i32
    return %arg0, %c0_i32, %c0_i32_0 : i32, i32, i32
  }
}

module attributes {stable_mosaic.version = 11 : i64} {
  func.func @_bn_relu_pool_kernel(%arg0: i32, %arg1: memref<32x128xf32, #tpu.memory_space<vmem>>, %arg2: memref<1x64xf32, #tpu.memory_space<vmem>>, %arg3: memref<1x64xf32, #tpu.memory_space<vmem>>, %arg4: memref<32x64xf32, #tpu.memory_space<vmem>>) attributes {dimension_semantics = [#tpu.dimension_semantics<parallel>], iteration_bounds = array<i64: 1>, scalar_prefetch = 0 : i64, scratch_operands = 0 : i64, tpu.core_type = #tpu.core_type<tc>, window_params = [{transform_indices = @transform_0, window_bounds = array<i64: 32, 128>}, {pipeline_mode = #tpu.pipeline_mode<synchronous>, transform_indices = @transform_1, window_bounds = array<i64: 1, 64>}, {pipeline_mode = #tpu.pipeline_mode<synchronous>, transform_indices = @transform_2, window_bounds = array<i64: 1, 64>}, {transform_indices = @transform_3, window_bounds = array<i64: 32, 64>}]} {
    %c0 = arith.constant 0 : index
    %c0_0 = arith.constant 0 : index
    %0 = vector.load %arg1[%c0, %c0_0] : memref<32x128xf32, #tpu.memory_space<vmem>>, vector<32x128xf32>
    %1 = vector.extract_strided_slice %0 {offsets = [0, 0], sizes = [32, 64], strides = [1, 1]} : vector<32x128xf32> to vector<32x64xf32>
    %2 = vector.extract_strided_slice %0 {offsets = [0, 64], sizes = [32, 64], strides = [1, 1]} : vector<32x128xf32> to vector<32x64xf32>
    %3 = arith.maximumf %1, %2 : vector<32x64xf32>
    %c0_1 = arith.constant 0 : index
    %c0_2 = arith.constant 0 : index
    %4 = vector.load %arg2[%c0_1, %c0_2] : memref<1x64xf32, #tpu.memory_space<vmem>>, vector<1x64xf32>
    %5 = vector.broadcast %4 : vector<1x64xf32> to vector<32x64xf32>
    %6 = arith.subf %3, %5 : vector<32x64xf32>
    %c0_3 = arith.constant 0 : index
    %c0_4 = arith.constant 0 : index
    %7 = vector.load %arg3[%c0_3, %c0_4] : memref<1x64xf32, #tpu.memory_space<vmem>>, vector<1x64xf32>
    %8 = vector.broadcast %7 : vector<1x64xf32> to vector<32x64xf32>
    %9 = arith.mulf %6, %8 : vector<32x64xf32>
    %cst = arith.constant 0.000000e+00 : f32
    %10 = vector.broadcast %cst : f32 to vector<32x64xf32>
    %11 = arith.maximumf %9, %10 : vector<32x64xf32>
    %c0_5 = arith.constant 0 : index
    %c0_6 = arith.constant 0 : index
    %12 = vector.load %arg4[%c0_5, %c0_6] : memref<32x64xf32, #tpu.memory_space<vmem>>, vector<32x64xf32>
    tpu.vector_store %arg4[%c0_5, %c0_6], %11 {strides = array<i32>} : memref<32x64xf32, #tpu.memory_space<vmem>>, vector<32x64xf32>,
    return
  }
  func.func @transform_0(%arg0: i32) -> (i32, i32) {
    %c0_i32 = arith.constant 0 : i32
    %c0_i32_0 = arith.constant 0 : i32
    return %arg0, %c0_i32 : i32, i32
  }
  func.func @transform_1(%arg0: i32) -> (i32, i32) {
    %c0_i32 = arith.constant 0 : i32
    %c0_i32_0 = arith.constant 0 : i32
    %c0_i32_1 = arith.constant 0 : i32
    return %c0_i32, %c0_i32_0 : i32, i32
  }
  func.func @transform_2(%arg0: i32) -> (i32, i32) {
    %c0_i32 = arith.constant 0 : i32
    %c0_i32_0 = arith.constant 0 : i32
    %c0_i32_1 = arith.constant 0 : i32
    return %c0_i32, %c0_i32_0 : i32, i32
  }
  func.func @transform_3(%arg0: i32) -> (i32, i32) {
    %c0_i32 = arith.constant 0 : i32
    %c0_i32_0 = arith.constant 0 : i32
    return %arg0, %c0_i32 : i32, i32
  }
}

module attributes {stable_mosaic.version = 11 : i64} {
  func.func @_bn_relu_pool_kernel(%arg0: i32, %arg1: memref<16x512xf32, #tpu.memory_space<vmem>>, %arg2: memref<1x256xf32, #tpu.memory_space<vmem>>, %arg3: memref<1x256xf32, #tpu.memory_space<vmem>>, %arg4: memref<16x256xf32, #tpu.memory_space<vmem>>) attributes {dimension_semantics = [#tpu.dimension_semantics<parallel>], iteration_bounds = array<i64: 1>, scalar_prefetch = 0 : i64, scratch_operands = 0 : i64, tpu.core_type = #tpu.core_type<tc>, window_params = [{transform_indices = @transform_0, window_bounds = array<i64: 16, 512>}, {pipeline_mode = #tpu.pipeline_mode<synchronous>, transform_indices = @transform_1, window_bounds = array<i64: 1, 256>}, {pipeline_mode = #tpu.pipeline_mode<synchronous>, transform_indices = @transform_2, window_bounds = array<i64: 1, 256>}, {transform_indices = @transform_3, window_bounds = array<i64: 16, 256>}]} {
    %c0 = arith.constant 0 : index
    %c0_0 = arith.constant 0 : index
    %0 = vector.load %arg1[%c0, %c0_0] : memref<16x512xf32, #tpu.memory_space<vmem>>, vector<16x512xf32>
    %1 = vector.extract_strided_slice %0 {offsets = [0, 0], sizes = [16, 256], strides = [1, 1]} : vector<16x512xf32> to vector<16x256xf32>
    %2 = vector.extract_strided_slice %0 {offsets = [0, 256], sizes = [16, 256], strides = [1, 1]} : vector<16x512xf32> to vector<16x256xf32>
    %3 = arith.maximumf %1, %2 : vector<16x256xf32>
    %c0_1 = arith.constant 0 : index
    %c0_2 = arith.constant 0 : index
    %4 = vector.load %arg2[%c0_1, %c0_2] : memref<1x256xf32, #tpu.memory_space<vmem>>, vector<1x256xf32>
    %5 = vector.broadcast %4 : vector<1x256xf32> to vector<16x256xf32>
    %6 = arith.subf %3, %5 : vector<16x256xf32>
    %c0_3 = arith.constant 0 : index
    %c0_4 = arith.constant 0 : index
    %7 = vector.load %arg3[%c0_3, %c0_4] : memref<1x256xf32, #tpu.memory_space<vmem>>, vector<1x256xf32>
    %8 = vector.broadcast %7 : vector<1x256xf32> to vector<16x256xf32>
    %9 = arith.mulf %6, %8 : vector<16x256xf32>
    %cst = arith.constant 0.000000e+00 : f32
    %10 = vector.broadcast %cst : f32 to vector<16x256xf32>
    %11 = arith.maximumf %9, %10 : vector<16x256xf32>
    %c0_5 = arith.constant 0 : index
    %c0_6 = arith.constant 0 : index
    %12 = vector.load %arg4[%c0_5, %c0_6] : memref<16x256xf32, #tpu.memory_space<vmem>>, vector<16x256xf32>
    tpu.vector_store %arg4[%c0_5, %c0_6], %11 {strides = array<i32>} : memref<16x256xf32, #tpu.memory_space<vmem>>, vector<16x256xf32>,
    return
  }
  func.func @transform_0(%arg0: i32) -> (i32, i32) {
    %c0_i32 = arith.constant 0 : i32
    %c0_i32_0 = arith.constant 0 : i32
    return %arg0, %c0_i32 : i32, i32
  }
  func.func @transform_1(%arg0: i32) -> (i32, i32) {
    %c0_i32 = arith.constant 0 : i32
    %c0_i32_0 = arith.constant 0 : i32
    %c0_i32_1 = arith.constant 0 : i32
    return %c0_i32, %c0_i32_0 : i32, i32
  }
  func.func @transform_2(%arg0: i32) -> (i32, i32) {
    %c0_i32 = arith.constant 0 : i32
    %c0_i32_0 = arith.constant 0 : i32
    %c0_i32_1 = arith.constant 0 : i32
    return %c0_i32, %c0_i32_0 : i32, i32
  }
  func.func @transform_3(%arg0: i32) -> (i32, i32) {
    %c0_i32 = arith.constant 0 : i32
    %c0_i32_0 = arith.constant 0 : i32
    return %arg0, %c0_i32 : i32, i32
  }
}

module attributes {stable_mosaic.version = 11 : i64} {
  func.func @_conv_stats_kernel(%arg0: i32, %arg1: memref<32x192xf32, #tpu.memory_space<vmem>>, %arg2: memref<192x256xf32, #tpu.memory_space<vmem>>, %arg3: memref<32x256xf32, #tpu.memory_space<vmem>>, %arg4: memref<1x1x256xf32, #tpu.memory_space<vmem>>, %arg5: memref<1x1x256xf32, #tpu.memory_space<vmem>>) attributes {dimension_semantics = [#tpu.dimension_semantics<parallel>], iteration_bounds = array<i64: 1>, scalar_prefetch = 0 : i64, scratch_operands = 0 : i64, tpu.core_type = #tpu.core_type<tc>, window_params = [{transform_indices = @transform_0, window_bounds = array<i64: 32, 192>}, {pipeline_mode = #tpu.pipeline_mode<synchronous>, transform_indices = @transform_1, window_bounds = array<i64: 192, 256>}, {transform_indices = @transform_2, window_bounds = array<i64: 32, 256>}, {transform_indices = @transform_3, window_bounds = array<i64: 1, 1, 256>}, {transform_indices = @transform_4, window_bounds = array<i64: 1, 1, 256>}]} {
    %c0 = arith.constant 0 : index
    %c0_0 = arith.constant 0 : index
    %0 = vector.load %arg1[%c0, %c0_0] : memref<32x192xf32, #tpu.memory_space<vmem>>, vector<32x192xf32>
    %c0_1 = arith.constant 0 : index
    %c0_2 = arith.constant 0 : index
    %1 = vector.load %arg2[%c0_1, %c0_2] : memref<192x256xf32, #tpu.memory_space<vmem>>, vector<192x256xf32>
    %cst = arith.constant dense<0.000000e+00> : vector<32x256xf32>
    %2 = tpu.matmul %0, %1, %cst {dimension_numbers = #tpu.dot_dimension_numbers<[1], [0], [0], [1], [0, 0, 1, 1], [], []>} : vector<32x192xf32>, vector<192x256xf32>, vector<32x256xf32> -> vector<32x256xf32>
    %c0_3 = arith.constant 0 : index
    %c0_4 = arith.constant 0 : index
    %3 = vector.load %arg3[%c0_3, %c0_4] : memref<32x256xf32, #tpu.memory_space<vmem>>, vector<32x256xf32>
    tpu.vector_store %arg3[%c0_3, %c0_4], %2 {strides = array<i32>} : memref<32x256xf32, #tpu.memory_space<vmem>>, vector<32x256xf32>,
    %cst_5 = arith.constant dense<0.000000e+00> : vector<256xf32>
    %4 = vector.multi_reduction <add>, %2, %cst_5 [0] : vector<32x256xf32> to vector<256xf32>
    %5 = vector.shape_cast %4 : vector<256xf32> to vector<1x256xf32>
    %c0_6 = arith.constant 0 : index
    %c0_7 = arith.constant 0 : index
    %c0_8 = arith.constant 0 : index
    %6 = vector.load %arg4[%c0_6, %c0_7, %c0_8] : memref<1x1x256xf32, #tpu.memory_space<vmem>>, vector<1x1x256xf32>
    %7 = vector.shape_cast %6 : vector<1x1x256xf32> to vector<1x256xf32>
    %8 = vector.shape_cast %5 : vector<1x256xf32> to vector<1x1x256xf32>
    tpu.vector_store %arg4[%c0_6, %c0_7, %c0_8], %8 {strides = array<i32>} : memref<1x1x256xf32, #tpu.memory_space<vmem>>, vector<1x1x256xf32>,
    %9 = arith.mulf %2, %2 : vector<32x256xf32>
    %cst_9 = arith.constant dense<0.000000e+00> : vector<256xf32>
    %10 = vector.multi_reduction <add>, %9, %cst_9 [0] : vector<32x256xf32> to vector<256xf32>
    %11 = vector.shape_cast %10 : vector<256xf32> to vector<1x256xf32>
    %c0_10 = arith.constant 0 : index
    %c0_11 = arith.constant 0 : index
    %c0_12 = arith.constant 0 : index
    %12 = vector.load %arg5[%c0_10, %c0_11, %c0_12] : memref<1x1x256xf32, #tpu.memory_space<vmem>>, vector<1x1x256xf32>
    %13 = vector.shape_cast %12 : vector<1x1x256xf32> to vector<1x256xf32>
    %14 = vector.shape_cast %11 : vector<1x256xf32> to vector<1x1x256xf32>
    tpu.vector_store %arg5[%c0_10, %c0_11, %c0_12], %14 {strides = array<i32>} : memref<1x1x256xf32, #tpu.memory_space<vmem>>, vector<1x1x256xf32>,
    return
  }
  func.func @transform_0(%arg0: i32) -> (i32, i32) {
    %c0_i32 = arith.constant 0 : i32
    %c0_i32_0 = arith.constant 0 : i32
    return %arg0, %c0_i32 : i32, i32
  }
  func.func @transform_1(%arg0: i32) -> (i32, i32) {
    %c0_i32 = arith.constant 0 : i32
    %c0_i32_0 = arith.constant 0 : i32
    %c0_i32_1 = arith.constant 0 : i32
    return %c0_i32, %c0_i32_0 : i32, i32
  }
  func.func @transform_2(%arg0: i32) -> (i32, i32) {
    %c0_i32 = arith.constant 0 : i32
    %c0_i32_0 = arith.constant 0 : i32
    return %arg0, %c0_i32 : i32, i32
  }
  func.func @transform_3(%arg0: i32) -> (i32, i32, i32) {
    %c0_i32 = arith.constant 0 : i32
    %c0_i32_0 = arith.constant 0 : i32
    %c0_i32_1 = arith.constant 0 : i32
    return %arg0, %c0_i32, %c0_i32_0 : i32, i32, i32
  }
  func.func @transform_4(%arg0: i32) -> (i32, i32, i32) {
    %c0_i32 = arith.constant 0 : i32
    %c0_i32_0 = arith.constant 0 : i32
    %c0_i32_1 = arith.constant 0 : i32
    return %arg0, %c0_i32, %c0_i32_0 : i32, i32, i32
  }
}

module attributes {stable_mosaic.version = 11 : i64} {
  func.func @_gru_inproj_kernel(%arg0: memref<16x256xf32, #tpu.memory_space<vmem>>, %arg1: memref<256x96xf32, #tpu.memory_space<vmem>>, %arg2: memref<1x96xf32, #tpu.memory_space<vmem>>, %arg3: memref<16x96xf32, #tpu.memory_space<vmem>>) attributes {dimension_semantics = [], scalar_prefetch = 0 : i64, scratch_operands = 0 : i64, tpu.core_type = #tpu.core_type<tc>} {
    %c0 = arith.constant 0 : index
    %c0_0 = arith.constant 0 : index
    %0 = vector.load %arg0[%c0, %c0_0] : memref<16x256xf32, #tpu.memory_space<vmem>>, vector<16x256xf32>
    %c0_1 = arith.constant 0 : index
    %c0_2 = arith.constant 0 : index
    %1 = vector.load %arg1[%c0_1, %c0_2] : memref<256x96xf32, #tpu.memory_space<vmem>>, vector<256x96xf32>
    %cst = arith.constant dense<0.000000e+00> : vector<16x96xf32>
    %2 = tpu.matmul %0, %1, %cst {dimension_numbers = #tpu.dot_dimension_numbers<[1], [0], [0], [1], [0, 0, 1, 1], [], []>} : vector<16x256xf32>, vector<256x96xf32>, vector<16x96xf32> -> vector<16x96xf32>
    %c0_3 = arith.constant 0 : index
    %c0_4 = arith.constant 0 : index
    %3 = vector.load %arg2[%c0_3, %c0_4] : memref<1x96xf32, #tpu.memory_space<vmem>>, vector<1x96xf32>
    %4 = vector.broadcast %3 : vector<1x96xf32> to vector<16x96xf32>
    %5 = arith.addf %2, %4 : vector<16x96xf32>
    %c0_5 = arith.constant 0 : index
    %c0_6 = arith.constant 0 : index
    %6 = vector.load %arg3[%c0_5, %c0_6] : memref<16x96xf32, #tpu.memory_space<vmem>>, vector<16x96xf32>
    tpu.vector_store %arg3[%c0_5, %c0_6], %5 {strides = array<i32>} : memref<16x96xf32, #tpu.memory_space<vmem>>, vector<16x96xf32>,
    return
  }
}

module attributes {stable_mosaic.version = 11 : i64} {
  func.func @_gru_rec_kernel(%arg0: memref<1xi32, #tpu.memory_space<smem>>, %arg1: memref<8x2x32xf32, #tpu.memory_space<vmem>>, %arg2: memref<8x2x32xf32, #tpu.memory_space<vmem>>, %arg3: memref<8x2x32xf32, #tpu.memory_space<vmem>>, %arg4: memref<3x32x32xf32, #tpu.memory_space<vmem>>, %arg5: memref<3x1x32xf32, #tpu.memory_space<vmem>>, %arg6: memref<2x32xf32, #tpu.memory_space<vmem>>, %arg7: memref<2x32xf32, #tpu.memory_space<vmem>>) attributes {dimension_semantics = [], scalar_prefetch = 0 : i64, scratch_operands = 0 : i64, tpu.core_type = #tpu.core_type<tc>} {
    %c0 = arith.constant 0 : index
    %0 = memref.load %arg0[%c0] : memref<1xi32, #tpu.memory_space<smem>>
    %c1_i32 = arith.constant 1 : i32
    %1 = arith.addi %0, %c1_i32 : i32
    %c0_0 = arith.constant 0 : index
    %c0_1 = arith.constant 0 : index
    %2 = vector.load %arg6[%c0_0, %c0_1] : memref<2x32xf32, #tpu.memory_space<vmem>>, vector<2x32xf32>
    %c0_i32 = arith.constant 0 : i32
    %3 = arith.subi %1, %c0_i32 : i32
    %4 = arith.addi %c0_i32, %3 : i32
    %c1_i32_2 = arith.constant 1 : i32
    %5 = scf.for %arg8 = %c0_i32 to %4 step %c1_i32_2 iter_args(%arg9 = %2) -> (vector<2x32xf32>)  : i32 {
      %c0_5 = arith.constant 0 : index
      %c0_6 = arith.constant 0 : index
      %c0_7 = arith.constant 0 : index
      %7 = vector.load %arg4[%c0_5, %c0_6, %c0_7] : memref<3x32x32xf32, #tpu.memory_space<vmem>>, vector<1x32x32xf32>
      %8 = vector.shape_cast %7 : vector<1x32x32xf32> to vector<32x32xf32>
      %cst = arith.constant dense<0.000000e+00> : vector<2x32xf32>
      %9 = tpu.matmul %arg9, %8, %cst {dimension_numbers = #tpu.dot_dimension_numbers<[1], [0], [0], [1], [0, 0, 1, 1], [], []>} : vector<2x32xf32>, vector<32x32xf32>, vector<2x32xf32> -> vector<2x32xf32>
      %c0_8 = arith.constant 0 : index
      %c0_9 = arith.constant 0 : index
      %c0_10 = arith.constant 0 : index
      %10 = vector.load %arg5[%c0_8, %c0_9, %c0_10] : memref<3x1x32xf32, #tpu.memory_space<vmem>>, vector<1x1x32xf32>
      %11 = vector.shape_cast %10 : vector<1x1x32xf32> to vector<1x32xf32>
      %12 = vector.broadcast %11 : vector<1x32xf32> to vector<2x32xf32>
      %13 = arith.addf %9, %12 : vector<2x32xf32>
      %c1 = arith.constant 1 : index
      %c0_11 = arith.constant 0 : index
      %c0_12 = arith.constant 0 : index
      %14 = vector.load %arg4[%c1, %c0_11, %c0_12] : memref<3x32x32xf32, #tpu.memory_space<vmem>>, vector<1x32x32xf32>
      %15 = vector.shape_cast %14 : vector<1x32x32xf32> to vector<32x32xf32>
      %cst_13 = arith.constant dense<0.000000e+00> : vector<2x32xf32>
      %16 = tpu.matmul %arg9, %15, %cst_13 {dimension_numbers = #tpu.dot_dimension_numbers<[1], [0], [0], [1], [0, 0, 1, 1], [], []>} : vector<2x32xf32>, vector<32x32xf32>, vector<2x32xf32> -> vector<2x32xf32>
      %c1_14 = arith.constant 1 : index
      %c0_15 = arith.constant 0 : index
      %c0_16 = arith.constant 0 : index
      %17 = vector.load %arg5[%c1_14, %c0_15, %c0_16] : memref<3x1x32xf32, #tpu.memory_space<vmem>>, vector<1x1x32xf32>
      %18 = vector.shape_cast %17 : vector<1x1x32xf32> to vector<1x32xf32>
      %19 = vector.broadcast %18 : vector<1x32xf32> to vector<2x32xf32>
      %20 = arith.addf %16, %19 : vector<2x32xf32>
      %c2 = arith.constant 2 : index
      %c0_17 = arith.constant 0 : index
      %c0_18 = arith.constant 0 : index
      %21 = vector.load %arg4[%c2, %c0_17, %c0_18] : memref<3x32x32xf32, #tpu.memory_space<vmem>>, vector<1x32x32xf32>
      %22 = vector.shape_cast %21 : vector<1x32x32xf32> to vector<32x32xf32>
      %cst_19 = arith.constant dense<0.000000e+00> : vector<2x32xf32>
      %23 = tpu.matmul %arg9, %22, %cst_19 {dimension_numbers = #tpu.dot_dimension_numbers<[1], [0], [0], [1], [0, 0, 1, 1], [], []>} : vector<2x32xf32>, vector<32x32xf32>, vector<2x32xf32> -> vector<2x32xf32>
      %c2_20 = arith.constant 2 : index
      %c0_21 = arith.constant 0 : index
      %c0_22 = arith.constant 0 : index
      %24 = vector.load %arg5[%c2_20, %c0_21, %c0_22] : memref<3x1x32xf32, #tpu.memory_space<vmem>>, vector<1x1x32xf32>
      %25 = vector.shape_cast %24 : vector<1x1x32xf32> to vector<1x32xf32>
      %26 = vector.broadcast %25 : vector<1x32xf32> to vector<2x32xf32>
      %27 = arith.addf %23, %26 : vector<2x32xf32>
      %28 = arith.index_cast %arg8 : i32 to index
      %c0_23 = arith.constant 0 : index
      %c0_24 = arith.constant 0 : index
      %29 = vector.load %arg1[%28, %c0_23, %c0_24] : memref<8x2x32xf32, #tpu.memory_space<vmem>>, vector<1x2x32xf32>
      %30 = vector.shape_cast %29 : vector<1x2x32xf32> to vector<2x32xf32>
      %31 = arith.addf %30, %13 : vector<2x32xf32>
      %32 = arith.negf %31 : vector<2x32xf32>
      %33 = math.exp %32 : vector<2x32xf32>
      %cst_25 = arith.constant 1.000000e+00 : f32
      %34 = vector.broadcast %cst_25 : f32 to vector<2x32xf32>
      %35 = arith.addf %34, %33 : vector<2x32xf32>
      %36 = arith.divf %34, %35 : vector<2x32xf32>
      %37 = arith.index_cast %arg8 : i32 to index
      %c0_26 = arith.constant 0 : index
      %c0_27 = arith.constant 0 : index
      %38 = vector.load %arg2[%37, %c0_26, %c0_27] : memref<8x2x32xf32, #tpu.memory_space<vmem>>, vector<1x2x32xf32>
      %39 = vector.shape_cast %38 : vector<1x2x32xf32> to vector<2x32xf32>
      %40 = arith.addf %39, %20 : vector<2x32xf32>
      %41 = arith.negf %40 : vector<2x32xf32>
      %42 = math.exp %41 : vector<2x32xf32>
      %cst_28 = arith.constant 1.000000e+00 : f32
      %43 = vector.broadcast %cst_28 : f32 to vector<2x32xf32>
      %44 = arith.addf %43, %42 : vector<2x32xf32>
      %45 = arith.divf %43, %44 : vector<2x32xf32>
      %46 = arith.index_cast %arg8 : i32 to index
      %c0_29 = arith.constant 0 : index
      %c0_30 = arith.constant 0 : index
      %47 = vector.load %arg3[%46, %c0_29, %c0_30] : memref<8x2x32xf32, #tpu.memory_space<vmem>>, vector<1x2x32xf32>
      %48 = vector.shape_cast %47 : vector<1x2x32xf32> to vector<2x32xf32>
      %49 = arith.mulf %36, %27 : vector<2x32xf32>
      %50 = arith.addf %48, %49 : vector<2x32xf32>
      %51 = math.tanh %50 : vector<2x32xf32>
      %cst_31 = arith.constant 1.000000e+00 : f32
      %52 = vector.broadcast %cst_31 : f32 to vector<2x32xf32>
      %53 = arith.subf %52, %45 : vector<2x32xf32>
      %54 = arith.mulf %53, %51 : vector<2x32xf32>
      %55 = arith.mulf %45, %arg9 : vector<2x32xf32>
      %56 = arith.addf %54, %55 : vector<2x32xf32>
      scf.yield %56 : vector<2x32xf32>
    }
    %c0_3 = arith.constant 0 : index
    %c0_4 = arith.constant 0 : index
    %6 = vector.load %arg7[%c0_3, %c0_4] : memref<2x32xf32, #tpu.memory_space<vmem>>, vector<2x32xf32>
    tpu.vector_store %arg7[%c0_3, %c0_4], %5 {strides = array<i32>} : memref<2x32xf32, #tpu.memory_space<vmem>>, vector<2x32xf32>,
    return
  }
}

module attributes {stable_mosaic.version = 11 : i64} {
  func.func @_nce_kernel(%arg0: memref<3x2x256xf32, #tpu.memory_space<vmem>>, %arg1: memref<2x32xf32, #tpu.memory_space<vmem>>, %arg2: memref<32x768xf32, #tpu.memory_space<vmem>>, %arg3: memref<1x768xf32, #tpu.memory_space<vmem>>, %arg4: memref<1x1xf32, #tpu.memory_space<vmem>>, %arg5: memref<1x3xf32, #tpu.memory_space<vmem>>) attributes {dimension_semantics = [], scalar_prefetch = 0 : i64, scratch_operands = 0 : i64, tpu.core_type = #tpu.core_type<tc>} {
    %0 = tpu.iota {dimensions = array<i32: 0>} : vector<2x2xi32>
    %1 = tpu.iota {dimensions = array<i32: 1>} : vector<2x2xi32>
    %2 = arith.cmpi eq, %0, %1 : vector<2x2xi32>
    %3 = arith.extui %2 : vector<2x2xi1> to vector<2x2xi32>
    %4 = arith.sitofp %3 : vector<2x2xi32> to vector<2x2xf32>
    %5 = tpu.iota {dimensions = array<i32: 1>} : vector<1x2xi32>
    %6 = tpu.iota {dimensions = array<i32: 1>} : vector<1x3xi32>
    %c0 = arith.constant 0 : index
    %c0_0 = arith.constant 0 : index
    %7 = vector.load %arg1[%c0, %c0_0] : memref<2x32xf32, #tpu.memory_space<vmem>>, vector<2x32xf32>
    %c0_1 = arith.constant 0 : index
    %c0_2 = arith.constant 0 : index
    %8 = vector.load %arg2[%c0_1, %c0_2] : memref<32x768xf32, #tpu.memory_space<vmem>>, vector<32x768xf32>
    %cst = arith.constant dense<0.000000e+00> : vector<2x768xf32>
    %9 = tpu.matmul %7, %8, %cst {dimension_numbers = #tpu.dot_dimension_numbers<[1], [0], [0], [1], [0, 0, 1, 1], [], []>} : vector<2x32xf32>, vector<32x768xf32>, vector<2x768xf32> -> vector<2x768xf32>
    %c0_3 = arith.constant 0 : index
    %c0_4 = arith.constant 0 : index
    %10 = vector.load %arg3[%c0_3, %c0_4] : memref<1x768xf32, #tpu.memory_space<vmem>>, vector<1x768xf32>
    %11 = vector.broadcast %10 : vector<1x768xf32> to vector<2x768xf32>
    %12 = arith.addf %9, %11 : vector<2x768xf32>
    %cst_5 = arith.constant 0.000000e+00 : f32
    %13 = vector.broadcast %cst_5 : f32 to vector<1x1xf32>
    %cst_6 = arith.constant 0.000000e+00 : f32
    %14 = vector.broadcast %cst_6 : f32 to vector<1x3xf32>
    %15 = vector.extract_strided_slice %12 {offsets = [0, 0], sizes = [2, 256], strides = [1, 1]} : vector<2x768xf32> to vector<2x256xf32>
    %c0_7 = arith.constant 0 : index
    %c0_8 = arith.constant 0 : index
    %c0_9 = arith.constant 0 : index
    %16 = vector.load %arg0[%c0_7, %c0_8, %c0_9] : memref<3x2x256xf32, #tpu.memory_space<vmem>>, vector<1x2x256xf32>
    %17 = vector.shape_cast %16 : vector<1x2x256xf32> to vector<2x256xf32>
    %cst_10 = arith.constant dense<0.000000e+00> : vector<2x2xf32>
    %18 = tpu.matmul %17, %15, %cst_10 {dimension_numbers = #tpu.dot_dimension_numbers<[1], [1], [0], [0], [0, 0, 1, 0], [], []>} : vector<2x256xf32>, vector<2x256xf32>, vector<2x2xf32> -> vector<2x2xf32>
    %cst_11 = arith.constant dense<0xFF800000> : vector<2xf32>
    %19 = vector.multi_reduction <maximumf>, %18, %cst_11 [1] : vector<2x2xf32> to vector<2xf32>
    %20 = vector.shape_cast %19 : vector<2xf32> to vector<2x1xf32>
    %21 = vector.broadcast %20 : vector<2x1xf32> to vector<2x2xf32>
    %22 = arith.subf %18, %21 : vector<2x2xf32>
    %23 = math.exp %22 : vector<2x2xf32>
    %cst_12 = arith.constant dense<0.000000e+00> : vector<2xf32>
    %24 = vector.multi_reduction <add>, %23, %cst_12 [1] : vector<2x2xf32> to vector<2xf32>
    %25 = vector.shape_cast %24 : vector<2xf32> to vector<2x1xf32>
    %26 = vector.broadcast %25 : vector<2x1xf32> to vector<2x2xf32>
    %27 = arith.divf %23, %26 : vector<2x2xf32>
    %cst_13 = arith.constant dense<0xFF800000> : vector<2xf32>
    %28 = vector.multi_reduction <maximumf>, %27, %cst_13 [0] : vector<2x2xf32> to vector<2xf32>
    %29 = vector.shape_cast %28 : vector<2xf32> to vector<1x2xf32>
    %30 = vector.broadcast %29 : vector<1x2xf32> to vector<2x2xf32>
    %31 = arith.cmpf oge, %27, %30 : vector<2x2xf32>
    %c2_i32 = arith.constant 2 : i32
    %32 = vector.broadcast %c2_i32 : i32 to vector<2x2xi32>
    %33 = arith.select %31, %0, %32 : vector<2x2xi1>, vector<2x2xi32>
    %cst_14 = arith.constant dense<2147483647> : vector<2xi32>
    %34 = vector.multi_reduction <minsi>, %33, %cst_14 [0] : vector<2x2xi32> to vector<2xi32>
    %35 = vector.shape_cast %34 : vector<2xi32> to vector<1x2xi32>
    %36 = arith.cmpi eq, %35, %5 : vector<1x2xi32>
    %37 = arith.extui %36 : vector<1x2xi1> to vector<1x2xi32>
    %38 = arith.sitofp %37 : vector<1x2xi32> to vector<1x2xf32>
    %39 = vector.shape_cast %38 : vector<1x2xf32> to vector<1x1x2xf32>
    %cst_15 = arith.constant dense<0.000000e+00> : vector<1xf32>
    %40 = vector.multi_reduction <add>, %39, %cst_15 [1, 2] : vector<1x1x2xf32> to vector<1xf32>
    %41 = vector.shape_cast %40 : vector<1xf32> to vector<1x1x1xf32>
    %42 = vector.extract %41[0, 0, 0] : f32 from vector<1x1x1xf32>
    %c0_i32 = arith.constant 0 : i32
    %43 = vector.broadcast %c0_i32 : i32 to vector<1x3xi32>
    %44 = arith.cmpi eq, %6, %43 : vector<1x3xi32>
    %45 = arith.extui %44 : vector<1x3xi1> to vector<1x3xi32>
    %46 = arith.sitofp %45 : vector<1x3xi32> to vector<1x3xf32>
    %47 = vector.broadcast %42 : f32 to vector<1x3xf32>
    %48 = arith.mulf %47, %46 : vector<1x3xf32>
    %49 = arith.addf %14, %48 : vector<1x3xf32>
    %50 = vector.broadcast %20 : vector<2x1xf32> to vector<2x2xf32>
    %51 = arith.subf %18, %50 : vector<2x2xf32>
    %52 = math.log %25 : vector<2x1xf32>
    %53 = vector.broadcast %52 : vector<2x1xf32> to vector<2x2xf32>
    %54 = arith.subf %51, %53 : vector<2x2xf32>
    %55 = arith.mulf %54, %4 : vector<2x2xf32>
    %56 = vector.shape_cast %55 : vector<2x2xf32> to vector<1x2x2xf32>
    %cst_16 = arith.constant dense<0.000000e+00> : vector<1xf32>
    %57 = vector.multi_reduction <add>, %56, %cst_16 [1, 2] : vector<1x2x2xf32> to vector<1xf32>
    %58 = vector.shape_cast %57 : vector<1xf32> to vector<1x1x1xf32>
    %59 = vector.extract %58[0, 0, 0] : f32 from vector<1x1x1xf32>
    %60 = vector.broadcast %59 : f32 to vector<1x1xf32>
    %61 = arith.addf %13, %60 : vector<1x1xf32>
    %62 = vector.extract_strided_slice %12 {offsets = [0, 256], sizes = [2, 256], strides = [1, 1]} : vector<2x768xf32> to vector<2x256xf32>
    %c1 = arith.constant 1 : index
    %c0_17 = arith.constant 0 : index
    %c0_18 = arith.constant 0 : index
    %63 = vector.load %arg0[%c1, %c0_17, %c0_18] : memref<3x2x256xf32, #tpu.memory_space<vmem>>, vector<1x2x256xf32>
    %64 = vector.shape_cast %63 : vector<1x2x256xf32> to vector<2x256xf32>
    %cst_19 = arith.constant dense<0.000000e+00> : vector<2x2xf32>
    %65 = tpu.matmul %64, %62, %cst_19 {dimension_numbers = #tpu.dot_dimension_numbers<[1], [1], [0], [0], [0, 0, 1, 0], [], []>} : vector<2x256xf32>, vector<2x256xf32>, vector<2x2xf32> -> vector<2x2xf32>
    %cst_20 = arith.constant dense<0xFF800000> : vector<2xf32>
    %66 = vector.multi_reduction <maximumf>, %65, %cst_20 [1] : vector<2x2xf32> to vector<2xf32>
    %67 = vector.shape_cast %66 : vector<2xf32> to vector<2x1xf32>
    %68 = vector.broadcast %67 : vector<2x1xf32> to vector<2x2xf32>
    %69 = arith.subf %65, %68 : vector<2x2xf32>
    %70 = math.exp %69 : vector<2x2xf32>
    %cst_21 = arith.constant dense<0.000000e+00> : vector<2xf32>
    %71 = vector.multi_reduction <add>, %70, %cst_21 [1] : vector<2x2xf32> to vector<2xf32>
    %72 = vector.shape_cast %71 : vector<2xf32> to vector<2x1xf32>
    %73 = vector.broadcast %72 : vector<2x1xf32> to vector<2x2xf32>
    %74 = arith.divf %70, %73 : vector<2x2xf32>
    %cst_22 = arith.constant dense<0xFF800000> : vector<2xf32>
    %75 = vector.multi_reduction <maximumf>, %74, %cst_22 [0] : vector<2x2xf32> to vector<2xf32>
    %76 = vector.shape_cast %75 : vector<2xf32> to vector<1x2xf32>
    %77 = vector.broadcast %76 : vector<1x2xf32> to vector<2x2xf32>
    %78 = arith.cmpf oge, %74, %77 : vector<2x2xf32>
    %c2_i32_23 = arith.constant 2 : i32
    %79 = vector.broadcast %c2_i32_23 : i32 to vector<2x2xi32>
    %80 = arith.select %78, %0, %79 : vector<2x2xi1>, vector<2x2xi32>
    %cst_24 = arith.constant dense<2147483647> : vector<2xi32>
    %81 = vector.multi_reduction <minsi>, %80, %cst_24 [0] : vector<2x2xi32> to vector<2xi32>
    %82 = vector.shape_cast %81 : vector<2xi32> to vector<1x2xi32>
    %83 = arith.cmpi eq, %82, %5 : vector<1x2xi32>
    %84 = arith.extui %83 : vector<1x2xi1> to vector<1x2xi32>
    %85 = arith.sitofp %84 : vector<1x2xi32> to vector<1x2xf32>
    %86 = vector.shape_cast %85 : vector<1x2xf32> to vector<1x1x2xf32>
    %cst_25 = arith.constant dense<0.000000e+00> : vector<1xf32>
    %87 = vector.multi_reduction <add>, %86, %cst_25 [1, 2] : vector<1x1x2xf32> to vector<1xf32>
    %88 = vector.shape_cast %87 : vector<1xf32> to vector<1x1x1xf32>
    %89 = vector.extract %88[0, 0, 0] : f32 from vector<1x1x1xf32>
    %c1_i32 = arith.constant 1 : i32
    %90 = vector.broadcast %c1_i32 : i32 to vector<1x3xi32>
    %91 = arith.cmpi eq, %6, %90 : vector<1x3xi32>
    %92 = arith.extui %91 : vector<1x3xi1> to vector<1x3xi32>
    %93 = arith.sitofp %92 : vector<1x3xi32> to vector<1x3xf32>
    %94 = vector.broadcast %89 : f32 to vector<1x3xf32>
    %95 = arith.mulf %94, %93 : vector<1x3xf32>
    %96 = arith.addf %49, %95 : vector<1x3xf32>
    %97 = vector.broadcast %67 : vector<2x1xf32> to vector<2x2xf32>
    %98 = arith.subf %65, %97 : vector<2x2xf32>
    %99 = math.log %72 : vector<2x1xf32>
    %100 = vector.broadcast %99 : vector<2x1xf32> to vector<2x2xf32>
    %101 = arith.subf %98, %100 : vector<2x2xf32>
    %102 = arith.mulf %101, %4 : vector<2x2xf32>
    %103 = vector.shape_cast %102 : vector<2x2xf32> to vector<1x2x2xf32>
    %cst_26 = arith.constant dense<0.000000e+00> : vector<1xf32>
    %104 = vector.multi_reduction <add>, %103, %cst_26 [1, 2] : vector<1x2x2xf32> to vector<1xf32>
    %105 = vector.shape_cast %104 : vector<1xf32> to vector<1x1x1xf32>
    %106 = vector.extract %105[0, 0, 0] : f32 from vector<1x1x1xf32>
    %107 = vector.broadcast %106 : f32 to vector<1x1xf32>
    %108 = arith.addf %61, %107 : vector<1x1xf32>
    %109 = vector.extract_strided_slice %12 {offsets = [0, 512], sizes = [2, 256], strides = [1, 1]} : vector<2x768xf32> to vector<2x256xf32>
    %c2 = arith.constant 2 : index
    %c0_27 = arith.constant 0 : index
    %c0_28 = arith.constant 0 : index
    %110 = vector.load %arg0[%c2, %c0_27, %c0_28] : memref<3x2x256xf32, #tpu.memory_space<vmem>>, vector<1x2x256xf32>
    %111 = vector.shape_cast %110 : vector<1x2x256xf32> to vector<2x256xf32>
    %cst_29 = arith.constant dense<0.000000e+00> : vector<2x2xf32>
    %112 = tpu.matmul %111, %109, %cst_29 {dimension_numbers = #tpu.dot_dimension_numbers<[1], [1], [0], [0], [0, 0, 1, 0], [], []>} : vector<2x256xf32>, vector<2x256xf32>, vector<2x2xf32> -> vector<2x2xf32>
    %cst_30 = arith.constant dense<0xFF800000> : vector<2xf32>
    %113 = vector.multi_reduction <maximumf>, %112, %cst_30 [1] : vector<2x2xf32> to vector<2xf32>
    %114 = vector.shape_cast %113 : vector<2xf32> to vector<2x1xf32>
    %115 = vector.broadcast %114 : vector<2x1xf32> to vector<2x2xf32>
    %116 = arith.subf %112, %115 : vector<2x2xf32>
    %117 = math.exp %116 : vector<2x2xf32>
    %cst_31 = arith.constant dense<0.000000e+00> : vector<2xf32>
    %118 = vector.multi_reduction <add>, %117, %cst_31 [1] : vector<2x2xf32> to vector<2xf32>
    %119 = vector.shape_cast %118 : vector<2xf32> to vector<2x1xf32>
    %120 = vector.broadcast %119 : vector<2x1xf32> to vector<2x2xf32>
    %121 = arith.divf %117, %120 : vector<2x2xf32>
    %cst_32 = arith.constant dense<0xFF800000> : vector<2xf32>
    %122 = vector.multi_reduction <maximumf>, %121, %cst_32 [0] : vector<2x2xf32> to vector<2xf32>
    %123 = vector.shape_cast %122 : vector<2xf32> to vector<1x2xf32>
    %124 = vector.broadcast %123 : vector<1x2xf32> to vector<2x2xf32>
    %125 = arith.cmpf oge, %121, %124 : vector<2x2xf32>
    %c2_i32_33 = arith.constant 2 : i32
    %126 = vector.broadcast %c2_i32_33 : i32 to vector<2x2xi32>
    %127 = arith.select %125, %0, %126 : vector<2x2xi1>, vector<2x2xi32>
    %cst_34 = arith.constant dense<2147483647> : vector<2xi32>
    %128 = vector.multi_reduction <minsi>, %127, %cst_34 [0] : vector<2x2xi32> to vector<2xi32>
    %129 = vector.shape_cast %128 : vector<2xi32> to vector<1x2xi32>
    %130 = arith.cmpi eq, %129, %5 : vector<1x2xi32>
    %131 = arith.extui %130 : vector<1x2xi1> to vector<1x2xi32>
    %132 = arith.sitofp %131 : vector<1x2xi32> to vector<1x2xf32>
    %133 = vector.shape_cast %132 : vector<1x2xf32> to vector<1x1x2xf32>
    %cst_35 = arith.constant dense<0.000000e+00> : vector<1xf32>
    %134 = vector.multi_reduction <add>, %133, %cst_35 [1, 2] : vector<1x1x2xf32> to vector<1xf32>
    %135 = vector.shape_cast %134 : vector<1xf32> to vector<1x1x1xf32>
    %136 = vector.extract %135[0, 0, 0] : f32 from vector<1x1x1xf32>
    %c2_i32_36 = arith.constant 2 : i32
    %137 = vector.broadcast %c2_i32_36 : i32 to vector<1x3xi32>
    %138 = arith.cmpi eq, %6, %137 : vector<1x3xi32>
    %139 = arith.extui %138 : vector<1x3xi1> to vector<1x3xi32>
    %140 = arith.sitofp %139 : vector<1x3xi32> to vector<1x3xf32>
    %141 = vector.broadcast %136 : f32 to vector<1x3xf32>
    %142 = arith.mulf %141, %140 : vector<1x3xf32>
    %143 = arith.addf %96, %142 : vector<1x3xf32>
    %144 = vector.broadcast %114 : vector<2x1xf32> to vector<2x2xf32>
    %145 = arith.subf %112, %144 : vector<2x2xf32>
    %146 = math.log %119 : vector<2x1xf32>
    %147 = vector.broadcast %146 : vector<2x1xf32> to vector<2x2xf32>
    %148 = arith.subf %145, %147 : vector<2x2xf32>
    %149 = arith.mulf %148, %4 : vector<2x2xf32>
    %150 = vector.shape_cast %149 : vector<2x2xf32> to vector<1x2x2xf32>
    %cst_37 = arith.constant dense<0.000000e+00> : vector<1xf32>
    %151 = vector.multi_reduction <add>, %150, %cst_37 [1, 2] : vector<1x2x2xf32> to vector<1xf32>
    %152 = vector.shape_cast %151 : vector<1xf32> to vector<1x1x1xf32>
    %153 = vector.extract %152[0, 0, 0] : f32 from vector<1x1x1xf32>
    %154 = vector.broadcast %153 : f32 to vector<1x1xf32>
    %155 = arith.addf %108, %154 : vector<1x1xf32>
    %cst_38 = arith.constant -6.000000e+00 : f32
    %156 = vector.broadcast %cst_38 : f32 to vector<1x1xf32>
    %157 = arith.divf %155, %156 : vector<1x1xf32>
    %c0_39 = arith.constant 0 : index
    %c0_40 = arith.constant 0 : index
    %158 = vector.load %arg4[%c0_39, %c0_40] : memref<1x1xf32, #tpu.memory_space<vmem>>, vector<1x1xf32>
    tpu.vector_store %arg4[%c0_39, %c0_40], %157 {strides = array<i32>} : memref<1x1xf32, #tpu.memory_space<vmem>>, vector<1x1xf32>,
    %c0_41 = arith.constant 0 : index
    %c0_42 = arith.constant 0 : index
    %159 = vector.load %arg5[%c0_41, %c0_42] : memref<1x3xf32, #tpu.memory_space<vmem>>, vector<1x3xf32>
    tpu.vector_store %arg5[%c0_41, %c0_42], %143 {strides = array<i32>} : memref<1x3xf32, #tpu.memory_space<vmem>>, vector<1x3xf32>,
    return
  }
}

</mosaic_0001>

<llo_original>
// kernel: g_enc_forward.10
$region0: #{g_enc_forward.10}
  #allocation0 [shape = 'u32[]', space=smem, size = 0x4, offset = 0x4, fixed_abs, tag = 'smem constant byte address 0x4 - core index']
  #allocation1 [shape = 'u32[144,128]{1,0:T(1,128)}', space=vmem, size = 0x12000, scoped, tag = 'internal scratch']
  %s0 = inlined_call_operand.vmem [shape: f32[64,64], index: 0, kind: input, shape index: {}]
  %s1 = inlined_call_operand.vmem [shape: f32[1,32], index: 1, kind: input, shape index: {}]
  %s2 = inlined_call_operand.vmem [shape: f32[1,32], index: 2, kind: input, shape index: {}]
  %s3 = inlined_call_operand.vmem [shape: f32[64,32], index: 3, kind: output, shape index: {}]
  %s4 = sld [smem:[#allocation0]]
  $region22: #{g_enc_forward.10} parent=0
    _
  %s6 = ssub.s32 1, %s4
  %s7 = scalar_select 0, %s6, %s4
  // Predicated region
  $region2: #{g_enc_forward.10} parent=0 // pred_check
    _
  $region3: #{g_enc_forward.10} parent=0 // pred_check_branch
    %9 = sbr.rel (0) target = $region5
  $region4: #{g_enc_forward.10} parent=0 // pred_region
    _
  $region5: #{g_enc_forward.10} parent=0 // pred_fallthru
    _
  // Predicated region
  $region6: #{g_enc_forward.10} parent=0 // pred_check
    _
  $region7: #{g_enc_forward.10} parent=0 // pred_check_branch
    %11 = sbr.rel (0) target = $region9
  $region8: #{g_enc_forward.10} parent=0 // pred_region
    _
  $region9: #{g_enc_forward.10} parent=0 // pred_fallthru
    _
  // Predicated region
  $region10: #{g_enc_forward.10} parent=0 // pred_check
    _
  $region11: #{g_enc_forward.10} parent=0 // pred_check_branch
    %13 = sbr.rel (0) target = $region13
  $region12: #{g_enc_forward.10} parent=0 // pred_region
    _
  $region13: #{g_enc_forward.10} parent=0 // pred_fallthru
    _
  %v14 = vld [vmem:[%s0] sm:$0xff]
  %v15 = vld [vmem:[%s0 + $0x8] sm:$0xff]
  %v16 = vld [vmem:[%s0 + $0x10] sm:$0xff]
  %v17 = vld [vmem:[%s0 + $0x18] sm:$0xff]
  %v18 = vld [vmem:[%s0 + $0x20] sm:$0xff]
  %v19 = vld [vmem:[%s0 + $0x28] sm:$0xff]
  %v20 = vld [vmem:[%s0 + $0x30] sm:$0xff]
  %v21 = vld [vmem:[%s0 + $0x38] sm:$0xff]
  %30 = vrot.lane.b32.xlu0 %v14, 96
  %v31 = vpop.permute.xlu0 %30
  %32 = vrot.lane.b32.xlu0 %v15, 96
  %v33 = vpop.permute.xlu0 %32
  %34 = vrot.lane.b32.xlu0 %v16, 96
  %v35 = vpop.permute.xlu0 %34
  %36 = vrot.lane.b32.xlu0 %v17, 96
  %v37 = vpop.permute.xlu0 %36
  %38 = vrot.lane.b32.xlu0 %v18, 96
  %v39 = vpop.permute.xlu0 %38
  %40 = vrot.lane.b32.xlu0 %v19, 96
  %v41 = vpop.permute.xlu0 %40
  %42 = vrot.lane.b32.xlu0 %v20, 96
  %v43 = vpop.permute.xlu0 %42
  %44 = vrot.lane.b32.xlu0 %v21, 96
  %v45 = vpop.permute.xlu0 %44
  %v54 = vmax.f32 %v14, %v31
  %v55 = vmax.f32 %v15, %v33
  %v56 = vmax.f32 %v16, %v35
  %v57 = vmax.f32 %v17, %v37
  %v58 = vmax.f32 %v18, %v39
  %v59 = vmax.f32 %v19, %v41
  %v60 = vmax.f32 %v20, %v43
  %v61 = vmax.f32 %v21, %v45
  %v62 = vld [vmem:[%s1] sm:$0x1]
  %v64 = vlaneseq
  %v65 = vshrl.u32 %v64, 7
  %v66 = vsub.s32 0, %v65
  %v67 = vrot.slane %v62, %v66
  %v69 = vsub.f32 %v54, %v67
  %v70 = vsub.f32 %v55, %v67
  %v71 = vsub.f32 %v56, %v67
  %v72 = vsub.f32 %v57, %v67
  %v73 = vsub.f32 %v58, %v67
  %v74 = vsub.f32 %v59, %v67
  %v75 = vsub.f32 %v60, %v67
  %v76 = vsub.f32 %v61, %v67
  %v77 = vld [vmem:[%s2] sm:$0x1]
  %v79 = vlaneseq
  %v80 = vshrl.u32 %v79, 7
  %v81 = vsub.s32 0, %v80
  %v82 = vrot.slane %v77, %v81
  %v84 = vmul.f32 %v69, %v82
  %v85 = vmul.f32 %v70, %v82
  %v86 = vmul.f32 %v71, %v82
  %v87 = vmul.f32 %v72, %v82
  %v88 = vmul.f32 %v73, %v82
  %v89 = vmul.f32 %v74, %v82
  %v90 = vmul.f32 %v75, %v82
  %v91 = vmul.f32 %v76, %v82
  %v92 = vmax.f32 %v84, 0.0
  %v93 = vmax.f32 %v85, 0.0
  %v94 = vmax.f32 %v86, 0.0
  %v95 = vmax.f32 %v87, 0.0
  %v96 = vmax.f32 %v88, 0.0
  %v97 = vmax.f32 %v89, 0.0
  %v98 = vmax.f32 %v90, 0.0
  %v99 = vmax.f32 %v91, 0.0
  %vm100 = vcmask 261120
  %101 = vst.msk [vmem:[%s3] sm:$0xff] %vm100, %v92
  %102 = vst.msk [vmem:[%s3 + $0x8] sm:$0xff] %vm100, %v93
  %103 = vst.msk [vmem:[%s3 + $0x10] sm:$0xff] %vm100, %v94
  %104 = vst.msk [vmem:[%s3 + $0x18] sm:$0xff] %vm100, %v95
  %105 = vst.msk [vmem:[%s3 + $0x20] sm:$0xff] %vm100, %v96
  %106 = vst.msk [vmem:[%s3 + $0x28] sm:$0xff] %vm100, %v97
  %107 = vst.msk [vmem:[%s3 + $0x30] sm:$0xff] %vm100, %v98
  %108 = vst.msk [vmem:[%s3 + $0x38] sm:$0xff] %vm100, %v99
  // Predicated region
  $region14: #{g_enc_forward.10} parent=0 // pred_check
    _
  $region15: #{g_enc_forward.10} parent=0 // pred_check_branch
    %110 = sbr.rel (0) target = $region17
  $region16: #{g_enc_forward.10} parent=0 // pred_region
    _
  $region17: #{g_enc_forward.10} parent=0 // pred_fallthru
    _
  // Predicated region
  $region18: #{g_enc_forward.10} parent=0 // pred_check
    _
  $region19: #{g_enc_forward.10} parent=0 // pred_check_branch
    %112 = sbr.rel (0) target = $region21
  $region20: #{g_enc_forward.10} parent=0 // pred_region
    _
  $region21: #{g_enc_forward.10} parent=0 // pred_fallthru
    _

// kernel: g_enc_forward.9
$region0: #{g_enc_forward.9}
  #allocation0 [shape = 'u32[]', space=smem, size = 0x4, offset = 0x4, fixed_abs, tag = 'smem constant byte address 0x4 - core index']
  #allocation1 [shape = 'u32[144,128]{1,0:T(1,128)}', space=vmem, size = 0x12000, scoped, tag = 'internal scratch']
  %s0 = inlined_call_operand.vmem [shape: f32[128,36], index: 0, kind: input, shape index: {}]
  %s1 = inlined_call_operand.vmem [shape: f32[36,32], index: 1, kind: input, shape index: {}]
  %s2 = inlined_call_operand.vmem [shape: f32[128,32], index: 2, kind: output, shape index: {0}]
  %s3 = inlined_call_operand.vmem [shape: f32[1,1,32], index: 3, kind: output, shape index: {1}]
  %s4 = inlined_call_operand.vmem [shape: f32[1,1,32], index: 4, kind: output, shape index: {2}]
  %5 = xla_tuple %s2, %s3, %s4
  %s6 = sld [smem:[#allocation0]]
  $region34: #{g_enc_forward.9} parent=0
    _
  %s8 = ssub.s32 1, %s6
  %s9 = scalar_select 0, %s8, %s6
  // Predicated region
  $region2: #{g_enc_forward.9} parent=0 // pred_check
    _
  $region3: #{g_enc_forward.9} parent=0 // pred_check_branch
    %11 = sbr.rel (0) target = $region5
  $region4: #{g_enc_forward.9} parent=0 // pred_region
    _
  $region5: #{g_enc_forward.9} parent=0 // pred_fallthru
    _
  // Predicated region
  $region6: #{g_enc_forward.9} parent=0 // pred_check
    _
  $region7: #{g_enc_forward.9} parent=0 // pred_check_branch
    %13 = sbr.rel (0) target = $region9
  $region8: #{g_enc_forward.9} parent=0 // pred_region
    _
  $region9: #{g_enc_forward.9} parent=0 // pred_fallthru
    _
  %v14 = vld [vmem:[%s0] sm:$0xff]
  %v15 = vld [vmem:[%s0 + $0x8] sm:$0xff]
  %v16 = vld [vmem:[%s0 + $0x10] sm:$0xff]
  %v17 = vld [vmem:[%s0 + $0x18] sm:$0xff]
  %v18 = vld [vmem:[%s0 + $0x20] sm:$0xff]
  %v19 = vld [vmem:[%s0 + $0x28] sm:$0xff]
  %v20 = vld [vmem:[%s0 + $0x30] sm:$0xff]
  %v21 = vld [vmem:[%s0 + $0x38] sm:$0xff]
  %v22 = vld [vmem:[%s0 + $0x40] sm:$0xff]
  %v23 = vld [vmem:[%s0 + $0x48] sm:$0xff]
  %v24 = vld [vmem:[%s0 + $0x50] sm:$0xff]
  %v25 = vld [vmem:[%s0 + $0x58] sm:$0xff]
  %v26 = vld [vmem:[%s0 + $0x60] sm:$0xff]
  %v27 = vld [vmem:[%s0 + $0x68] sm:$0xff]
  %v28 = vld [vmem:[%s0 + $0x70] sm:$0xff]
  %v29 = vld [vmem:[%s0 + $0x78] sm:$0xff]
  %v30 = vld [vmem:[%s1] sm:$0xff]
  %v31 = vld [vmem:[%s1 + $0x8] sm:$0xff]
  %v32 = vld [vmem:[%s1 + $0x10] sm:$0xff]
  %v33 = vld [vmem:[%s1 + $0x18] sm:$0xff]
  %v34 = vld [vmem:[%s1 + $0x20] sm:$0xf]
  %vm35 = vcmask 293888
  %v37 = vsel %vm35, %v14, 0
  %v40 = vsel %vm35, %v15, 0
  %v43 = vsel %vm35, %v16, 0
  %v46 = vsel %vm35, %v17, 0
  %v49 = vsel %vm35, %v18, 0
  %v52 = vsel %vm35, %v19, 0
  %v55 = vsel %vm35, %v20, 0
  %v58 = vsel %vm35, %v21, 0
  %v61 = vsel %vm35, %v22, 0
  %v64 = vsel %vm35, %v23, 0
  %v67 = vsel %vm35, %v24, 0
  %v70 = vsel %vm35, %v25, 0
  %v73 = vsel %vm35, %v26, 0
  %v76 = vsel %vm35, %v27, 0
  %v79 = vsel %vm35, %v28, 0
  %v82 = vsel %vm35, %v29, 0
  %vm84 = vcmask 1043456
  %v86 = vsel %vm84, %v34, 0
  %88 = vmatprep.subr.mxu0 0.0
  %89 = vmatpush1.msra.mxu0 %v30
  %90 = vmatprep.subr.mxu0 0.0
  %91 = vmatpush1.msra.mxu0 %v31
  %92 = vmatprep.subr.mxu0 0.0
  %93 = vmatpush1.msra.mxu0 %v32
  %94 = vmatprep.subr.mxu0 0.0
  %95 = vmatpush1.msra.mxu0 %v33
  %96 = vmatprep.subr.mxu0 0.0
  %97 = vmatpush1.msra.mxu0 %v86
  %98 = vmatprep.subr.mxu0 0.0
  %99 = vmatpush1.msra.mxu0 0.0
  %100 = vmatprep.subr.mxu0 0.0
  %101 = vmatpush1.msra.mxu0 0.0
  %102 = vmatprep.subr.mxu0 0.0
  %103 = vmatpush1.msra.mxu0 0.0
  %104 = vmatprep.subr.mxu0 0.0
  %105 = vmatpush1.msra.mxu0 0.0
  %106 = vmatprep.subr.mxu0 0.0
  %107 = vmatpush1.msra.mxu0 0.0
  %108 = vmatprep.subr.mxu0 0.0
  %109 = vmatpush1.msra.mxu0 0.0
  %110 = vmatprep.subr.mxu0 0.0
  %111 = vmatpush1.msra.mxu0 0.0
  %112 = vmatprep.subr.mxu0 0.0
  %113 = vmatpush1.msra.mxu0 0.0
  %114 = vmatprep.subr.mxu0 0.0
  %115 = vmatpush1.msra.mxu0 0.0
  %116 = vmatprep.subr.mxu0 0.0
  %117 = vmatpush1.msra.mxu0 0.0
  %118 = vmatprep.subr.mxu0 0.0
  %119 = vmatpush1.msra.mxu0 0.0
  %120 = vmatprep.subr.mxu0 0.0
  %121 = vmatpush1.msra.mxu0 0.0
  %122 = vmatprep.subr.mxu0 0.0
  %123 = vmatpush1.msra.mxu0 0.0
  %124 = vmatprep.subr.mxu0 0.0
  %125 = vmatpush1.msra.mxu0 0.0
  %126 = vmatprep.subr.mxu0 0.0
  %127 = vmatpush1.msra.mxu0 0.0
  %128 = vmatprep.subr.mxu0 0.0
  %129 = vmatpush1.msra.mxu0 0.0
  %130 = vmatprep.subr.mxu0 0.0
  %131 = vmatpush1.msra.mxu0 0.0
  %132 = vmatprep.subr.mxu0 0.0
  %133 = vmatpush1.msra.mxu0 0.0
  %134 = vmatprep.subr.mxu0 0.0
  %135 = vmatpush1.msra.mxu0 0.0
  %136 = vmatprep.subr.mxu0 0.0
  %137 = vmatpush1.msra.mxu0 0.0
  %138 = vmatprep.subr.mxu0 0.0
  %139 = vmatpush1.msra.mxu0 0.0
  %140 = vmatprep.subr.mxu0 0.0
  %141 = vmatpush1.msra.mxu0 0.0
  %142 = vmatprep.subr.mxu0 0.0
  %143 = vmatpush1.msra.mxu0 0.0
  %144 = vmatprep.subr.mxu0 0.0
  %145 = vmatpush1.msra.mxu0 0.0
  %146 = vmatprep.subr.mxu0 0.0
  %147 = vmatpush1.msra.mxu0 0.0
  %148 = vmatprep.subr.mxu0 0.0
  %149 = vmatpush1.msra.mxu0 0.0
  %150 = vmatprep.subr.mxu0 0.0
  %151 = vmatpush1.msra.mxu0 0.0
  %152 = vmatprep.mubr.f32.mxu0 0.0
  %153 = vmatmul.mubr.f32.gmra.mrb[0].mxu0 %v37
  %v154 = vpop.f32.mrb[0].mxu0
  %v155 = vadd.f32 0.0, %v154
  %v156 = vpop.f32.mrb[0].mxu0
  %157 = vmatprep.mubr.f32.mxu0 0.0
  %158 = vmatmul.mubr.f32.gmra.mrb[0].mxu0 %v40
  %v159 = vpop.f32.mrb[0].mxu0
  %v160 = vadd.f32 0.0, %v159
  %v161 = vpop.f32.mrb[0].mxu0
  %162 = vmatprep.mubr.f32.mxu0 0.0
  %163 = vmatmul.mubr.f32.gmra.mrb[0].mxu0 %v43
  %v164 = vpop.f32.mrb[0].mxu0
  %v165 = vadd.f32 0.0, %v164
  %v166 = vpop.f32.mrb[0].mxu0
  %167 = vmatprep.mubr.f32.mxu0 0.0
  %168 = vmatmul.mubr.f32.gmra.mrb[0].mxu0 %v46
  %v169 = vpop.f32.mrb[0].mxu0
  %v170 = vadd.f32 0.0, %v169
  %v171 = vpop.f32.mrb[0].mxu0
  %172 = vmatprep.mubr.f32.mxu0 0.0
  %173 = vmatmul.mubr.f32.gmra.mrb[0].mxu0 %v49
  %v174 = vpop.f32.mrb[0].mxu0
  %v175 = vadd.f32 0.0, %v174
  %v176 = vpop.f32.mrb[0].mxu0
  %177 = vmatprep.mubr.f32.mxu0 0.0
  %178 = vmatmul.mubr.f32.gmra.mrb[0].mxu0 %v52
  %v179 = vpop.f32.mrb[0].mxu0
  %v180 = vadd.f32 0.0, %v179
  %v181 = vpop.f32.mrb[0].mxu0
  %182 = vmatprep.mubr.f32.mxu0 0.0
  %183 = vmatmul.mubr.f32.gmra.mrb[0].mxu0 %v55
  %v184 = vpop.f32.mrb[0].mxu0
  %v185 = vadd.f32 0.0, %v184
  %v186 = vpop.f32.mrb[0].mxu0
  %187 = vmatprep.mubr.f32.mxu0 0.0
  %188 = vmatmul.mubr.f32.gmra.mrb[0].mxu0 %v58
  %v189 = vpop.f32.mrb[0].mxu0
  %v190 = vadd.f32 0.0, %v189
  %v191 = vpop.f32.mrb[0].mxu0
  %192 = vmatprep.mubr.f32.mxu0 0.0
  %193 = vmatmul.mubr.f32.gmra.mrb[0].mxu0 %v61
  %v194 = vpop.f32.mrb[0].mxu0
  %v195 = vadd.f32 0.0, %v194
  %v196 = vpop.f32.mrb[0].mxu0
  %197 = vmatprep.mubr.f32.mxu0 0.0
  %198 = vmatmul.mubr.f32.gmra.mrb[0].mxu0 %v64
  %v199 = vpop.f32.mrb[0].mxu0
  %v200 = vadd.f32 0.0, %v199
  %v201 = vpop.f32.mrb[0].mxu0
  %202 = vmatprep.mubr.f32.mxu0 0.0
  %203 = vmatmul.mubr.f32.gmra.mrb[0].mxu0 %v67
  %v204 = vpop.f32.mrb[0].mxu0
  %v205 = vadd.f32 0.0, %v204
  %v206 = vpop.f32.mrb[0].mxu0
  %207 = vmatprep.mubr.f32.mxu0 0.0
  %208 = vmatmul.mubr.f32.gmra.mrb[0].mxu0 %v70
  %v209 = vpop.f32.mrb[0].mxu0
  %v210 = vadd.f32 0.0, %v209
  %v211 = vpop.f32.mrb[0].mxu0
  %212 = vmatprep.mubr.f32.mxu0 0.0
  %213 = vmatmul.mubr.f32.gmra.mrb[0].mxu0 %v73
  %v214 = vpop.f32.mrb[0].mxu0
  %v215 = vadd.f32 0.0, %v214
  %v216 = vpop.f32.mrb[0].mxu0
  %217 = vmatprep.mubr.f32.mxu0 0.0
  %218 = vmatmul.mubr.f32.gmra.mrb[0].mxu0 %v76
  %v219 = vpop.f32.mrb[0].mxu0
  %v220 = vadd.f32 0.0, %v219
  %v221 = vpop.f32.mrb[0].mxu0
  %222 = vmatprep.mubr.f32.mxu0 0.0
  %223 = vmatmul.mubr.f32.gmra.mrb[0].mxu0 %v79
  %v224 = vpop.f32.mrb[0].mxu0
  %v225 = vadd.f32 0.0, %v224
  %v226 = vpop.f32.mrb[0].mxu0
  %227 = vmatprep.mubr.f32.mxu0 0.0
  %228 = vmatmul.mubr.f32.gmra.mrb[0].mxu0 %v82
  %v229 = vpop.f32.mrb[0].mxu0
  %v230 = vadd.f32 0.0, %v229
  %v231 = vpop.f32.mrb[0].mxu0
  %232 = vdwg.mxu0
  %vm233 = vcmask 261120
  %234 = vst.msk [vmem:[%s2] sm:$0xff] %vm233, %v155
  %235 = vst.msk [vmem:[%s2 + $0x8] sm:$0xff] %vm233, %v160
  %236 = vst.msk [vmem:[%s2 + $0x10] sm:$0xff] %vm233, %v165
  %237 = vst.msk [vmem:[%s2 + $0x18] sm:$0xff] %vm233, %v170
  %238 = vst.msk [vmem:[%s2 + $0x20] sm:$0xff] %vm233, %v175
  %239 = vst.msk [vmem:[%s2 + $0x28] sm:$0xff] %vm233, %v180
  %240 = vst.msk [vmem:[%s2 + $0x30] sm:$0xff] %vm233, %v185
  %241 = vst.msk [vmem:[%s2 + $0x38] sm:$0xff] %vm233, %v190
  %242 = vst.msk [vmem:[%s2 + $0x40] sm:$0xff] %vm233, %v195
  %243 = vst.msk [vmem:[%s2 + $0x48] sm:$0xff] %vm233, %v200
  %244 = vst.msk [vmem:[%s2 + $0x50] sm:$0xff] %vm233, %v205
  %245 = vst.msk [vmem:[%s2 + $0x58] sm:$0xff] %vm233, %v210
  %246 = vst.msk [vmem:[%s2 + $0x60] sm:$0xff] %vm233, %v215
  %247 = vst.msk [vmem:[%s2 + $0x68] sm:$0xff] %vm233, %v220
  %248 = vst.msk [vmem:[%s2 + $0x70] sm:$0xff] %vm233, %v225
  %249 = vst.msk [vmem:[%s2 + $0x78] sm:$0xff] %vm233, %v230
  %v250 = vsel %vm233, %v155, 0.0
  %v251 = vsel %vm233, %v160, 0.0
  %v252 = vadd.f32 %v250, %v251
  %v253 = vsel %vm233, %v165, 0.0
  %v254 = vadd.f32 %v252, %v253
  %v255 = vsel %vm233, %v170, 0.0
  %v256 = vadd.f32 %v254, %v255
  %v257 = vsel %vm233, %v175, 0.0
  %v258 = vadd.f32 %v256, %v257
  %v259 = vsel %vm233, %v180, 0.0
  %v260 = vadd.f32 %v258, %v259
  %v261 = vsel %vm233, %v185, 0.0
  %v262 = vadd.f32 %v260, %v261
  %v263 = vsel %vm233, %v190, 0.0
  %v264 = vadd.f32 %v262, %v263
  %v265 = vsel %vm233, %v195, 0.0
  %v266 = vadd.f32 %v264, %v265
  %v267 = vsel %vm233, %v200, 0.0
  %v268 = vadd.f32 %v266, %v267
  %v269 = vsel %vm233, %v205, 0.0
  %v270 = vadd.f32 %v268, %v269
  %v271 = vsel %vm233, %v210, 0.0
  %v272 = vadd.f32 %v270, %v271
  %v273 = vsel %vm233, %v215, 0.0
  %v274 = vadd.f32 %v272, %v273
  %v275 = vsel %vm233, %v220, 0.0
  %v276 = vadd.f32 %v274, %v275
  %v277 = vsel %vm233, %v225, 0.0
  %v278 = vadd.f32 %v276, %v277
  %v279 = vsel %vm233, %v230, 0.0
  %v280 = vadd.f32 %v278, %v279
  %v281 = vrot.slane %v280, 4
  %v282 = vadd.f32 %v280, %v281
  %v283 = vrot.slane %v282, 2
  %v284 = vadd.f32 %v282, %v283
  %v285 = vrot.slane %v284, 1
  %v286 = vadd.f32 %v284, %v285
  %vm287 = vcmask 253952
  %288 = vst.msk [vmem:[%s3] sm:$0x1] %vm287, %v286
  %v289 = vmul.f32 %v155, %v155
  %v290 = vmul.f32 %v160, %v160
  %v291 = vmul.f32 %v165, %v165
  %v292 = vmul.f32 %v170, %v170
  %v293 = vmul.f32 %v175, %v175
  %v294 = vmul.f32 %v180, %v180
  %v295 = vmul.f32 %v185, %v185
  %v296 = vmul.f32 %v190, %v190
  %v297 = vmul.f32 %v195, %v195
  %v298 = vmul.f32 %v200, %v200
  %v299 = vmul.f32 %v205, %v205
  %v300 = vmul.f32 %v210, %v210
  %v301 = vmul.f32 %v215, %v215
  %v302 = vmul.f32 %v220, %v220
  %v303 = vmul.f32 %v225, %v225
  %v304 = vmul.f32 %v230, %v230
  %v305 = vsel %vm233, %v289, 0.0
  %v306 = vsel %vm233, %v290, 0.0
  %v307 = vadd.f32 %v305, %v306
  %v308 = vsel %vm233, %v291, 0.0
  %v309 = vadd.f32 %v307, %v308
  %v310 = vsel %vm233, %v292, 0.0
  %v311 = vadd.f32 %v309, %v310
  %v312 = vsel %vm233, %v293, 0.0
  %v313 = vadd.f32 %v311, %v312
  %v314 = vsel %vm233, %v294, 0.0
  %v315 = vadd.f32 %v313, %v314
  %v316 = vsel %vm233, %v295, 0.0
  %v317 = vadd.f32 %v315, %v316
  %v318 = vsel %vm233, %v296, 0.0
  %v319 = vadd.f32 %v317, %v318
  %v320 = vsel %vm233, %v297, 0.0
  %v321 = vadd.f32 %v319, %v320
  %v322 = vsel %vm233, %v298, 0.0
  %v323 = vadd.f32 %v321, %v322
  %v324 = vsel %vm233, %v299, 0.0
  %v325 = vadd.f32 %v323, %v324
  %v326 = vsel %vm233, %v300, 0.0
  %v327 = vadd.f32 %v325, %v326
  %v328 = vsel %vm233, %v301, 0.0
  %v329 = vadd.f32 %v327, %v328
  %v330 = vsel %vm233, %v302, 0.0
  %v331 = vadd.f32 %v329, %v330
  %v332 = vsel %vm233, %v303, 0.0
  %v333 = vadd.f32 %v331, %v332
  %v334 = vsel %vm233, %v304, 0.0
  %v335 = vadd.f32 %v333, %v334
  %v336 = vrot.slane %v335, 4
  %v337 = vadd.f32 %v335, %v336
  %v338 = vrot.slane %v337, 2
  %v339 = vadd.f32 %v337, %v338
  %v340 = vrot.slane %v339, 1
  %v341 = vadd.f32 %v339, %v340
  %342 = vst.msk [vmem:[%s4] sm:$0x1] %vm287, %v341
  // Predicated region
  $region10: #{g_enc_forward.9} parent=0 // pred_check
    _
  $region11: #{g_enc_forward.9} parent=0 // pred_check_branch
    %344 = sbr.rel (0) target = $region13
  $region12: #{g_enc_forward.9} parent=0 // pred_region
    _
  $region13: #{g_enc_forward.9} parent=0 // pred_fallthru
    _
  // Predicated region
  $region14: #{g_enc_forward.9} parent=0 // pred_check
    _
  $region15: #{g_enc_forward.9} parent=0 // pred_check_branch
    %346 = sbr.rel (0) target = $region17
  $region16: #{g_enc_forward.9} parent=0 // pred_region
    _
  $region17: #{g_enc_forward.9} parent=0 // pred_fallthru
    _
  // Predicated region
  $region18: #{g_enc_forward.9} parent=0 // pred_check
    _
  $region19: #{g_enc_forward.9} parent=0 // pred_check_branch
    %348 = sbr.rel (0) target = $region21
  $region20: #{g_enc_forward.9} parent=0 // pred_region
    _
  $region21: #{g_enc_forward.9} parent=0 // pred_fallthru
    _
  // Predicated region
  $region22: #{g_enc_forward.9} parent=0 // pred_check
    _
  $region23: #{g_enc_forward.9} parent=0 // pred_check_branch
    %350 = sbr.rel (0) target = $region25
  $region24: #{g_enc_forward.9} parent=0 // pred_region
    _
  $region25: #{g_enc_forward.9} parent=0 // pred_fallthru
    _
  // Predicated region
  $region26: #{g_enc_forward.9} parent=0 // pred_check
    _
  $region27: #{g_enc_forward.9} parent=0 // pred_check_branch
    %352 = sbr.rel (0) target = $region29
  $region28: #{g_enc_forward.9} parent=0 // pred_region
    _
  $region29: #{g_enc_forward.9} parent=0 // pred_fallthru
    _
  // Predicated region
  $region30: #{g_enc_forward.9} parent=0 // pred_check
    _
  $region31: #{g_enc_forward.9} parent=0 // pred_check_branch
    %354 = sbr.rel (0) target = $region33
  $region32: #{g_enc_forward.9} parent=0 // pred_region
    _
  $region33: #{g_enc_forward.9} parent=0 // pred_fallthru
    _

// kernel: g_enc_forward.11
$region0: #{g_enc_forward.11}
  #allocation0 [shape = 'u32[]', space=smem, size = 0x4, offset = 0x4, fixed_abs, tag = 'smem constant byte address 0x4 - core index']
  #allocation1 [shape = 'u32[144,128]{1,0:T(1,128)}', space=vmem, size = 0x12000, scoped, tag = 'internal scratch']
  %s0 = inlined_call_operand.vmem [shape: f32[64,96], index: 0, kind: input, shape index: {}]
  %s1 = inlined_call_operand.vmem [shape: f32[96,64], index: 1, kind: input, shape index: {}]
  %s2 = inlined_call_operand.vmem [shape: f32[64,64], index: 2, kind: output, shape index: {0}]
  %s3 = inlined_call_operand.vmem [shape: f32[1,1,64], index: 3, kind: output, shape index: {1}]
  %s4 = inlined_call_operand.vmem [shape: f32[1,1,64], index: 4, kind: output, shape index: {2}]
  %5 = xla_tuple %s2, %s3, %s4
  %s6 = sld [smem:[#allocation0]]
  $region34: #{g_enc_forward.11} parent=0
    _
  %s8 = ssub.s32 1, %s6
  %s9 = scalar_select 0, %s8, %s6
  // Predicated region
  $region2: #{g_enc_forward.11} parent=0 // pred_check
    _
  $region3: #{g_enc_forward.11} parent=0 // pred_check_branch
    %11 = sbr.rel (0) target = $region5
  $region4: #{g_enc_forward.11} parent=0 // pred_region
    _
  $region5: #{g_enc_forward.11} parent=0 // pred_fallthru
    _
  // Predicated region
  $region6: #{g_enc_forward.11} parent=0 // pred_check
    _
  $region7: #{g_enc_forward.11} parent=0 // pred_check_branch
    %13 = sbr.rel (0) target = $region9
  $region8: #{g_enc_forward.11} parent=0 // pred_region
    _
  $region9: #{g_enc_forward.11} parent=0 // pred_fallthru
    _
  %v14 = vld [vmem:[%s0] sm:$0xff]
  %v15 = vld [vmem:[%s0 + $0x8] sm:$0xff]
  %v16 = vld [vmem:[%s0 + $0x10] sm:$0xff]
  %v17 = vld [vmem:[%s0 + $0x18] sm:$0xff]
  %v18 = vld [vmem:[%s0 + $0x20] sm:$0xff]
  %v19 = vld [vmem:[%s0 + $0x28] sm:$0xff]
  %v20 = vld [vmem:[%s0 + $0x30] sm:$0xff]
  %v21 = vld [vmem:[%s0 + $0x38] sm:$0xff]
  %v22 = vld [vmem:[%s1] sm:$0xff]
  %v23 = vld [vmem:[%s1 + $0x8] sm:$0xff]
  %v24 = vld [vmem:[%s1 + $0x10] sm:$0xff]
  %v25 = vld [vmem:[%s1 + $0x18] sm:$0xff]
  %v26 = vld [vmem:[%s1 + $0x20] sm:$0xff]
  %v27 = vld [vmem:[%s1 + $0x28] sm:$0xff]
  %v28 = vld [vmem:[%s1 + $0x30] sm:$0xff]
  %v29 = vld [vmem:[%s1 + $0x38] sm:$0xff]
  %v30 = vld [vmem:[%s1 + $0x40] sm:$0xff]
  %v31 = vld [vmem:[%s1 + $0x48] sm:$0xff]
  %v32 = vld [vmem:[%s1 + $0x50] sm:$0xff]
  %v33 = vld [vmem:[%s1 + $0x58] sm:$0xff]
  %vm34 = vcmask 785408
  %v36 = vsel %vm34, %v14, 0
  %v39 = vsel %vm34, %v15, 0
  %v42 = vsel %vm34, %v16, 0
  %v45 = vsel %vm34, %v17, 0
  %v48 = vsel %vm34, %v18, 0
  %v51 = vsel %vm34, %v19, 0
  %v54 = vsel %vm34, %v20, 0
  %v57 = vsel %vm34, %v21, 0
  %59 = vmatprep.subr.mxu0 0.0
  %60 = vmatpush1.msra.mxu0 %v22
  %61 = vmatprep.subr.mxu0 0.0
  %62 = vmatpush1.msra.mxu0 %v23
  %63 = vmatprep.subr.mxu0 0.0
  %64 = vmatpush1.msra.mxu0 %v24
  %65 = vmatprep.subr.mxu0 0.0
  %66 = vmatpush1.msra.mxu0 %v25
  %67 = vmatprep.subr.mxu0 0.0
  %68 = vmatpush1.msra.mxu0 %v26
  %69 = vmatprep.subr.mxu0 0.0
  %70 = vmatpush1.msra.mxu0 %v27
  %71 = vmatprep.subr.mxu0 0.0
  %72 = vmatpush1.msra.mxu0 %v28
  %73 = vmatprep.subr.mxu0 0.0
  %74 = vmatpush1.msra.mxu0 %v29
  %75 = vmatprep.subr.mxu0 0.0
  %76 = vmatpush1.msra.mxu0 %v30
  %77 = vmatprep.subr.mxu0 0.0
  %78 = vmatpush1.msra.mxu0 %v31
  %79 = vmatprep.subr.mxu0 0.0
  %80 = vmatpush1.msra.mxu0 %v32
  %81 = vmatprep.subr.mxu0 0.0
  %82 = vmatpush1.msra.mxu0 %v33
  %83 = vmatprep.subr.mxu0 0.0
  %84 = vmatpush1.msra.mxu0 0.0
  %85 = vmatprep.subr.mxu0 0.0
  %86 = vmatpush1.msra.mxu0 0.0
  %87 = vmatprep.subr.mxu0 0.0
  %88 = vmatpush1.msra.mxu0 0.0
  %89 = vmatprep.subr.mxu0 0.0
  %90 = vmatpush1.msra.mxu0 0.0
  %91 = vmatprep.subr.mxu0 0.0
  %92 = vmatpush1.msra.mxu0 0.0
  %93 = vmatprep.subr.mxu0 0.0
  %94 = vmatpush1.msra.mxu0 0.0
  %95 = vmatprep.subr.mxu0 0.0
  %96 = vmatpush1.msra.mxu0 0.0
  %97 = vmatprep.subr.mxu0 0.0
  %98 = vmatpush1.msra.mxu0 0.0
  %99 = vmatprep.subr.mxu0 0.0
  %100 = vmatpush1.msra.mxu0 0.0
  %101 = vmatprep.subr.mxu0 0.0
  %102 = vmatpush1.msra.mxu0 0.0
  %103 = vmatprep.subr.mxu0 0.0
  %104 = vmatpush1.msra.mxu0 0.0
  %105 = vmatprep.subr.mxu0 0.0
  %106 = vmatpush1.msra.mxu0 0.0
  %107 = vmatprep.subr.mxu0 0.0
  %108 = vmatpush1.msra.mxu0 0.0
  %109 = vmatprep.subr.mxu0 0.0
  %110 = vmatpush1.msra.mxu0 0.0
  %111 = vmatprep.subr.mxu0 0.0
  %112 = vmatpush1.msra.mxu0 0.0
  %113 = vmatprep.subr.mxu0 0.0
  %114 = vmatpush1.msra.mxu0 0.0
  %115 = vmatprep.subr.mxu0 0.0
  %116 = vmatpush1.msra.mxu0 0.0
  %117 = vmatprep.subr.mxu0 0.0
  %118 = vmatpush1.msra.mxu0 0.0
  %119 = vmatprep.subr.mxu0 0.0
  %120 = vmatpush1.msra.mxu0 0.0
  %121 = vmatprep.subr.mxu0 0.0
  %122 = vmatpush1.msra.mxu0 0.0
  %123 = vmatprep.mubr.f32.mxu0 0.0
  %124 = vmatmul.mubr.f32.gmra.mrb[0].mxu0 %v36
  %v125 = vpop.f32.mrb[0].mxu0
  %v126 = vadd.f32 0.0, %v125
  %v127 = vpop.f32.mrb[0].mxu0
  %128 = vmatprep.mubr.f32.mxu0 0.0
  %129 = vmatmul.mubr.f32.gmra.mrb[0].mxu0 %v39
  %v130 = vpop.f32.mrb[0].mxu0
  %v131 = vadd.f32 0.0, %v130
  %v132 = vpop.f32.mrb[0].mxu0
  %133 = vmatprep.mubr.f32.mxu0 0.0
  %134 = vmatmul.mubr.f32.gmra.mrb[0].mxu0 %v42
  %v135 = vpop.f32.mrb[0].mxu0
  %v136 = vadd.f32 0.0, %v135
  %v137 = vpop.f32.mrb[0].mxu0
  %138 = vmatprep.mubr.f32.mxu0 0.0
  %139 = vmatmul.mubr.f32.gmra.mrb[0].mxu0 %v45
  %v140 = vpop.f32.mrb[0].mxu0
  %v141 = vadd.f32 0.0, %v140
  %v142 = vpop.f32.mrb[0].mxu0
  %143 = vmatprep.mubr.f32.mxu0 0.0
  %144 = vmatmul.mubr.f32.gmra.mrb[0].mxu0 %v48
  %v145 = vpop.f32.mrb[0].mxu0
  %v146 = vadd.f32 0.0, %v145
  %v147 = vpop.f32.mrb[0].mxu0
  %148 = vmatprep.mubr.f32.mxu0 0.0
  %149 = vmatmul.mubr.f32.gmra.mrb[0].mxu0 %v51
  %v150 = vpop.f32.mrb[0].mxu0
  %v151 = vadd.f32 0.0, %v150
  %v152 = vpop.f32.mrb[0].mxu0
  %153 = vmatprep.mubr.f32.mxu0 0.0
  %154 = vmatmul.mubr.f32.gmra.mrb[0].mxu0 %v54
  %v155 = vpop.f32.mrb[0].mxu0
  %v156 = vadd.f32 0.0, %v155
  %v157 = vpop.f32.mrb[0].mxu0
  %158 = vmatprep.mubr.f32.mxu0 0.0
  %159 = vmatmul.mubr.f32.gmra.mrb[0].mxu0 %v57
  %v160 = vpop.f32.mrb[0].mxu0
  %v161 = vadd.f32 0.0, %v160
  %v162 = vpop.f32.mrb[0].mxu0
  %163 = vdwg.mxu0
  %vm164 = vcmask 523264
  %165 = vst.msk [vmem:[%s2] sm:$0xff] %vm164, %v126
  %166 = vst.msk [vmem:[%s2 + $0x8] sm:$0xff] %vm164, %v131
  %167 = vst.msk [vmem:[%s2 + $0x10] sm:$0xff] %vm164, %v136
  %168 = vst.msk [vmem:[%s2 + $0x18] sm:$0xff] %vm164, %v141
  %169 = vst.msk [vmem:[%s2 + $0x20] sm:$0xff] %vm164, %v146
  %170 = vst.msk [vmem:[%s2 + $0x28] sm:$0xff] %vm164, %v151
  %171 = vst.msk [vmem:[%s2 + $0x30] sm:$0xff] %vm164, %v156
  %172 = vst.msk [vmem:[%s2 + $0x38] sm:$0xff] %vm164, %v161
  %v173 = vsel %vm164, %v126, 0.0
  %v174 = vsel %vm164, %v131, 0.0
  %v175 = vadd.f32 %v173, %v174
  %v176 = vsel %vm164, %v136, 0.0
  %v177 = vadd.f32 %v175, %v176
  %v178 = vsel %vm164, %v141, 0.0
  %v179 = vadd.f32 %v177, %v178
  %v180 = vsel %vm164, %v146, 0.0
  %v181 = vadd.f32 %v179, %v180
  %v182 = vsel %vm164, %v151, 0.0
  %v183 = vadd.f32 %v181, %v182
  %v184 = vsel %vm164, %v156, 0.0
  %v185 = vadd.f32 %v183, %v184
  %v186 = vsel %vm164, %v161, 0.0
  %v187 = vadd.f32 %v185, %v186
  %v188 = vrot.slane %v187, 4
  %v189 = vadd.f32 %v187, %v188
  %v190 = vrot.slane %v189, 2
  %v191 = vadd.f32 %v189, %v190
  %v192 = vrot.slane %v191, 1
  %v193 = vadd.f32 %v191, %v192
  %vm194 = vcmask 516096
  %195 = vst.msk [vmem:[%s3] sm:$0x1] %vm194, %v193
  %v196 = vmul.f32 %v126, %v126
  %v197 = vmul.f32 %v131, %v131
  %v198 = vmul.f32 %v136, %v136
  %v199 = vmul.f32 %v141, %v141
  %v200 = vmul.f32 %v146, %v146
  %v201 = vmul.f32 %v151, %v151
  %v202 = vmul.f32 %v156, %v156
  %v203 = vmul.f32 %v161, %v161
  %v204 = vsel %vm164, %v196, 0.0
  %v205 = vsel %vm164, %v197, 0.0
  %v206 = vadd.f32 %v204, %v205
  %v207 = vsel %vm164, %v198, 0.0
  %v208 = vadd.f32 %v206, %v207
  %v209 = vsel %vm164, %v199, 0.0
  %v210 = vadd.f32 %v208, %v209
  %v211 = vsel %vm164, %v200, 0.0
  %v212 = vadd.f32 %v210, %v211
  %v213 = vsel %vm164, %v201, 0.0
  %v214 = vadd.f32 %v212, %v213
  %v215 = vsel %vm164, %v202, 0.0
  %v216 = vadd.f32 %v214, %v215
  %v217 = vsel %vm164, %v203, 0.0
  %v218 = vadd.f32 %v216, %v217
  %v219 = vrot.slane %v218, 4
  %v220 = vadd.f32 %v218, %v219
  %v221 = vrot.slane %v220, 2
  %v222 = vadd.f32 %v220, %v221
  %v223 = vrot.slane %v222, 1
  %v224 = vadd.f32 %v222, %v223
  %225 = vst.msk [vmem:[%s4] sm:$0x1] %vm194, %v224
  // Predicated region
  $region10: #{g_enc_forward.11} parent=0 // pred_check
    _
  $region11: #{g_enc_forward.11} parent=0 // pred_check_branch
    %227 = sbr.rel (0) target = $region13
  $region12: #{g_enc_forward.11} parent=0 // pred_region
    _
  $region13: #{g_enc_forward.11} parent=0 // pred_fallthru
    _
  // Predicated region
  $region14: #{g_enc_forward.11} parent=0 // pred_check
    _
  $region15: #{g_enc_forward.11} parent=0 // pred_check_branch
    %229 = sbr.rel (0) target = $region17
  $region16: #{g_enc_forward.11} parent=0 // pred_region
    _
  $region17: #{g_enc_forward.11} parent=0 // pred_fallthru
    _
  // Predicated region
  $region18: #{g_enc_forward.11} parent=0 // pred_check
    _
  $region19: #{g_enc_forward.11} parent=0 // pred_check_branch
    %231 = sbr.rel (0) target = $region21
  $region20: #{g_enc_forward.11} parent=0 // pred_region
    _
  $region21: #{g_enc_forward.11} parent=0 // pred_fallthru
    _
  // Predicated region
  $region22: #{g_enc_forward.11} parent=0 // pred_check
    _
  $region23: #{g_enc_forward.11} parent=0 // pred_check_branch
    %233 = sbr.rel (0) target = $region25
  $region24: #{g_enc_forward.11} parent=0 // pred_region
    _
  $region25: #{g_enc_forward.11} parent=0 // pred_fallthru
    _
  // Predicated region
  $region26: #{g_enc_forward.11} parent=0 // pred_check
    _
  $region27: #{g_enc_forward.11} parent=0 // pred_check_branch
    %235 = sbr.rel (0) target = $region29
  $region28: #{g_enc_forward.11} parent=0 // pred_region
    _
  $region29: #{g_enc_forward.11} parent=0 // pred_fallthru
    _
  // Predicated region
  $region30: #{g_enc_forward.11} parent=0 // pred_check
    _
  $region31: #{g_enc_forward.11} parent=0 // pred_check_branch
    %237 = sbr.rel (0) target = $region33
  $region32: #{g_enc_forward.11} parent=0 // pred_region
    _
  $region33: #{g_enc_forward.11} parent=0 // pred_fallthru
    _

// kernel: g_enc_forward.12
$region0: #{g_enc_forward.12}
  #allocation0 [shape = 'u32[]', space=smem, size = 0x4, offset = 0x4, fixed_abs, tag = 'smem constant byte address 0x4 - core index']
  #allocation1 [shape = 'u32[144,128]{1,0:T(1,128)}', space=vmem, size = 0x12000, scoped, tag = 'internal scratch']
  %s0 = inlined_call_operand.vmem [shape: f32[32,128], index: 0, kind: input, shape index: {}]
  %s1 = inlined_call_operand.vmem [shape: f32[1,64], index: 1, kind: input, shape index: {}]
  %s2 = inlined_call_operand.vmem [shape: f32[1,64], index: 2, kind: input, shape index: {}]
  %s3 = inlined_call_operand.vmem [shape: f32[32,64], index: 3, kind: output, shape index: {}]
  %s4 = sld [smem:[#allocation0]]
  $region22: #{g_enc_forward.12} parent=0
    _
  %s6 = ssub.s32 1, %s4
  %s7 = scalar_select 0, %s6, %s4
  // Predicated region
  $region2: #{g_enc_forward.12} parent=0 // pred_check
    _
  $region3: #{g_enc_forward.12} parent=0 // pred_check_branch
    %9 = sbr.rel (0) target = $region5
  $region4: #{g_enc_forward.12} parent=0 // pred_region
    _
  $region5: #{g_enc_forward.12} parent=0 // pred_fallthru
    _
  // Predicated region
  $region6: #{g_enc_forward.12} parent=0 // pred_check
    _
  $region7: #{g_enc_forward.12} parent=0 // pred_check_branch
    %11 = sbr.rel (0) target = $region9
  $region8: #{g_enc_forward.12} parent=0 // pred_region
    _
  $region9: #{g_enc_forward.12} parent=0 // pred_fallthru
    _
  // Predicated region
  $region10: #{g_enc_forward.12} parent=0 // pred_check
    _
  $region11: #{g_enc_forward.12} parent=0 // pred_check_branch
    %13 = sbr.rel (0) target = $region13
  $region12: #{g_enc_forward.12} parent=0 // pred_region
    _
  $region13: #{g_enc_forward.12} parent=0 // pred_fallthru
    _
  %v14 = vld [vmem:[%s0] sm:$0xff]
  %v15 = vld [vmem:[%s0 + $0x8] sm:$0xff]
  %v16 = vld [vmem:[%s0 + $0x10] sm:$0xff]
  %v17 = vld [vmem:[%s0 + $0x18] sm:$0xff]
  %22 = vrot.lane.b32.xlu0 %v14, 64
  %v23 = vpop.permute.xlu0 %22
  %24 = vrot.lane.b32.xlu0 %v15, 64
  %v25 = vpop.permute.xlu0 %24
  %26 = vrot.lane.b32.xlu0 %v16, 64
  %v27 = vpop.permute.xlu0 %26
  %28 = vrot.lane.b32.xlu0 %v17, 64
  %v29 = vpop.permute.xlu0 %28
  %v34 = vmax.f32 %v14, %v23
  %v35 = vmax.f32 %v15, %v25
  %v36 = vmax.f32 %v16, %v27
  %v37 = vmax.f32 %v17, %v29
  %v38 = vld [vmem:[%s1] sm:$0x1]
  %v40 = vlaneseq
  %v41 = vshrl.u32 %v40, 7
  %v42 = vsub.s32 0, %v41
  %v43 = vrot.slane %v38, %v42
  %v45 = vsub.f32 %v34, %v43
  %v46 = vsub.f32 %v35, %v43
  %v47 = vsub.f32 %v36, %v43
  %v48 = vsub.f32 %v37, %v43
  %v49 = vld [vmem:[%s2] sm:$0x1]
  %v51 = vlaneseq
  %v52 = vshrl.u32 %v51, 7
  %v53 = vsub.s32 0, %v52
  %v54 = vrot.slane %v49, %v53
  %v56 = vmul.f32 %v45, %v54
  %v57 = vmul.f32 %v46, %v54
  %v58 = vmul.f32 %v47, %v54
  %v59 = vmul.f32 %v48, %v54
  %v60 = vmax.f32 %v56, 0.0
  %v61 = vmax.f32 %v57, 0.0
  %v62 = vmax.f32 %v58, 0.0
  %v63 = vmax.f32 %v59, 0.0
  %vm64 = vcmask 523264
  %65 = vst.msk [vmem:[%s3] sm:$0xff] %vm64, %v60
  %66 = vst.msk [vmem:[%s3 + $0x8] sm:$0xff] %vm64, %v61
  %67 = vst.msk [vmem:[%s3 + $0x10] sm:$0xff] %vm64, %v62
  %68 = vst.msk [vmem:[%s3 + $0x18] sm:$0xff] %vm64, %v63
  // Predicated region
  $region14: #{g_enc_forward.12} parent=0 // pred_check
    _
  $region15: #{g_enc_forward.12} parent=0 // pred_check_branch
    %70 = sbr.rel (0) target = $region17
  $region16: #{g_enc_forward.12} parent=0 // pred_region
    _
  $region17: #{g_enc_forward.12} parent=0 // pred_fallthru
    _
  // Predicated region
  $region18: #{g_enc_forward.12} parent=0 // pred_check
    _
  $region19: #{g_enc_forward.12} parent=0 // pred_check_branch
    %72 = sbr.rel (0) target = $region21
  $region20: #{g_enc_forward.12} parent=0 // pred_region
    _
  $region21: #{g_enc_forward.12} parent=0 // pred_fallthru
    _

// kernel: g_enc_forward.14
$region0: #{g_enc_forward.14}
  #allocation0 [shape = 'u32[]', space=smem, size = 0x4, offset = 0x4, fixed_abs, tag = 'smem constant byte address 0x4 - core index']
  #allocation1 [shape = 'u32[144,128]{1,0:T(1,128)}', space=vmem, size = 0x12000, scoped, tag = 'internal scratch']
  %s0 = inlined_call_operand.vmem [shape: f32[16,512], index: 0, kind: input, shape index: {}]
  %s1 = inlined_call_operand.vmem [shape: f32[1,256], index: 1, kind: input, shape index: {}]
  %s2 = inlined_call_operand.vmem [shape: f32[1,256], index: 2, kind: input, shape index: {}]
  %s3 = inlined_call_operand.vmem [shape: f32[16,256], index: 3, kind: output, shape index: {}]
  %s4 = sld [smem:[#allocation0]]
  $region22: #{g_enc_forward.14} parent=0
    _
  %s6 = ssub.s32 1, %s4
  %s7 = scalar_select 0, %s6, %s4
  // Predicated region
  $region2: #{g_enc_forward.14} parent=0 // pred_check
    _
  $region3: #{g_enc_forward.14} parent=0 // pred_check_branch
    %9 = sbr.rel (0) target = $region5
  $region4: #{g_enc_forward.14} parent=0 // pred_region
    _
  $region5: #{g_enc_forward.14} parent=0 // pred_fallthru
    _
  // Predicated region
  $region6: #{g_enc_forward.14} parent=0 // pred_check
    _
  $region7: #{g_enc_forward.14} parent=0 // pred_check_branch
    %11 = sbr.rel (0) target = $region9
  $region8: #{g_enc_forward.14} parent=0 // pred_region
    _
  $region9: #{g_enc_forward.14} parent=0 // pred_fallthru
    _
  // Predicated region
  $region10: #{g_enc_forward.14} parent=0 // pred_check
    _
  $region11: #{g_enc_forward.14} parent=0 // pred_check_branch
    %13 = sbr.rel (0) target = $region13
  $region12: #{g_enc_forward.14} parent=0 // pred_region
    _
  $region13: #{g_enc_forward.14} parent=0 // pred_fallthru
    _
  %v14 = vld [vmem:[%s0] sm:$0xff]
  %v15 = vld [vmem:[%s0 + $0x8] sm:$0xff]
  %v16 = vld [vmem:[%s0 + $0x10] sm:$0xff]
  %v17 = vld [vmem:[%s0 + $0x18] sm:$0xff]
  %v18 = vld [vmem:[%s0 + $0x20] sm:$0xff]
  %v19 = vld [vmem:[%s0 + $0x28] sm:$0xff]
  %v20 = vld [vmem:[%s0 + $0x30] sm:$0xff]
  %v21 = vld [vmem:[%s0 + $0x38] sm:$0xff]
  %v22 = vmax.f32 %v14, %v16
  %v23 = vmax.f32 %v15, %v17
  %v24 = vmax.f32 %v18, %v20
  %v25 = vmax.f32 %v19, %v21
  %v26 = vld [vmem:[%s1] sm:$0x3]
  %v28 = vlaneseq
  %v29 = vshrl.u32 %v28, 7
  %v30 = vsub.s32 0, %v29
  %v31 = vrot.slane %v26, %v30
  %v32 = vlaneseq
  %v33 = vshrl.u32 %v32, 7
  %v34 = vsub.s32 1, %v33
  %v35 = vrot.slane %v26, %v34
  %v38 = vsub.f32 %v22, %v31
  %v39 = vsub.f32 %v23, %v35
  %v40 = vsub.f32 %v24, %v31
  %v41 = vsub.f32 %v25, %v35
  %v42 = vld [vmem:[%s2] sm:$0x3]
  %v44 = vlaneseq
  %v45 = vshrl.u32 %v44, 7
  %v46 = vsub.s32 0, %v45
  %v47 = vrot.slane %v42, %v46
  %v48 = vlaneseq
  %v49 = vshrl.u32 %v48, 7
  %v50 = vsub.s32 1, %v49
  %v51 = vrot.slane %v42, %v50
  %v54 = vmul.f32 %v38, %v47
  %v55 = vmul.f32 %v39, %v51
  %v56 = vmul.f32 %v40, %v47
  %v57 = vmul.f32 %v41, %v51
  %v58 = vmax.f32 %v54, 0.0
  %v59 = vmax.f32 %v55, 0.0
  %v60 = vmax.f32 %v56, 0.0
  %v61 = vmax.f32 %v57, 0.0
  %62 = vst [vmem:[%s3] sm:$0xff] %v58
  %63 = vst [vmem:[%s3 + $0x8] sm:$0xff] %v59
  %64 = vst [vmem:[%s3 + $0x10] sm:$0xff] %v60
  %65 = vst [vmem:[%s3 + $0x18] sm:$0xff] %v61
  // Predicated region
  $region14: #{g_enc_forward.14} parent=0 // pred_check
    _
  $region15: #{g_enc_forward.14} parent=0 // pred_check_branch
    %67 = sbr.rel (0) target = $region17
  $region16: #{g_enc_forward.14} parent=0 // pred_region
    _
  $region17: #{g_enc_forward.14} parent=0 // pred_fallthru
    _
  // Predicated region
  $region18: #{g_enc_forward.14} parent=0 // pred_check
    _
  $region19: #{g_enc_forward.14} parent=0 // pred_check_branch
    %69 = sbr.rel (0) target = $region21
  $region20: #{g_enc_forward.14} parent=0 // pred_region
    _
  $region21: #{g_enc_forward.14} parent=0 // pred_fallthru
    _

// kernel: g_enc_forward.13
$region0: #{g_enc_forward.13}
  #allocation0 [shape = 'u32[]', space=smem, size = 0x4, offset = 0x4, fixed_abs, tag = 'smem constant byte address 0x4 - core index']
  #allocation1 [shape = 'u32[144,128]{1,0:T(1,128)}', space=vmem, size = 0x12000, scoped, tag = 'internal scratch']
  %s0 = inlined_call_operand.vmem [shape: f32[32,192], index: 0, kind: input, shape index: {}]
  %s1 = inlined_call_operand.vmem [shape: f32[192,256], index: 1, kind: input, shape index: {}]
  %s2 = inlined_call_operand.vmem [shape: f32[32,256], index: 2, kind: output, shape index: {0}]
  %s3 = inlined_call_operand.vmem [shape: f32[1,1,256], index: 3, kind: output, shape index: {1}]
  %s4 = inlined_call_operand.vmem [shape: f32[1,1,256], index: 4, kind: output, shape index: {2}]
  %5 = xla_tuple %s2, %s3, %s4
  %s6 = sld [smem:[#allocation0]]
  $region34: #{g_enc_forward.13} parent=0
    _
  %s8 = ssub.s32 1, %s6
  %s9 = scalar_select 0, %s8, %s6
  // Predicated region
  $region2: #{g_enc_forward.13} parent=0 // pred_check
    _
  $region3: #{g_enc_forward.13} parent=0 // pred_check_branch
    %11 = sbr.rel (0) target = $region5
  $region4: #{g_enc_forward.13} parent=0 // pred_region
    _
  $region5: #{g_enc_forward.13} parent=0 // pred_fallthru
    _
  // Predicated region
  $region6: #{g_enc_forward.13} parent=0 // pred_check
    _
  $region7: #{g_enc_forward.13} parent=0 // pred_check_branch
    %13 = sbr.rel (0) target = $region9
  $region8: #{g_enc_forward.13} parent=0 // pred_region
    _
  $region9: #{g_enc_forward.13} parent=0 // pred_fallthru
    _
  %v14 = vld [vmem:[%s0] sm:$0xff]
  %v15 = vld [vmem:[%s0 + $0x8] sm:$0xff]
  %v16 = vld [vmem:[%s0 + $0x10] sm:$0xff]
  %v17 = vld [vmem:[%s0 + $0x18] sm:$0xff]
  %v18 = vld [vmem:[%s0 + $0x20] sm:$0xff]
  %v19 = vld [vmem:[%s0 + $0x28] sm:$0xff]
  %v20 = vld [vmem:[%s0 + $0x30] sm:$0xff]
  %v21 = vld [vmem:[%s0 + $0x38] sm:$0xff]
  %v22 = vld [vmem:[%s1] sm:$0xff]
  %v23 = vld [vmem:[%s1 + $0x8] sm:$0xff]
  %v24 = vld [vmem:[%s1 + $0x10] sm:$0xff]
  %v25 = vld [vmem:[%s1 + $0x18] sm:$0xff]
  %v26 = vld [vmem:[%s1 + $0x20] sm:$0xff]
  %v27 = vld [vmem:[%s1 + $0x28] sm:$0xff]
  %v28 = vld [vmem:[%s1 + $0x30] sm:$0xff]
  %v29 = vld [vmem:[%s1 + $0x38] sm:$0xff]
  %v30 = vld [vmem:[%s1 + $0x40] sm:$0xff]
  %v31 = vld [vmem:[%s1 + $0x48] sm:$0xff]
  %v32 = vld [vmem:[%s1 + $0x50] sm:$0xff]
  %v33 = vld [vmem:[%s1 + $0x58] sm:$0xff]
  %v34 = vld [vmem:[%s1 + $0x60] sm:$0xff]
  %v35 = vld [vmem:[%s1 + $0x68] sm:$0xff]
  %v36 = vld [vmem:[%s1 + $0x70] sm:$0xff]
  %v37 = vld [vmem:[%s1 + $0x78] sm:$0xff]
  %v38 = vld [vmem:[%s1 + $0x80] sm:$0xff]
  %v39 = vld [vmem:[%s1 + $0x88] sm:$0xff]
  %v40 = vld [vmem:[%s1 + $0x90] sm:$0xff]
  %v41 = vld [vmem:[%s1 + $0x98] sm:$0xff]
  %v42 = vld [vmem:[%s1 + $0xa0] sm:$0xff]
  %v43 = vld [vmem:[%s1 + $0xa8] sm:$0xff]
  %v44 = vld [vmem:[%s1 + $0xb0] sm:$0xff]
  %v45 = vld [vmem:[%s1 + $0xb8] sm:$0xff]
  %v46 = vld [vmem:[%s1 + $0xc0] sm:$0xff]
  %v47 = vld [vmem:[%s1 + $0xc8] sm:$0xff]
  %v48 = vld [vmem:[%s1 + $0xd0] sm:$0xff]
  %v49 = vld [vmem:[%s1 + $0xd8] sm:$0xff]
  %v50 = vld [vmem:[%s1 + $0xe0] sm:$0xff]
  %v51 = vld [vmem:[%s1 + $0xe8] sm:$0xff]
  %v52 = vld [vmem:[%s1 + $0xf0] sm:$0xff]
  %v53 = vld [vmem:[%s1 + $0xf8] sm:$0xff]
  %v54 = vld [vmem:[%s1 + $0x100] sm:$0xff]
  %v55 = vld [vmem:[%s1 + $0x108] sm:$0xff]
  %v56 = vld [vmem:[%s1 + $0x110] sm:$0xff]
  %v57 = vld [vmem:[%s1 + $0x118] sm:$0xff]
  %v58 = vld [vmem:[%s1 + $0x120] sm:$0xff]
  %v59 = vld [vmem:[%s1 + $0x128] sm:$0xff]
  %v60 = vld [vmem:[%s1 + $0x130] sm:$0xff]
  %v61 = vld [vmem:[%s1 + $0x138] sm:$0xff]
  %v62 = vld [vmem:[%s1 + $0x140] sm:$0xff]
  %v63 = vld [vmem:[%s1 + $0x148] sm:$0xff]
  %v64 = vld [vmem:[%s1 + $0x150] sm:$0xff]
  %v65 = vld [vmem:[%s1 + $0x158] sm:$0xff]
  %v66 = vld [vmem:[%s1 + $0x160] sm:$0xff]
  %v67 = vld [vmem:[%s1 + $0x168] sm:$0xff]
  %v68 = vld [vmem:[%s1 + $0x170] sm:$0xff]
  %v69 = vld [vmem:[%s1 + $0x178] sm:$0xff]
  %vm70 = vcmask 523264
  %v72 = vsel %vm70, %v15, 0
  %v75 = vsel %vm70, %v17, 0
  %v78 = vsel %vm70, %v19, 0
  %v81 = vsel %vm70, %v21, 0
  %83 = vmatprep.subr.mxu0 %v23
  %84 = vmatpush1.msra.mxu0 %v22
  %85 = vmatprep.subr.mxu0 %v25
  %86 = vmatpush1.msra.mxu0 %v24
  %87 = vmatprep.subr.mxu0 %v27
  %88 = vmatpush1.msra.mxu0 %v26
  %89 = vmatprep.subr.mxu0 %v29
  %90 = vmatpush1.msra.mxu0 %v28
  %91 = vmatprep.subr.mxu0 %v31
  %92 = vmatpush1.msra.mxu0 %v30
  %93 = vmatprep.subr.mxu0 %v33
  %94 = vmatpush1.msra.mxu0 %v32
  %95 = vmatprep.subr.mxu0 %v35
  %96 = vmatpush1.msra.mxu0 %v34
  %97 = vmatprep.subr.mxu0 %v37
  %98 = vmatpush1.msra.mxu0 %v36
  %99 = vmatprep.subr.mxu0 %v39
  %100 = vmatpush1.msra.mxu0 %v38
  %101 = vmatprep.subr.mxu0 %v41
  %102 = vmatpush1.msra.mxu0 %v40
  %103 = vmatprep.subr.mxu0 %v43
  %104 = vmatpush1.msra.mxu0 %v42
  %105 = vmatprep.subr.mxu0 %v45
  %106 = vmatpush1.msra.mxu0 %v44
  %107 = vmatprep.subr.mxu0 %v47
  %108 = vmatpush1.msra.mxu0 %v46
  %109 = vmatprep.subr.mxu0 %v49
  %110 = vmatpush1.msra.mxu0 %v48
  %111 = vmatprep.subr.mxu0 %v51
  %112 = vmatpush1.msra.mxu0 %v50
  %113 = vmatprep.subr.mxu0 %v53
  %114 = vmatpush1.msra.mxu0 %v52
  %115 = vmatprep.subr.mxu0 %v55
  %116 = vmatpush1.msra.mxu0 %v54
  %117 = vmatprep.subr.mxu0 %v57
  %118 = vmatpush1.msra.mxu0 %v56
  %119 = vmatprep.subr.mxu0 %v59
  %120 = vmatpush1.msra.mxu0 %v58
  %121 = vmatprep.subr.mxu0 %v61
  %122 = vmatpush1.msra.mxu0 %v60
  %123 = vmatprep.subr.mxu0 %v63
  %124 = vmatpush1.msra.mxu0 %v62
  %125 = vmatprep.subr.mxu0 %v65
  %126 = vmatpush1.msra.mxu0 %v64
  %127 = vmatprep.subr.mxu0 %v67
  %128 = vmatpush1.msra.mxu0 %v66
  %129 = vmatprep.subr.mxu0 %v69
  %130 = vmatpush1.msra.mxu0 %v68
  %131 = vmatprep.subr.mxu0 0.0
  %132 = vmatpush1.msra.mxu0 0.0
  %133 = vmatprep.subr.mxu0 0.0
  %134 = vmatpush1.msra.mxu0 0.0
  %135 = vmatprep.subr.mxu0 0.0
  %136 = vmatpush1.msra.mxu0 0.0
  %137 = vmatprep.subr.mxu0 0.0
  %138 = vmatpush1.msra.mxu0 0.0
  %139 = vmatprep.subr.mxu0 0.0
  %140 = vmatpush1.msra.mxu0 0.0
  %141 = vmatprep.subr.mxu0 0.0
  %142 = vmatpush1.msra.mxu0 0.0
  %143 = vmatprep.subr.mxu0 0.0
  %144 = vmatpush1.msra.mxu0 0.0
  %145 = vmatprep.subr.mxu0 0.0
  %146 = vmatpush1.msra.mxu0 0.0
  %147 = vmatprep.mubr.f32.mxu0 %v72
  %148 = vmatmul.mubr.f32.gmra.mrb[0].mxu0 %v14
  %v149 = vpop.f32.mrb[0].mxu0
  %v150 = vadd.f32 0.0, %v149
  %v151 = vpop.f32.mrb[0].mxu0
  %v152 = vadd.f32 0.0, %v151
  %153 = vmatprep.mubr.f32.mxu0 %v75
  %154 = vmatmul.mubr.f32.gmra.mrb[0].mxu0 %v16
  %v155 = vpop.f32.mrb[0].mxu0
  %v156 = vadd.f32 0.0, %v155
  %v157 = vpop.f32.mrb[0].mxu0
  %v158 = vadd.f32 0.0, %v157
  %159 = vmatprep.mubr.f32.mxu0 %v78
  %160 = vmatmul.mubr.f32.gmra.mrb[0].mxu0 %v18
  %v161 = vpop.f32.mrb[0].mxu0
  %v162 = vadd.f32 0.0, %v161
  %v163 = vpop.f32.mrb[0].mxu0
  %v164 = vadd.f32 0.0, %v163
  %165 = vmatprep.mubr.f32.mxu0 %v81
  %166 = vmatmul.mubr.f32.gmra.mrb[0].mxu0 %v20
  %v167 = vpop.f32.mrb[0].mxu0
  %v168 = vadd.f32 0.0, %v167
  %v169 = vpop.f32.mrb[0].mxu0
  %v170 = vadd.f32 0.0, %v169
  %171 = vdwg.mxu0
  %172 = vst [vmem:[%s2] sm:$0xff] %v150
  %173 = vst [vmem:[%s2 + $0x8] sm:$0xff] %v152
  %174 = vst [vmem:[%s2 + $0x10] sm:$0xff] %v156
  %175 = vst [vmem:[%s2 + $0x18] sm:$0xff] %v158
  %176 = vst [vmem:[%s2 + $0x20] sm:$0xff] %v162
  %177 = vst [vmem:[%s2 + $0x28] sm:$0xff] %v164
  %178 = vst [vmem:[%s2 + $0x30] sm:$0xff] %v168
  %179 = vst [vmem:[%s2 + $0x38] sm:$0xff] %v170
  %v180 = vadd.f32 %v150, %v156
  %v181 = vadd.f32 %v180, %v162
  %v182 = vadd.f32 %v181, %v168
  %v183 = vrot.slane %v182, 4
  %v184 = vadd.f32 %v182, %v183
  %v185 = vrot.slane %v184, 2
  %v186 = vadd.f32 %v184, %v185
  %v187 = vrot.slane %v186, 1
  %v188 = vadd.f32 %v186, %v187
  %v189 = vadd.f32 %v152, %v158
  %v190 = vadd.f32 %v189, %v164
  %v191 = vadd.f32 %v190, %v170
  %v192 = vrot.slane %v191, 4
  %v193 = vadd.f32 %v191, %v192
  %v194 = vrot.slane %v193, 2
  %v195 = vadd.f32 %v193, %v194
  %v196 = vrot.slane %v195, 1
  %v197 = vadd.f32 %v195, %v196
  %v200 = vcombine.low %v188, %v197
  %v202 = vunpack.c.l.s4 1966171168
  %v203 = vunpack.c.0.s8 %v202
  %v204 = vlaneseq
  %v205 = vshrl.u32 %v204, 7
  %v206 = vsub.s32 %v203, %v205
  %v207 = vrot.slane %v200, %v206
  %v209 = vunpack.c.l.s4 1966171168
  %v210 = vunpack.c.0.s8 %v209
  %v211 = vlaneseq
  %v212 = vshrl.u32 %v211, 7
  %v213 = vsub.s32 %v210, %v212
  %v214 = vrot.slane %v207, %v213
  %v216 = vlaneseq
  %vm217 = vcmp.ge.s32.totalorder %v216, 0
  %vm218 = vcmp.lt.s32.totalorder %v216, 256
  %vm219 = vmand %vm217, %vm218
  %220 = vst.msk [vmem:[%s3] sm:$0x3] %vm219, %v214
  %v221 = vmul.f32 %v150, %v150
  %v222 = vmul.f32 %v152, %v152
  %v223 = vmul.f32 %v156, %v156
  %v224 = vmul.f32 %v158, %v158
  %v225 = vmul.f32 %v162, %v162
  %v226 = vmul.f32 %v164, %v164
  %v227 = vmul.f32 %v168, %v168
  %v228 = vmul.f32 %v170, %v170
  %v229 = vadd.f32 %v221, %v223
  %v230 = vadd.f32 %v229, %v225
  %v231 = vadd.f32 %v230, %v227
  %v232 = vrot.slane %v231, 4
  %v233 = vadd.f32 %v231, %v232
  %v234 = vrot.slane %v233, 2
  %v235 = vadd.f32 %v233, %v234
  %v236 = vrot.slane %v235, 1
  %v237 = vadd.f32 %v235, %v236
  %v238 = vadd.f32 %v222, %v224
  %v239 = vadd.f32 %v238, %v226
  %v240 = vadd.f32 %v239, %v228
  %v241 = vrot.slane %v240, 4
  %v242 = vadd.f32 %v240, %v241
  %v243 = vrot.slane %v242, 2
  %v244 = vadd.f32 %v242, %v243
  %v245 = vrot.slane %v244, 1
  %v246 = vadd.f32 %v244, %v245
  %v249 = vcombine.low %v237, %v246
  %v251 = vunpack.c.l.s4 1966171168
  %v252 = vunpack.c.0.s8 %v251
  %v253 = vlaneseq
  %v254 = vshrl.u32 %v253, 7
  %v255 = vsub.s32 %v252, %v254
  %v256 = vrot.slane %v249, %v255
  %v258 = vunpack.c.l.s4 1966171168
  %v259 = vunpack.c.0.s8 %v258
  %v260 = vlaneseq
  %v261 = vshrl.u32 %v260, 7
  %v262 = vsub.s32 %v259, %v261
  %v263 = vrot.slane %v256, %v262
  %265 = vst.msk [vmem:[%s4] sm:$0x3] %vm219, %v263
  // Predicated region
  $region10: #{g_enc_forward.13} parent=0 // pred_check
    _
  $region11: #{g_enc_forward.13} parent=0 // pred_check_branch
    %267 = sbr.rel (0) target = $region13
  $region12: #{g_enc_forward.13} parent=0 // pred_region
    _
  $region13: #{g_enc_forward.13} parent=0 // pred_fallthru
    _
  // Predicated region
  $region14: #{g_enc_forward.13} parent=0 // pred_check
    _
  $region15: #{g_enc_forward.13} parent=0 // pred_check_branch
    %269 = sbr.rel (0) target = $region17
  $region16: #{g_enc_forward.13} parent=0 // pred_region
    _
  $region17: #{g_enc_forward.13} parent=0 // pred_fallthru
    _
  // Predicated region
  $region18: #{g_enc_forward.13} parent=0 // pred_check
    _
  $region19: #{g_enc_forward.13} parent=0 // pred_check_branch
    %271 = sbr.rel (0) target = $region21
  $region20: #{g_enc_forward.13} parent=0 // pred_region
    _
  $region21: #{g_enc_forward.13} parent=0 // pred_fallthru
    _
  // Predicated region
  $region22: #{g_enc_forward.13} parent=0 // pred_check
    _
  $region23: #{g_enc_forward.13} parent=0 // pred_check_branch
    %273 = sbr.rel (0) target = $region25
  $region24: #{g_enc_forward.13} parent=0 // pred_region
    _
  $region25: #{g_enc_forward.13} parent=0 // pred_fallthru
    _
  // Predicated region
  $region26: #{g_enc_forward.13} parent=0 // pred_check
    _
  $region27: #{g_enc_forward.13} parent=0 // pred_check_branch
    %275 = sbr.rel (0) target = $region29
  $region28: #{g_enc_forward.13} parent=0 // pred_region
    _
  $region29: #{g_enc_forward.13} parent=0 // pred_fallthru
    _
  // Predicated region
  $region30: #{g_enc_forward.13} parent=0 // pred_check
    _
  $region31: #{g_enc_forward.13} parent=0 // pred_check_branch
    %277 = sbr.rel (0) target = $region33
  $region32: #{g_enc_forward.13} parent=0 // pred_region
    _
  $region33: #{g_enc_forward.13} parent=0 // pred_fallthru
    _

// kernel: g_enc_forward.15
$region0: #{g_enc_forward.15}
  #allocation0 [shape = 'u32[]', space=smem, size = 0x4, offset = 0x4, fixed_abs, tag = 'smem constant byte address 0x4 - core index']
  #allocation1 [shape = 'u32[144,128]{1,0:T(1,128)}', space=vmem, size = 0x12000, scoped, tag = 'internal scratch']
  %s0 = inlined_call_operand.vmem [shape: f32[16,256], index: 0, kind: input, shape index: {}]
  %s1 = inlined_call_operand.vmem [shape: f32[256,96], index: 1, kind: input, shape index: {}]
  %s2 = inlined_call_operand.vmem [shape: f32[1,96], index: 2, kind: input, shape index: {}]
  %s3 = inlined_call_operand.vmem [shape: f32[16,96], index: 3, kind: output, shape index: {}]
  %s4 = sld [smem:[#allocation0]]
  $region22: #{g_enc_forward.15} parent=0
    _
  %s6 = ssub.s32 1, %s4
  %s7 = scalar_select 0, %s6, %s4
  // Predicated region
  $region2: #{g_enc_forward.15} parent=0 // pred_check
    _
  $region3: #{g_enc_forward.15} parent=0 // pred_check_branch
    %9 = sbr.rel (0) target = $region5
  $region4: #{g_enc_forward.15} parent=0 // pred_region
    _
  $region5: #{g_enc_forward.15} parent=0 // pred_fallthru
    _
  // Predicated region
  $region6: #{g_enc_forward.15} parent=0 // pred_check
    _
  $region7: #{g_enc_forward.15} parent=0 // pred_check_branch
    %11 = sbr.rel (0) target = $region9
  $region8: #{g_enc_forward.15} parent=0 // pred_region
    _
  $region9: #{g_enc_forward.15} parent=0 // pred_fallthru
    _
  // Predicated region
  $region10: #{g_enc_forward.15} parent=0 // pred_check
    _
  $region11: #{g_enc_forward.15} parent=0 // pred_check_branch
    %13 = sbr.rel (0) target = $region13
  $region12: #{g_enc_forward.15} parent=0 // pred_region
    _
  $region13: #{g_enc_forward.15} parent=0 // pred_fallthru
    _
  %v14 = vld [vmem:[%s0] sm:$0xff]
  %v15 = vld [vmem:[%s0 + $0x8] sm:$0xff]
  %v16 = vld [vmem:[%s0 + $0x10] sm:$0xff]
  %v17 = vld [vmem:[%s0 + $0x18] sm:$0xff]
  %v18 = vld [vmem:[%s1] sm:$0xff]
  %v19 = vld [vmem:[%s1 + $0x8] sm:$0xff]
  %v20 = vld [vmem:[%s1 + $0x10] sm:$0xff]
  %v21 = vld [vmem:[%s1 + $0x18] sm:$0xff]
  %v22 = vld [vmem:[%s1 + $0x20] sm:$0xff]
  %v23 = vld [vmem:[%s1 + $0x28] sm:$0xff]
  %v24 = vld [vmem:[%s1 + $0x30] sm:$0xff]
  %v25 = vld [vmem:[%s1 + $0x38] sm:$0xff]
  %v26 = vld [vmem:[%s1 + $0x40] sm:$0xff]
  %v27 = vld [vmem:[%s1 + $0x48] sm:$0xff]
  %v28 = vld [vmem:[%s1 + $0x50] sm:$0xff]
  %v29 = vld [vmem:[%s1 + $0x58] sm:$0xff]
  %v30 = vld [vmem:[%s1 + $0x60] sm:$0xff]
  %v31 = vld [vmem:[%s1 + $0x68] sm:$0xff]
  %v32 = vld [vmem:[%s1 + $0x70] sm:$0xff]
  %v33 = vld [vmem:[%s1 + $0x78] sm:$0xff]
  %v34 = vld [vmem:[%s1 + $0x80] sm:$0xff]
  %v35 = vld [vmem:[%s1 + $0x88] sm:$0xff]
  %v36 = vld [vmem:[%s1 + $0x90] sm:$0xff]
  %v37 = vld [vmem:[%s1 + $0x98] sm:$0xff]
  %v38 = vld [vmem:[%s1 + $0xa0] sm:$0xff]
  %v39 = vld [vmem:[%s1 + $0xa8] sm:$0xff]
  %v40 = vld [vmem:[%s1 + $0xb0] sm:$0xff]
  %v41 = vld [vmem:[%s1 + $0xb8] sm:$0xff]
  %v42 = vld [vmem:[%s1 + $0xc0] sm:$0xff]
  %v43 = vld [vmem:[%s1 + $0xc8] sm:$0xff]
  %v44 = vld [vmem:[%s1 + $0xd0] sm:$0xff]
  %v45 = vld [vmem:[%s1 + $0xd8] sm:$0xff]
  %v46 = vld [vmem:[%s1 + $0xe0] sm:$0xff]
  %v47 = vld [vmem:[%s1 + $0xe8] sm:$0xff]
  %v48 = vld [vmem:[%s1 + $0xf0] sm:$0xff]
  %v49 = vld [vmem:[%s1 + $0xf8] sm:$0xff]
  %v50 = vld [vmem:[%s2] sm:$0x1]
  %v52 = vlaneseq
  %v53 = vshrl.u32 %v52, 7
  %v54 = vsub.s32 0, %v53
  %v55 = vrot.slane %v50, %v54
  %57 = vmatprep.subr.mxu0 0.0
  %58 = vmatpush1.msra.mxu0 %v18
  %59 = vmatprep.subr.mxu0 0.0
  %60 = vmatpush1.msra.mxu0 %v19
  %61 = vmatprep.subr.mxu0 0.0
  %62 = vmatpush1.msra.mxu0 %v20
  %63 = vmatprep.subr.mxu0 0.0
  %64 = vmatpush1.msra.mxu0 %v21
  %65 = vmatprep.subr.mxu0 0.0
  %66 = vmatpush1.msra.mxu0 %v22
  %67 = vmatprep.subr.mxu0 0.0
  %68 = vmatpush1.msra.mxu0 %v23
  %69 = vmatprep.subr.mxu0 0.0
  %70 = vmatpush1.msra.mxu0 %v24
  %71 = vmatprep.subr.mxu0 0.0
  %72 = vmatpush1.msra.mxu0 %v25
  %73 = vmatprep.subr.mxu0 0.0
  %74 = vmatpush1.msra.mxu0 %v26
  %75 = vmatprep.subr.mxu0 0.0
  %76 = vmatpush1.msra.mxu0 %v27
  %77 = vmatprep.subr.mxu0 0.0
  %78 = vmatpush1.msra.mxu0 %v28
  %79 = vmatprep.subr.mxu0 0.0
  %80 = vmatpush1.msra.mxu0 %v29
  %81 = vmatprep.subr.mxu0 0.0
  %82 = vmatpush1.msra.mxu0 %v30
  %83 = vmatprep.subr.mxu0 0.0
  %84 = vmatpush1.msra.mxu0 %v31
  %85 = vmatprep.subr.mxu0 0.0
  %86 = vmatpush1.msra.mxu0 %v32
  %87 = vmatprep.subr.mxu0 0.0
  %88 = vmatpush1.msra.mxu0 %v33
  %89 = vmatprep.subr.mxu0 0.0
  %90 = vmatpush1.msra.mxu0 %v34
  %91 = vmatprep.subr.mxu0 0.0
  %92 = vmatpush1.msra.mxu0 %v35
  %93 = vmatprep.subr.mxu0 0.0
  %94 = vmatpush1.msra.mxu0 %v36
  %95 = vmatprep.subr.mxu0 0.0
  %96 = vmatpush1.msra.mxu0 %v37
  %97 = vmatprep.subr.mxu0 0.0
  %98 = vmatpush1.msra.mxu0 %v38
  %99 = vmatprep.subr.mxu0 0.0
  %100 = vmatpush1.msra.mxu0 %v39
  %101 = vmatprep.subr.mxu0 0.0
  %102 = vmatpush1.msra.mxu0 %v40
  %103 = vmatprep.subr.mxu0 0.0
  %104 = vmatpush1.msra.mxu0 %v41
  %105 = vmatprep.subr.mxu0 0.0
  %106 = vmatpush1.msra.mxu0 %v42
  %107 = vmatprep.subr.mxu0 0.0
  %108 = vmatpush1.msra.mxu0 %v43
  %109 = vmatprep.subr.mxu0 0.0
  %110 = vmatpush1.msra.mxu0 %v44
  %111 = vmatprep.subr.mxu0 0.0
  %112 = vmatpush1.msra.mxu0 %v45
  %113 = vmatprep.subr.mxu0 0.0
  %114 = vmatpush1.msra.mxu0 %v46
  %115 = vmatprep.subr.mxu0 0.0
  %116 = vmatpush1.msra.mxu0 %v47
  %117 = vmatprep.subr.mxu0 0.0
  %118 = vmatpush1.msra.mxu0 %v48
  %119 = vmatprep.subr.mxu0 0.0
  %120 = vmatpush1.msra.mxu0 %v49
  %121 = vmatprep.mubr.f32.mxu0 %v15
  %122 = vmatmul.mubr.f32.gmra.mrb[0].mxu0 %v14
  %v123 = vpop.f32.mrb[0].mxu0
  %v124 = vadd.f32 %v55, %v123
  %v125 = vpop.f32.mrb[0].mxu0
  %126 = vmatprep.mubr.f32.mxu0 %v17
  %127 = vmatmul.mubr.f32.gmra.mrb[0].mxu0 %v16
  %v128 = vpop.f32.mrb[0].mxu0
  %v129 = vadd.f32 %v55, %v128
  %v130 = vpop.f32.mrb[0].mxu0
  %131 = vdwg.mxu0
  %vm132 = vcmask 785408
  %133 = vst.msk [vmem:[%s3] sm:$0xff] %vm132, %v124
  %134 = vst.msk [vmem:[%s3 + $0x8] sm:$0xff] %vm132, %v129
  // Predicated region
  $region14: #{g_enc_forward.15} parent=0 // pred_check
    _
  $region15: #{g_enc_forward.15} parent=0 // pred_check_branch
    %136 = sbr.rel (0) target = $region17
  $region16: #{g_enc_forward.15} parent=0 // pred_region
    _
  $region17: #{g_enc_forward.15} parent=0 // pred_fallthru
    _
  // Predicated region
  $region18: #{g_enc_forward.15} parent=0 // pred_check
    _
  $region19: #{g_enc_forward.15} parent=0 // pred_check_branch
    %138 = sbr.rel (0) target = $region21
  $region20: #{g_enc_forward.15} parent=0 // pred_region
    _
  $region21: #{g_enc_forward.15} parent=0 // pred_fallthru
    _

// kernel: g_enc_forward.16
$region0: #{g_enc_forward.16}
  #allocation0 [shape = 'u32[]', space=smem, size = 0x4, offset = 0x4, fixed_abs, tag = 'smem constant byte address 0x4 - core index']
  #allocation1 [shape = 'u32[144,128]{1,0:T(1,128)}', space=vmem, size = 0x12000, scoped, tag = 'internal scratch']
  #allocation2 [shape = 's32[1]{0:T(128)S(6)}', space=smem, size = 0x200, scoped, tag = 'scoped memory for g_enc_forward.16']
  %s0 = inlined_call_operand.<no memory space> [shape: s32[1], index: 0, kind: input, shape index: {}]
  %s1 = inlined_call_operand.vmem [shape: f32[8,2,32], index: 1, kind: input, shape index: {}]
  %s2 = inlined_call_operand.vmem [shape: f32[8,2,32], index: 2, kind: input, shape index: {}]
  %s3 = inlined_call_operand.vmem [shape: f32[8,2,32], index: 3, kind: input, shape index: {}]
  %s4 = inlined_call_operand.vmem [shape: f32[3,32,32], index: 4, kind: input, shape index: {}]
  %s5 = inlined_call_operand.vmem [shape: f32[3,1,32], index: 5, kind: input, shape index: {}]
  %s6 = inlined_call_operand.vmem [shape: f32[2,32], index: 6, kind: input, shape index: {}]
  %s7 = inlined_call_operand.vmem [shape: f32[2,32], index: 7, kind: output, shape index: {}]
  %s8 = sld [smem:[#allocation0]]
  $region45: #{g_enc_forward.16} parent=0
    _
  %s10 = ssub.s32 1, %s8
  %s11 = scalar_select 0, %s10, %s8
  %12 = sst [smem:[#allocation2]] %s0
  // Predicated region
  $region2: #{g_enc_forward.16} parent=0 // pred_check
    _
  $region3: #{g_enc_forward.16} parent=0 // pred_check_branch
    %14 = sbr.rel (0) target = $region5
  $region4: #{g_enc_forward.16} parent=0 // pred_region
    _
  $region5: #{g_enc_forward.16} parent=0 // pred_fallthru
    _
  // Predicated region
  $region6: #{g_enc_forward.16} parent=0 // pred_check
    _
  $region7: #{g_enc_forward.16} parent=0 // pred_check_branch
    %16 = sbr.rel (0) target = $region9
  $region8: #{g_enc_forward.16} parent=0 // pred_region
    _
  $region9: #{g_enc_forward.16} parent=0 // pred_fallthru
    _
  // Predicated region
  $region10: #{g_enc_forward.16} parent=0 // pred_check
    _
  $region11: #{g_enc_forward.16} parent=0 // pred_check_branch
    %18 = sbr.rel (0) target = $region13
  $region12: #{g_enc_forward.16} parent=0 // pred_region
    _
  $region13: #{g_enc_forward.16} parent=0 // pred_fallthru
    _
  // Predicated region
  $region14: #{g_enc_forward.16} parent=0 // pred_check
    _
  $region15: #{g_enc_forward.16} parent=0 // pred_check_branch
    %20 = sbr.rel (0) target = $region17
  $region16: #{g_enc_forward.16} parent=0 // pred_region
    _
  $region17: #{g_enc_forward.16} parent=0 // pred_fallthru
    _
  // Predicated region
  $region18: #{g_enc_forward.16} parent=0 // pred_check
    _
  $region19: #{g_enc_forward.16} parent=0 // pred_check_branch
    %22 = sbr.rel (0) target = $region21
  $region20: #{g_enc_forward.16} parent=0 // pred_region
    _
  $region21: #{g_enc_forward.16} parent=0 // pred_fallthru
    _
  // Predicated region
  $region22: #{g_enc_forward.16} parent=0 // pred_check
    _
  $region23: #{g_enc_forward.16} parent=0 // pred_check_branch
    %24 = sbr.rel (0) target = $region25
  $region24: #{g_enc_forward.16} parent=0 // pred_region
    _
  $region25: #{g_enc_forward.16} parent=0 // pred_fallthru
    _
  // Predicated region
  $region26: #{g_enc_forward.16} parent=0 // pred_check
    _
  $region27: #{g_enc_forward.16} parent=0 // pred_check_branch
    %26 = sbr.rel (0) target = $region29
  $region28: #{g_enc_forward.16} parent=0 // pred_region
    _
  $region29: #{g_enc_forward.16} parent=0 // pred_fallthru
    _
  %s27 = sld [smem:[#allocation2]]
  %s28 = sadd.s32 %s27, 1
  %v29 = vld [vmem:[%s6] sm:$0x3]
  // While loop
  $region30: #{g_enc_forward.16} parent=0 // loop_pre_header
    _
  $region31: #{g_enc_forward.16} parent=0 // loop_header
    %s31 = sphi 0, %s33
    %p32 = scmp.ge.s32.totalorder %s31, %s28
    %v36 = vphi %v29, %v315
  $region32: #{g_enc_forward.16} parent=0 // loop_header_branch
    %35 = sbr.rel (%p32) target = $region36
  $region33: #{g_enc_forward.16} parent=0 // loop_body
    %v37 = vld [vmem:[%s4] sm:$0xff]
    %v38 = vld [vmem:[%s4 + $0x8] sm:$0xff]
    %v39 = vld [vmem:[%s4 + $0x10] sm:$0xff]
    %v40 = vld [vmem:[%s4 + $0x18] sm:$0xff]
    %v41 = vld [vmem:[%s5] sm:$0x1]
    %v43 = vlaneseq
    %v44 = vshrl.u32 %v43, 7
    %v45 = vsub.s32 0, %v44
    %v46 = vrot.slane %v41, %v45
    %vm48 = vcmask 261120
    %v50 = vsel %vm48, %v36, 0
    %52 = vmatprep.subr.mxu0 0.0
    %53 = vmatpush1.msra.mxu0 %v37
    %54 = vmatprep.subr.mxu0 0.0
    %55 = vmatpush1.msra.mxu0 %v38
    %56 = vmatprep.subr.mxu0 0.0
    %57 = vmatpush1.msra.mxu0 %v39
    %58 = vmatprep.subr.mxu0 0.0
    %59 = vmatpush1.msra.mxu0 %v40
    %60 = vmatprep.subr.mxu0 0.0
    %61 = vmatpush1.msra.mxu0 0.0
    %62 = vmatprep.subr.mxu0 0.0
    %63 = vmatpush1.msra.mxu0 0.0
    %64 = vmatprep.subr.mxu0 0.0
    %65 = vmatpush1.msra.mxu0 0.0
    %66 = vmatprep.subr.mxu0 0.0
    %67 = vmatpush1.msra.mxu0 0.0
    %68 = vmatprep.subr.mxu0 0.0
    %69 = vmatpush1.msra.mxu0 0.0
    %70 = vmatprep.subr.mxu0 0.0
    %71 = vmatpush1.msra.mxu0 0.0
    %72 = vmatprep.subr.mxu0 0.0
    %73 = vmatpush1.msra.mxu0 0.0
    %74 = vmatprep.subr.mxu0 0.0
    %75 = vmatpush1.msra.mxu0 0.0
    %76 = vmatprep.subr.mxu0 0.0
    %77 = vmatpush1.msra.mxu0 0.0
    %78 = vmatprep.subr.mxu0 0.0
    %79 = vmatpush1.msra.mxu0 0.0
    %80 = vmatprep.subr.mxu0 0.0
    %81 = vmatpush1.msra.mxu0 0.0
    %82 = vmatprep.subr.mxu0 0.0
    %83 = vmatpush1.msra.mxu0 0.0
    %84 = vmatprep.subr.mxu0 0.0
    %85 = vmatpush1.msra.mxu0 0.0
    %86 = vmatprep.subr.mxu0 0.0
    %87 = vmatpush1.msra.mxu0 0.0
    %88 = vmatprep.subr.mxu0 0.0
    %89 = vmatpush1.msra.mxu0 0.0
    %90 = vmatprep.subr.mxu0 0.0
    %91 = vmatpush1.msra.mxu0 0.0
    %92 = vmatprep.subr.mxu0 0.0
    %93 = vmatpush1.msra.mxu0 0.0
    %94 = vmatprep.subr.mxu0 0.0
    %95 = vmatpush1.msra.mxu0 0.0
    %96 = vmatprep.subr.mxu0 0.0
    %97 = vmatpush1.msra.mxu0 0.0
    %98 = vmatprep.subr.mxu0 0.0
    %99 = vmatpush1.msra.mxu0 0.0
    %100 = vmatprep.subr.mxu0 0.0
    %101 = vmatpush1.msra.mxu0 0.0
    %102 = vmatprep.subr.mxu0 0.0
    %103 = vmatpush1.msra.mxu0 0.0
    %104 = vmatprep.subr.mxu0 0.0
    %105 = vmatpush1.msra.mxu0 0.0
    %106 = vmatprep.subr.mxu0 0.0
    %107 = vmatpush1.msra.mxu0 0.0
    %108 = vmatprep.subr.mxu0 0.0
    %109 = vmatpush1.msra.mxu0 0.0
    %110 = vmatprep.subr.mxu0 0.0
    %111 = vmatpush1.msra.mxu0 0.0
    %112 = vmatprep.subr.mxu0 0.0
    %113 = vmatpush1.msra.mxu0 0.0
    %114 = vmatprep.subr.mxu0 0.0
    %115 = vmatpush1.msra.mxu0 0.0
    %116 = vmatprep.mubr.f32.mxu0 0.0
    %117 = vmatmul.mubr.f32.gmra.mrb[0].mxu0 %v50
    %v118 = vpop.f32.mrb[0].mxu0
    %v119 = vadd.f32 %v46, %v118
    %v120 = vpop.f32.mrb[0].mxu0
    %121 = vdwg.mxu0
    %s122 = scalar_lea.vmem %s4, 32
    %v123 = vld [vmem:[%s122] sm:$0xff]
    %v124 = vld [vmem:[%s122 + $0x8] sm:$0xff]
    %v125 = vld [vmem:[%s122 + $0x10] sm:$0xff]
    %v126 = vld [vmem:[%s122 + $0x18] sm:$0xff]
    %s127 = scalar_lea.vmem %s5, 1
    %v128 = vld [vmem:[%s127] sm:$0x1]
    %v130 = vlaneseq
    %v131 = vshrl.u32 %v130, 7
    %v132 = vsub.s32 0, %v131
    %v133 = vrot.slane %v128, %v132
    %135 = vmatprep.subr.mxu0 0.0
    %136 = vmatpush1.msra.mxu0 %v123
    %137 = vmatprep.subr.mxu0 0.0
    %138 = vmatpush1.msra.mxu0 %v124
    %139 = vmatprep.subr.mxu0 0.0
    %140 = vmatpush1.msra.mxu0 %v125
    %141 = vmatprep.subr.mxu0 0.0
    %142 = vmatpush1.msra.mxu0 %v126
    %143 = vmatprep.subr.mxu0 0.0
    %144 = vmatpush1.msra.mxu0 0.0
    %145 = vmatprep.subr.mxu0 0.0
    %146 = vmatpush1.msra.mxu0 0.0
    %147 = vmatprep.subr.mxu0 0.0
    %148 = vmatpush1.msra.mxu0 0.0
    %149 = vmatprep.subr.mxu0 0.0
    %150 = vmatpush1.msra.mxu0 0.0
    %151 = vmatprep.subr.mxu0 0.0
    %152 = vmatpush1.msra.mxu0 0.0
    %153 = vmatprep.subr.mxu0 0.0
    %154 = vmatpush1.msra.mxu0 0.0
    %155 = vmatprep.subr.mxu0 0.0
    %156 = vmatpush1.msra.mxu0 0.0
    %157 = vmatprep.subr.mxu0 0.0
    %158 = vmatpush1.msra.mxu0 0.0
    %159 = vmatprep.subr.mxu0 0.0
    %160 = vmatpush1.msra.mxu0 0.0
    %161 = vmatprep.subr.mxu0 0.0
    %162 = vmatpush1.msra.mxu0 0.0
    %163 = vmatprep.subr.mxu0 0.0
    %164 = vmatpush1.msra.mxu0 0.0
    %165 = vmatprep.subr.mxu0 0.0
    %166 = vmatpush1.msra.mxu0 0.0
    %167 = vmatprep.subr.mxu0 0.0
    %168 = vmatpush1.msra.mxu0 0.0
    %169 = vmatprep.subr.mxu0 0.0
    %170 = vmatpush1.msra.mxu0 0.0
    %171 = vmatprep.subr.mxu0 0.0
    %172 = vmatpush1.msra.mxu0 0.0
    %173 = vmatprep.subr.mxu0 0.0
    %174 = vmatpush1.msra.mxu0 0.0
    %175 = vmatprep.subr.mxu0 0.0
    %176 = vmatpush1.msra.mxu0 0.0
    %177 = vmatprep.subr.mxu0 0.0
    %178 = vmatpush1.msra.mxu0 0.0
    %179 = vmatprep.subr.mxu0 0.0
    %180 = vmatpush1.msra.mxu0 0.0
    %181 = vmatprep.subr.mxu0 0.0
    %182 = vmatpush1.msra.mxu0 0.0
    %183 = vmatprep.subr.mxu0 0.0
    %184 = vmatpush1.msra.mxu0 0.0
    %185 = vmatprep.subr.mxu0 0.0
    %186 = vmatpush1.msra.mxu0 0.0
    %187 = vmatprep.subr.mxu0 0.0
    %188 = vmatpush1.msra.mxu0 0.0
    %189 = vmatprep.subr.mxu0 0.0
    %190 = vmatpush1.msra.mxu0 0.0
    %191 = vmatprep.subr.mxu0 0.0
    %192 = vmatpush1.msra.mxu0 0.0
    %193 = vmatprep.subr.mxu0 0.0
    %194 = vmatpush1.msra.mxu0 0.0
    %195 = vmatprep.subr.mxu0 0.0
    %196 = vmatpush1.msra.mxu0 0.0
    %197 = vmatprep.subr.mxu0 0.0
    %198 = vmatpush1.msra.mxu0 0.0
    %199 = vmatprep.mubr.f32.mxu0 0.0
    %200 = vmatmul.mubr.f32.gmra.mrb[0].mxu0 %v50
    %v201 = vpop.f32.mrb[0].mxu0
    %v202 = vadd.f32 %v133, %v201
    %v203 = vpop.f32.mrb[0].mxu0
    %204 = vdwg.mxu0
    %s205 = scalar_lea.vmem %s4, 64
    %v206 = vld [vmem:[%s205] sm:$0xff]
    %v207 = vld [vmem:[%s205 + $0x8] sm:$0xff]
    %v208 = vld [vmem:[%s205 + $0x10] sm:$0xff]
    %v209 = vld [vmem:[%s205 + $0x18] sm:$0xff]
    %s210 = scalar_lea.vmem %s5, 2
    %v211 = vld [vmem:[%s210] sm:$0x1]
    %v213 = vlaneseq
    %v214 = vshrl.u32 %v213, 7
    %v215 = vsub.s32 0, %v214
    %v216 = vrot.slane %v211, %v215
    %218 = vmatprep.subr.mxu0 0.0
    %219 = vmatpush1.msra.mxu0 %v206
    %220 = vmatprep.subr.mxu0 0.0
    %221 = vmatpush1.msra.mxu0 %v207
    %222 = vmatprep.subr.mxu0 0.0
    %223 = vmatpush1.msra.mxu0 %v208
    %224 = vmatprep.subr.mxu0 0.0
    %225 = vmatpush1.msra.mxu0 %v209
    %226 = vmatprep.subr.mxu0 0.0
    %227 = vmatpush1.msra.mxu0 0.0
    %228 = vmatprep.subr.mxu0 0.0
    %229 = vmatpush1.msra.mxu0 0.0
    %230 = vmatprep.subr.mxu0 0.0
    %231 = vmatpush1.msra.mxu0 0.0
    %232 = vmatprep.subr.mxu0 0.0
    %233 = vmatpush1.msra.mxu0 0.0
    %234 = vmatprep.subr.mxu0 0.0
    %235 = vmatpush1.msra.mxu0 0.0
    %236 = vmatprep.subr.mxu0 0.0
    %237 = vmatpush1.msra.mxu0 0.0
    %238 = vmatprep.subr.mxu0 0.0
    %239 = vmatpush1.msra.mxu0 0.0
    %240 = vmatprep.subr.mxu0 0.0
    %241 = vmatpush1.msra.mxu0 0.0
    %242 = vmatprep.subr.mxu0 0.0
    %243 = vmatpush1.msra.mxu0 0.0
    %244 = vmatprep.subr.mxu0 0.0
    %245 = vmatpush1.msra.mxu0 0.0
    %246 = vmatprep.subr.mxu0 0.0
    %247 = vmatpush1.msra.mxu0 0.0
    %248 = vmatprep.subr.mxu0 0.0
    %249 = vmatpush1.msra.mxu0 0.0
    %250 = vmatprep.subr.mxu0 0.0
    %251 = vmatpush1.msra.mxu0 0.0
    %252 = vmatprep.subr.mxu0 0.0
    %253 = vmatpush1.msra.mxu0 0.0
    %254 = vmatprep.subr.mxu0 0.0
    %255 = vmatpush1.msra.mxu0 0.0
    %256 = vmatprep.subr.mxu0 0.0
    %257 = vmatpush1.msra.mxu0 0.0
    %258 = vmatprep.subr.mxu0 0.0
    %259 = vmatpush1.msra.mxu0 0.0
    %260 = vmatprep.subr.mxu0 0.0
    %261 = vmatpush1.msra.mxu0 0.0
    %262 = vmatprep.subr.mxu0 0.0
    %263 = vmatpush1.msra.mxu0 0.0
    %264 = vmatprep.subr.mxu0 0.0
    %265 = vmatpush1.msra.mxu0 0.0
    %266 = vmatprep.subr.mxu0 0.0
    %267 = vmatpush1.msra.mxu0 0.0
    %268 = vmatprep.subr.mxu0 0.0
    %269 = vmatpush1.msra.mxu0 0.0
    %270 = vmatprep.subr.mxu0 0.0
    %271 = vmatpush1.msra.mxu0 0.0
    %272 = vmatprep.subr.mxu0 0.0
    %273 = vmatpush1.msra.mxu0 0.0
    %274 = vmatprep.subr.mxu0 0.0
    %275 = vmatpush1.msra.mxu0 0.0
    %276 = vmatprep.subr.mxu0 0.0
    %277 = vmatpush1.msra.mxu0 0.0
    %278 = vmatprep.subr.mxu0 0.0
    %279 = vmatpush1.msra.mxu0 0.0
    %280 = vmatprep.subr.mxu0 0.0
    %281 = vmatpush1.msra.mxu0 0.0
    %282 = vmatprep.mubr.f32.mxu0 0.0
    %283 = vmatmul.mubr.f32.gmra.mrb[0].mxu0 %v50
    %v284 = vpop.f32.mrb[0].mxu0
    %v285 = vadd.f32 %v216, %v284
    %v286 = vpop.f32.mrb[0].mxu0
    %287 = vdwg.mxu0
    %s288 = smul.u32 %s31, 2
    %s289 = scalar_lea.vmem %s1, %s288
    %v290 = vld [vmem:[%s289] sm:$0x3]
    %v291 = vadd.f32 %v290, %v119
    %v292 = vxor.u32 %v291, 2147483648
    %v293 = vmul.f32 %v292, 1.442695
    %v294 = vpow.pop %v293
    %v295 = vadd.f32 %v294, 1.0
    %v296 = vrcp.pop %v295
    %v297 = vmul.f32 1.0, %v296
    %s298 = scalar_lea.vmem %s2, %s288
    %v299 = vld [vmem:[%s298] sm:$0x3]
    %v300 = vadd.f32 %v299, %v202
    %v301 = vxor.u32 %v300, 2147483648
    %v302 = vmul.f32 %v301, 1.442695
    %v303 = vpow.pop %v302
    %v304 = vadd.f32 %v303, 1.0
    %v305 = vrcp.pop %v304
    %v306 = vmul.f32 1.0, %v305
    %s307 = scalar_lea.vmem %s3, %s288
    %v308 = vld [vmem:[%s307] sm:$0x3]
    %v309 = vmul.f32 %v297, %v285
    %v310 = vadd.f32 %v308, %v309
    %v311 = vtanh.pop %v310
    %v312 = vsub.f32 1.0, %v306
    %v313 = vmul.f32 %v312, %v311
    %v314 = vmul.f32 %v306, %v36
    %v315 = vadd.f32 %v313, %v314
  $region34: #{g_enc_forward.16} parent=0 // loop_footer
    %s33 = sadd.s32 %s31, 1
  $region35: #{g_enc_forward.16} parent=0 // loop_footer_branch
    %30 = sbr.rel target = $region31
  $region36: #{g_enc_forward.16} parent=0 // loop_exit
    _
  %vm316 = vcmask 254976
  %317 = vst.msk [vmem:[%s7] sm:$0x3] %vm316, %v36
  // Predicated region
  $region37: #{g_enc_forward.16} parent=0 // pred_check
    _
  $region38: #{g_enc_forward.16} parent=0 // pred_check_branch
    %319 = sbr.rel (0) target = $region40
  $region39: #{g_enc_forward.16} parent=0 // pred_region
    _
  $region40: #{g_enc_forward.16} parent=0 // pred_fallthru
    _
  // Predicated region
  $region41: #{g_enc_forward.16} parent=0 // pred_check
    _
  $region42: #{g_enc_forward.16} parent=0 // pred_check_branch
    %321 = sbr.rel (0) target = $region44
  $region43: #{g_enc_forward.16} parent=0 // pred_region
    _
  $region44: #{g_enc_forward.16} parent=0 // pred_fallthru
    _

// kernel: g_enc_forward.17
$region0: #{g_enc_forward.17}
  #allocation0 [shape = 'u32[]', space=smem, size = 0x4, offset = 0x4, fixed_abs, tag = 'smem constant byte address 0x4 - core index']
  #allocation1 [shape = 'u32[144,128]{1,0:T(1,128)}', space=vmem, size = 0x12000, scoped, tag = 'internal scratch']
  %s0 = inlined_call_operand.vmem [shape: f32[3,2,256], index: 0, kind: input, shape index: {}]
  %s1 = inlined_call_operand.vmem [shape: f32[2,32], index: 1, kind: input, shape index: {}]
  %s2 = inlined_call_operand.vmem [shape: f32[32,768], index: 2, kind: input, shape index: {}]
  %s3 = inlined_call_operand.vmem [shape: f32[1,768], index: 3, kind: input, shape index: {}]
  %s4 = inlined_call_operand.hbm [shape: f32[1,1], index: 4, kind: output, shape index: {0}]
  %s5 = inlined_call_operand.vmem [shape: f32[1,3], index: 5, kind: output, shape index: {1}]
  %6 = xla_tuple %s4, %s5
  %s7 = sld [smem:[#allocation0]]
  $region34: #{g_enc_forward.17} parent=0
    _
  %s9 = ssub.s32 1, %s7
  %s10 = scalar_select 0, %s9, %s7
  $region1: #{g_enc_forward.17} parent=0
    #allocation2 [shape = 'u8[512]{0}', space=vmem, size = 0x400, scoped, tag = 'output window, operand 0, single buffered']
    #allocation3 [shape = 's32[1]{0}', space=sflag, size = 0x4, scoped, tag = 'scoped memory for g_enc_forward.17']
    %11 = vsyncpa [#allocation3], 0
    // Predicated region
    $region2: #{g_enc_forward.17} parent=1 // pred_check
      _
    $region3: #{g_enc_forward.17} parent=1 // pred_check_branch
      %13 = sbr.rel (0) target = $region5
    $region4: #{g_enc_forward.17} parent=1 // pred_region
      _
    $region5: #{g_enc_forward.17} parent=1 // pred_fallthru
      _
    // Predicated region
    $region6: #{g_enc_forward.17} parent=1 // pred_check
      _
    $region7: #{g_enc_forward.17} parent=1 // pred_check_branch
      %15 = sbr.rel (0) target = $region9
    $region8: #{g_enc_forward.17} parent=1 // pred_region
      _
    $region9: #{g_enc_forward.17} parent=1 // pred_fallthru
      _
    // Predicated region
    $region10: #{g_enc_forward.17} parent=1 // pred_check
      _
    $region11: #{g_enc_forward.17} parent=1 // pred_check_branch
      %17 = sbr.rel (0) target = $region13
    $region12: #{g_enc_forward.17} parent=1 // pred_region
      _
    $region13: #{g_enc_forward.17} parent=1 // pred_fallthru
      _
    // Predicated region
    $region14: #{g_enc_forward.17} parent=1 // pred_check
      _
    $region15: #{g_enc_forward.17} parent=1 // pred_check_branch
      %19 = sbr.rel (0) target = $region17
    $region16: #{g_enc_forward.17} parent=1 // pred_region
      _
    $region17: #{g_enc_forward.17} parent=1 // pred_fallthru
      _
    %v20 = vlaneseq
    %v21 = vshrl.u32 %v20, 7
    %v22 = vlaneseq
    %v23 = vand.u32 %v22, 127
    %vm24 = vcmp.eq.s32.totalorder %v21, %v23
    %v25 = vsel %vm24, 1, 0
    %v26 = vcvt.s32.f32 %v25
    %v27 = vld [vmem:[%s1] sm:$0x3]
    %v28 = vld [vmem:[%s2] sm:$0xff]
    %v29 = vld [vmem:[%s2 + $0x8] sm:$0xff]
    %v30 = vld [vmem:[%s2 + $0x10] sm:$0xff]
    %v31 = vld [vmem:[%s2 + $0x18] sm:$0xff]
    %v32 = vld [vmem:[%s2 + $0x20] sm:$0xff]
    %v33 = vld [vmem:[%s2 + $0x28] sm:$0xff]
    %v34 = vld [vmem:[%s2 + $0x30] sm:$0xff]
    %v35 = vld [vmem:[%s2 + $0x38] sm:$0xff]
    %v36 = vld [vmem:[%s2 + $0x40] sm:$0xff]
    %v37 = vld [vmem:[%s2 + $0x48] sm:$0xff]
    %v38 = vld [vmem:[%s2 + $0x50] sm:$0xff]
    %v39 = vld [vmem:[%s2 + $0x58] sm:$0xff]
    %v40 = vld [vmem:[%s2 + $0x60] sm:$0xff]
    %v41 = vld [vmem:[%s2 + $0x68] sm:$0xff]
    %v42 = vld [vmem:[%s2 + $0x70] sm:$0xff]
    %v43 = vld [vmem:[%s2 + $0x78] sm:$0xff]
    %v44 = vld [vmem:[%s2 + $0x80] sm:$0xff]
    %v45 = vld [vmem:[%s2 + $0x88] sm:$0xff]
    %v46 = vld [vmem:[%s2 + $0x90] sm:$0xff]
    %v47 = vld [vmem:[%s2 + $0x98] sm:$0xff]
    %v48 = vld [vmem:[%s2 + $0xa0] sm:$0xff]
    %v49 = vld [vmem:[%s2 + $0xa8] sm:$0xff]
    %v50 = vld [vmem:[%s2 + $0xb0] sm:$0xff]
    %v51 = vld [vmem:[%s2 + $0xb8] sm:$0xff]
    %v52 = vld [vmem:[%s3] sm:$0x3f]
    %v54 = vlaneseq
    %v55 = vshrl.u32 %v54, 7
    %v56 = vsub.s32 0, %v55
    %v57 = vrot.slane %v52, %v56
    %v58 = vlaneseq
    %v59 = vshrl.u32 %v58, 7
    %v60 = vsub.s32 1, %v59
    %v61 = vrot.slane %v52, %v60
    %v62 = vlaneseq
    %v63 = vshrl.u32 %v62, 7
    %v64 = vsub.s32 2, %v63
    %v65 = vrot.slane %v52, %v64
    %v66 = vlaneseq
    %v67 = vshrl.u32 %v66, 7
    %v68 = vsub.s32 3, %v67
    %v69 = vrot.slane %v52, %v68
    %v70 = vlaneseq
    %v71 = vshrl.u32 %v70, 7
    %v72 = vsub.s32 4, %v71
    %v73 = vrot.slane %v52, %v72
    %v74 = vlaneseq
    %v75 = vshrl.u32 %v74, 7
    %v76 = vsub.s32 5, %v75
    %v77 = vrot.slane %v52, %v76
    %vm84 = vcmask 261120
    %v86 = vsel %vm84, %v27, 0
    %88 = vmatprep.subr.mxu0 %v29
    %89 = vmatpush1.msra.mxu0 %v28
    %90 = vmatprep.subr.mxu0 %v35
    %91 = vmatpush1.msra.mxu0 %v34
    %92 = vmatprep.subr.mxu0 %v41
    %93 = vmatpush1.msra.mxu0 %v40
    %94 = vmatprep.subr.mxu0 %v47
    %95 = vmatpush1.msra.mxu0 %v46
    %96 = vmatprep.subr.mxu0 0.0
    %97 = vmatpush1.msra.mxu0 0.0
    %98 = vmatprep.subr.mxu0 0.0
    %99 = vmatpush1.msra.mxu0 0.0
    %100 = vmatprep.subr.mxu0 0.0
    %101 = vmatpush1.msra.mxu0 0.0
    %102 = vmatprep.subr.mxu0 0.0
    %103 = vmatpush1.msra.mxu0 0.0
    %104 = vmatprep.subr.mxu0 0.0
    %105 = vmatpush1.msra.mxu0 0.0
    %106 = vmatprep.subr.mxu0 0.0
    %107 = vmatpush1.msra.mxu0 0.0
    %108 = vmatprep.subr.mxu0 0.0
    %109 = vmatpush1.msra.mxu0 0.0
    %110 = vmatprep.subr.mxu0 0.0
    %111 = vmatpush1.msra.mxu0 0.0
    %112 = vmatprep.subr.mxu0 0.0
    %113 = vmatpush1.msra.mxu0 0.0
    %114 = vmatprep.subr.mxu0 0.0
    %115 = vmatpush1.msra.mxu0 0.0
    %116 = vmatprep.subr.mxu0 0.0
    %117 = vmatpush1.msra.mxu0 0.0
    %118 = vmatprep.subr.mxu0 0.0
    %119 = vmatpush1.msra.mxu0 0.0
    %120 = vmatprep.subr.mxu0 0.0
    %121 = vmatpush1.msra.mxu0 0.0
    %122 = vmatprep.subr.mxu0 0.0
    %123 = vmatpush1.msra.mxu0 0.0
    %124 = vmatprep.subr.mxu0 0.0
    %125 = vmatpush1.msra.mxu0 0.0
    %126 = vmatprep.subr.mxu0 0.0
    %127 = vmatpush1.msra.mxu0 0.0
    %128 = vmatprep.subr.mxu0 0.0
    %129 = vmatpush1.msra.mxu0 0.0
    %130 = vmatprep.subr.mxu0 0.0
    %131 = vmatpush1.msra.mxu0 0.0
    %132 = vmatprep.subr.mxu0 0.0
    %133 = vmatpush1.msra.mxu0 0.0
    %134 = vmatprep.subr.mxu0 0.0
    %135 = vmatpush1.msra.mxu0 0.0
    %136 = vmatprep.subr.mxu0 0.0
    %137 = vmatpush1.msra.mxu0 0.0
    %138 = vmatprep.subr.mxu0 0.0
    %139 = vmatpush1.msra.mxu0 0.0
    %140 = vmatprep.subr.mxu0 0.0
    %141 = vmatpush1.msra.mxu0 0.0
    %142 = vmatprep.subr.mxu0 0.0
    %143 = vmatpush1.msra.mxu0 0.0
    %144 = vmatprep.subr.mxu0 0.0
    %145 = vmatpush1.msra.mxu0 0.0
    %146 = vmatprep.subr.mxu0 0.0
    %147 = vmatpush1.msra.mxu0 0.0
    %148 = vmatprep.subr.mxu0 0.0
    %149 = vmatpush1.msra.mxu0 0.0
    %150 = vmatprep.subr.mxu0 0.0
    %151 = vmatpush1.msra.mxu0 0.0
    %152 = vmatprep.mubr.f32.mxu0 0.0
    %153 = vmatmul.mubr.f32.gmra.mrb[0].mxu0 %v86
    %v154 = vpop.f32.mrb[0].mxu0
    %v155 = vadd.f32 %v57, %v154
    %v156 = vpop.f32.mrb[0].mxu0
    %v157 = vadd.f32 %v61, %v156
    %158 = vdwg.mxu0
    %159 = vmatprep.subr.mxu0 %v31
    %160 = vmatpush1.msra.mxu0 %v30
    %161 = vmatprep.subr.mxu0 %v37
    %162 = vmatpush1.msra.mxu0 %v36
    %163 = vmatprep.subr.mxu0 %v43
    %164 = vmatpush1.msra.mxu0 %v42
    %165 = vmatprep.subr.mxu0 %v49
    %166 = vmatpush1.msra.mxu0 %v48
    %167 = vmatprep.subr.mxu0 0.0
    %168 = vmatpush1.msra.mxu0 0.0
    %169 = vmatprep.subr.mxu0 0.0
    %170 = vmatpush1.msra.mxu0 0.0
    %171 = vmatprep.subr.mxu0 0.0
    %172 = vmatpush1.msra.mxu0 0.0
    %173 = vmatprep.subr.mxu0 0.0
    %174 = vmatpush1.msra.mxu0 0.0
    %175 = vmatprep.subr.mxu0 0.0
    %176 = vmatpush1.msra.mxu0 0.0
    %177 = vmatprep.subr.mxu0 0.0
    %178 = vmatpush1.msra.mxu0 0.0
    %179 = vmatprep.subr.mxu0 0.0
    %180 = vmatpush1.msra.mxu0 0.0
    %181 = vmatprep.subr.mxu0 0.0
    %182 = vmatpush1.msra.mxu0 0.0
    %183 = vmatprep.subr.mxu0 0.0
    %184 = vmatpush1.msra.mxu0 0.0
    %185 = vmatprep.subr.mxu0 0.0
    %186 = vmatpush1.msra.mxu0 0.0
    %187 = vmatprep.subr.mxu0 0.0
    %188 = vmatpush1.msra.mxu0 0.0
    %189 = vmatprep.subr.mxu0 0.0
    %190 = vmatpush1.msra.mxu0 0.0
    %191 = vmatprep.subr.mxu0 0.0
    %192 = vmatpush1.msra.mxu0 0.0
    %193 = vmatprep.subr.mxu0 0.0
    %194 = vmatpush1.msra.mxu0 0.0
    %195 = vmatprep.subr.mxu0 0.0
    %196 = vmatpush1.msra.mxu0 0.0
    %197 = vmatprep.subr.mxu0 0.0
    %198 = vmatpush1.msra.mxu0 0.0
    %199 = vmatprep.subr.mxu0 0.0
    %200 = vmatpush1.msra.mxu0 0.0
    %201 = vmatprep.subr.mxu0 0.0
    %202 = vmatpush1.msra.mxu0 0.0
    %203 = vmatprep.subr.mxu0 0.0
    %204 = vmatpush1.msra.mxu0 0.0
    %205 = vmatprep.subr.mxu0 0.0
    %206 = vmatpush1.msra.mxu0 0.0
    %207 = vmatprep.subr.mxu0 0.0
    %208 = vmatpush1.msra.mxu0 0.0
    %209 = vmatprep.subr.mxu0 0.0
    %210 = vmatpush1.msra.mxu0 0.0
    %211 = vmatprep.subr.mxu0 0.0
    %212 = vmatpush1.msra.mxu0 0.0
    %213 = vmatprep.subr.mxu0 0.0
    %214 = vmatpush1.msra.mxu0 0.0
    %215 = vmatprep.subr.mxu0 0.0
    %216 = vmatpush1.msra.mxu0 0.0
    %217 = vmatprep.subr.mxu0 0.0
    %218 = vmatpush1.msra.mxu0 0.0
    %219 = vmatprep.subr.mxu0 0.0
    %220 = vmatpush1.msra.mxu0 0.0
    %221 = vmatprep.subr.mxu0 0.0
    %222 = vmatpush1.msra.mxu0 0.0
    %223 = vmatprep.mubr.f32.mxu0 0.0
    %224 = vmatmul.mubr.f32.gmra.mrb[0].mxu0 %v86
    %v225 = vpop.f32.mrb[0].mxu0
    %v226 = vadd.f32 %v65, %v225
    %v227 = vpop.f32.mrb[0].mxu0
    %v228 = vadd.f32 %v69, %v227
    %229 = vdwg.mxu0
    %230 = vmatprep.subr.mxu0 %v33
    %231 = vmatpush1.msra.mxu0 %v32
    %232 = vmatprep.subr.mxu0 %v39
    %233 = vmatpush1.msra.mxu0 %v38
    %234 = vmatprep.subr.mxu0 %v45
    %235 = vmatpush1.msra.mxu0 %v44
    %236 = vmatprep.subr.mxu0 %v51
    %237 = vmatpush1.msra.mxu0 %v50
    %238 = vmatprep.subr.mxu0 0.0
    %239 = vmatpush1.msra.mxu0 0.0
    %240 = vmatprep.subr.mxu0 0.0
    %241 = vmatpush1.msra.mxu0 0.0
    %242 = vmatprep.subr.mxu0 0.0
    %243 = vmatpush1.msra.mxu0 0.0
    %244 = vmatprep.subr.mxu0 0.0
    %245 = vmatpush1.msra.mxu0 0.0
    %246 = vmatprep.subr.mxu0 0.0
    %247 = vmatpush1.msra.mxu0 0.0
    %248 = vmatprep.subr.mxu0 0.0
    %249 = vmatpush1.msra.mxu0 0.0
    %250 = vmatprep.subr.mxu0 0.0
    %251 = vmatpush1.msra.mxu0 0.0
    %252 = vmatprep.subr.mxu0 0.0
    %253 = vmatpush1.msra.mxu0 0.0
    %254 = vmatprep.subr.mxu0 0.0
    %255 = vmatpush1.msra.mxu0 0.0
    %256 = vmatprep.subr.mxu0 0.0
    %257 = vmatpush1.msra.mxu0 0.0
    %258 = vmatprep.subr.mxu0 0.0
    %259 = vmatpush1.msra.mxu0 0.0
    %260 = vmatprep.subr.mxu0 0.0
    %261 = vmatpush1.msra.mxu0 0.0
    %262 = vmatprep.subr.mxu0 0.0
    %263 = vmatpush1.msra.mxu0 0.0
    %264 = vmatprep.subr.mxu0 0.0
    %265 = vmatpush1.msra.mxu0 0.0
    %266 = vmatprep.subr.mxu0 0.0
    %267 = vmatpush1.msra.mxu0 0.0
    %268 = vmatprep.subr.mxu0 0.0
    %269 = vmatpush1.msra.mxu0 0.0
    %270 = vmatprep.subr.mxu0 0.0
    %271 = vmatpush1.msra.mxu0 0.0
    %272 = vmatprep.subr.mxu0 0.0
    %273 = vmatpush1.msra.mxu0 0.0
    %274 = vmatprep.subr.mxu0 0.0
    %275 = vmatpush1.msra.mxu0 0.0
    %276 = vmatprep.subr.mxu0 0.0
    %277 = vmatpush1.msra.mxu0 0.0
    %278 = vmatprep.subr.mxu0 0.0
    %279 = vmatpush1.msra.mxu0 0.0
    %280 = vmatprep.subr.mxu0 0.0
    %281 = vmatpush1.msra.mxu0 0.0
    %282 = vmatprep.subr.mxu0 0.0
    %283 = vmatpush1.msra.mxu0 0.0
    %284 = vmatprep.subr.mxu0 0.0
    %285 = vmatpush1.msra.mxu0 0.0
    %286 = vmatprep.subr.mxu0 0.0
    %287 = vmatpush1.msra.mxu0 0.0
    %288 = vmatprep.subr.mxu0 0.0
    %289 = vmatpush1.msra.mxu0 0.0
    %290 = vmatprep.subr.mxu0 0.0
    %291 = vmatpush1.msra.mxu0 0.0
    %292 = vmatprep.subr.mxu0 0.0
    %293 = vmatpush1.msra.mxu0 0.0
    %294 = vmatprep.mubr.f32.mxu0 0.0
    %295 = vmatmul.mubr.f32.gmra.mrb[0].mxu0 %v86
    %v296 = vpop.f32.mrb[0].mxu0
    %v297 = vadd.f32 %v73, %v296
    %v298 = vpop.f32.mrb[0].mxu0
    %v299 = vadd.f32 %v77, %v298
    %300 = vdwg.mxu0
    %v301 = vld [vmem:[%s0] sm:$0xf]
    %v304 = vunpack.c.l.s4 1983009808
    %v305 = vunpack.c.0.s8 %v304
    %v306 = vlaneseq
    %v307 = vshrl.u32 %v306, 7
    %v308 = vsub.s32 %v305, %v307
    %v309 = vrot.slane %v301, %v308
    %v310 = vcombine.high %v309, %v309
    %313 = vmatprep.subr.mxu0 %v157
    %314 = vmatpush1.xpose.msra.mxu0 %v155
    %315 = vmatprep.subr.mxu0 0.0
    %316 = vmatpush1.xpose.msra.mxu0 0.0
    %317 = vmatprep.subr.mxu0 0.0
    %318 = vmatpush1.xpose.msra.mxu0 0.0
    %319 = vmatprep.subr.mxu0 0.0
    %320 = vmatpush1.xpose.msra.mxu0 0.0
    %321 = vmatprep.subr.mxu0 0.0
    %322 = vmatpush1.xpose.msra.mxu0 0.0
    %323 = vmatprep.subr.mxu0 0.0
    %324 = vmatpush1.xpose.msra.mxu0 0.0
    %325 = vmatprep.subr.mxu0 0.0
    %326 = vmatpush1.xpose.msra.mxu0 0.0
    %327 = vmatprep.subr.mxu0 0.0
    %328 = vmatpush1.xpose.msra.mxu0 0.0
    %329 = vmatprep.subr.mxu0 0.0
    %330 = vmatpush1.xpose.msra.mxu0 0.0
    %331 = vmatprep.subr.mxu0 0.0
    %332 = vmatpush1.xpose.msra.mxu0 0.0
    %333 = vmatprep.subr.mxu0 0.0
    %334 = vmatpush1.xpose.msra.mxu0 0.0
    %335 = vmatprep.subr.mxu0 0.0
    %336 = vmatpush1.xpose.msra.mxu0 0.0
    %337 = vmatprep.subr.mxu0 0.0
    %338 = vmatpush1.xpose.msra.mxu0 0.0
    %339 = vmatprep.subr.mxu0 0.0
    %340 = vmatpush1.xpose.msra.mxu0 0.0
    %341 = vmatprep.subr.mxu0 0.0
    %342 = vmatpush1.xpose.msra.mxu0 0.0
    %343 = vmatprep.subr.mxu0 0.0
    %344 = vmatpush1.xpose.msra.mxu0 0.0
    %345 = vmatprep.subr.mxu0 0.0
    %346 = vmatpush1.xpose.msra.mxu0 0.0
    %347 = vmatprep.subr.mxu0 0.0
    %348 = vmatpush1.xpose.msra.mxu0 0.0
    %349 = vmatprep.subr.mxu0 0.0
    %350 = vmatpush1.xpose.msra.mxu0 0.0
    %351 = vmatprep.subr.mxu0 0.0
    %352 = vmatpush1.xpose.msra.mxu0 0.0
    %353 = vmatprep.subr.mxu0 0.0
    %354 = vmatpush1.xpose.msra.mxu0 0.0
    %355 = vmatprep.subr.mxu0 0.0
    %356 = vmatpush1.xpose.msra.mxu0 0.0
    %357 = vmatprep.subr.mxu0 0.0
    %358 = vmatpush1.xpose.msra.mxu0 0.0
    %359 = vmatprep.subr.mxu0 0.0
    %360 = vmatpush1.xpose.msra.mxu0 0.0
    %361 = vmatprep.subr.mxu0 0.0
    %362 = vmatpush1.xpose.msra.mxu0 0.0
    %363 = vmatprep.subr.mxu0 0.0
    %364 = vmatpush1.xpose.msra.mxu0 0.0
    %365 = vmatprep.subr.mxu0 0.0
    %366 = vmatpush1.xpose.msra.mxu0 0.0
    %367 = vmatprep.subr.mxu0 0.0
    %368 = vmatpush1.xpose.msra.mxu0 0.0
    %369 = vmatprep.subr.mxu0 0.0
    %370 = vmatpush1.xpose.msra.mxu0 0.0
    %371 = vmatprep.subr.mxu0 0.0
    %372 = vmatpush1.xpose.msra.mxu0 0.0
    %373 = vmatprep.subr.mxu0 0.0
    %374 = vmatpush1.xpose.msra.mxu0 0.0
    %375 = vmatprep.subr.mxu0 0.0
    %376 = vmatpush1.xpose.msra.mxu0 0.0
    %377 = vmatprep.mubr.f32.mxu0 %v310
    %378 = vmatmul.mubr.f32.gmra.mrb[0].mxu0 %v309
    %v379 = vpop.f32.mrb[0].mxu0
    %v380 = vadd.f32 0.0, %v379
    %v381 = vpop.f32.mrb[0].mxu0
    %382 = vdwg.mxu0
    %vm383 = vcmask 9216
    %v384 = vsel %vm383, %v380, -inf
    %385 = vmax.xlane.f32.xlu0 %v384
    %v386 = vpop.xlane.xlu0 %385
    %v387 = vsub.f32 %v380, %v386
    %v388 = vmul.f32 %v387, 1.442695
    %v389 = vpow.pop %v388
    %v390 = vsel %vm383, %v389, 0.0
    %391 = vadd.xlane.f32.xlu0 %v390
    %v392 = vpop.xlane.xlu0 %391
    %v393 = vrcp.pop %v392
    %v394 = vmul.f32 %v389, %v393
    %v395 = vsel %vm383, %v394, -inf
    %v396 = vrot.slane %v395, 4
    %v397 = vmax.f32 %v395, %v396
    %v398 = vrot.slane %v397, 2
    %v399 = vmax.f32 %v397, %v398
    %v400 = vrot.slane %v399, 1
    %v401 = vmax.f32 %v399, %v400
    %vm402 = vcmp.ge.f32.partialorder %v394, %v401
    %v403 = vsel %vm402, %v21, 2
    %v404 = vsel %vm383, %v403, 2147483647
    %v405 = vrot.slane %v404, 4
    %vm406 = vcmp.lt.s32.totalorder %v404, %v405
    %v407 = vsel %vm406, %v404, %v405
    %v408 = vrot.slane %v407, 2
    %vm409 = vcmp.lt.s32.totalorder %v407, %v408
    %v410 = vsel %vm409, %v407, %v408
    %v411 = vrot.slane %v410, 1
    %vm412 = vcmp.lt.s32.totalorder %v410, %v411
    %v413 = vsel %vm412, %v410, %v411
    %vm414 = vcmp.eq.s32.totalorder %v413, %v23
    %v415 = vsel %vm414, 1, 0
    %v416 = vcvt.s32.f32 %v415
    %vm417 = vcmask 8192
    %v418 = vsel %vm417, %v416, 0.0
    %419 = vadd.xlane.f32.xlu0 %v418
    %v420 = vpop.xlane.xlu0 %419
    %v421 = vrot.slane %v420, 4
    %v422 = vadd.f32 %v420, %v421
    %v423 = vrot.slane %v422, 2
    %v424 = vadd.f32 %v422, %v423
    %v425 = vrot.slane %v424, 1
    %v426 = vadd.f32 %v424, %v425
    %s427 = vtos %v426
    %vm428 = vcmp.eq.s32.totalorder %v23, 0
    %v429 = vsel %vm428, 1, 0
    %v430 = vcvt.s32.f32 %v429
    %v431 = vstv %s427
    %v432 = vmul.f32 %v431, %v430
    %v433 = vadd.f32 %v432, 0.0
    %v434 = vlog2.pop %v392
    %v435 = vmul.f32 %v434, 0.6931472
    %v436 = vsub.f32 %v387, %v435
    %v437 = vmul.f32 %v436, %v26
    %v438 = vsel %vm383, %v437, 0.0
    %439 = vadd.xlane.f32.xlu0 %v438
    %v440 = vpop.xlane.xlu0 %439
    %v441 = vrot.slane %v440, 4
    %v442 = vadd.f32 %v440, %v441
    %v443 = vrot.slane %v442, 2
    %v444 = vadd.f32 %v442, %v443
    %v445 = vrot.slane %v444, 1
    %v446 = vadd.f32 %v444, %v445
    %s447 = vtos %v446
    %v448 = vstv %s447
    %v449 = vadd.f32 %v448, 0.0
    %s450 = scalar_lea.vmem %s0, 4
    %v451 = vld [vmem:[%s450] sm:$0xf]
    %v454 = vunpack.c.l.s4 1983009808
    %v455 = vunpack.c.0.s8 %v454
    %v456 = vlaneseq
    %v457 = vshrl.u32 %v456, 7
    %v458 = vsub.s32 %v455, %v457
    %v459 = vrot.slane %v451, %v458
    %v460 = vcombine.high %v459, %v459
    %463 = vmatprep.subr.mxu0 %v228
    %464 = vmatpush1.xpose.msra.mxu0 %v226
    %465 = vmatprep.subr.mxu0 0.0
    %466 = vmatpush1.xpose.msra.mxu0 0.0
    %467 = vmatprep.subr.mxu0 0.0
    %468 = vmatpush1.xpose.msra.mxu0 0.0
    %469 = vmatprep.subr.mxu0 0.0
    %470 = vmatpush1.xpose.msra.mxu0 0.0
    %471 = vmatprep.subr.mxu0 0.0
    %472 = vmatpush1.xpose.msra.mxu0 0.0
    %473 = vmatprep.subr.mxu0 0.0
    %474 = vmatpush1.xpose.msra.mxu0 0.0
    %475 = vmatprep.subr.mxu0 0.0
    %476 = vmatpush1.xpose.msra.mxu0 0.0
    %477 = vmatprep.subr.mxu0 0.0
    %478 = vmatpush1.xpose.msra.mxu0 0.0
    %479 = vmatprep.subr.mxu0 0.0
    %480 = vmatpush1.xpose.msra.mxu0 0.0
    %481 = vmatprep.subr.mxu0 0.0
    %482 = vmatpush1.xpose.msra.mxu0 0.0
    %483 = vmatprep.subr.mxu0 0.0
    %484 = vmatpush1.xpose.msra.mxu0 0.0
    %485 = vmatprep.subr.mxu0 0.0
    %486 = vmatpush1.xpose.msra.mxu0 0.0
    %487 = vmatprep.subr.mxu0 0.0
    %488 = vmatpush1.xpose.msra.mxu0 0.0
    %489 = vmatprep.subr.mxu0 0.0
    %490 = vmatpush1.xpose.msra.mxu0 0.0
    %491 = vmatprep.subr.mxu0 0.0
    %492 = vmatpush1.xpose.msra.mxu0 0.0
    %493 = vmatprep.subr.mxu0 0.0
    %494 = vmatpush1.xpose.msra.mxu0 0.0
    %495 = vmatprep.subr.mxu0 0.0
    %496 = vmatpush1.xpose.msra.mxu0 0.0
    %497 = vmatprep.subr.mxu0 0.0
    %498 = vmatpush1.xpose.msra.mxu0 0.0
    %499 = vmatprep.subr.mxu0 0.0
    %500 = vmatpush1.xpose.msra.mxu0 0.0
    %501 = vmatprep.subr.mxu0 0.0
    %502 = vmatpush1.xpose.msra.mxu0 0.0
    %503 = vmatprep.subr.mxu0 0.0
    %504 = vmatpush1.xpose.msra.mxu0 0.0
    %505 = vmatprep.subr.mxu0 0.0
    %506 = vmatpush1.xpose.msra.mxu0 0.0
    %507 = vmatprep.subr.mxu0 0.0
    %508 = vmatpush1.xpose.msra.mxu0 0.0
    %509 = vmatprep.subr.mxu0 0.0
    %510 = vmatpush1.xpose.msra.mxu0 0.0
    %511 = vmatprep.subr.mxu0 0.0
    %512 = vmatpush1.xpose.msra.mxu0 0.0
    %513 = vmatprep.subr.mxu0 0.0
    %514 = vmatpush1.xpose.msra.mxu0 0.0
    %515 = vmatprep.subr.mxu0 0.0
    %516 = vmatpush1.xpose.msra.mxu0 0.0
    %517 = vmatprep.subr.mxu0 0.0
    %518 = vmatpush1.xpose.msra.mxu0 0.0
    %519 = vmatprep.subr.mxu0 0.0
    %520 = vmatpush1.xpose.msra.mxu0 0.0
    %521 = vmatprep.subr.mxu0 0.0
    %522 = vmatpush1.xpose.msra.mxu0 0.0
    %523 = vmatprep.subr.mxu0 0.0
    %524 = vmatpush1.xpose.msra.mxu0 0.0
    %525 = vmatprep.subr.mxu0 0.0
    %526 = vmatpush1.xpose.msra.mxu0 0.0
    %527 = vmatprep.mubr.f32.mxu0 %v460
    %528 = vmatmul.mubr.f32.gmra.mrb[0].mxu0 %v459
    %v529 = vpop.f32.mrb[0].mxu0
    %v530 = vadd.f32 0.0, %v529
    %v531 = vpop.f32.mrb[0].mxu0
    %532 = vdwg.mxu0
    %v533 = vsel %vm383, %v530, -inf
    %534 = vmax.xlane.f32.xlu0 %v533
    %v535 = vpop.xlane.xlu0 %534
    %v536 = vsub.f32 %v530, %v535
    %v537 = vmul.f32 %v536, 1.442695
    %v538 = vpow.pop %v537
    %v539 = vsel %vm383, %v538, 0.0
    %540 = vadd.xlane.f32.xlu0 %v539
    %v541 = vpop.xlane.xlu0 %540
    %v542 = vrcp.pop %v541
    %v543 = vmul.f32 %v538, %v542
    %v544 = vsel %vm383, %v543, -inf
    %v545 = vrot.slane %v544, 4
    %v546 = vmax.f32 %v544, %v545
    %v547 = vrot.slane %v546, 2
    %v548 = vmax.f32 %v546, %v547
    %v549 = vrot.slane %v548, 1
    %v550 = vmax.f32 %v548, %v549
    %vm551 = vcmp.ge.f32.partialorder %v543, %v550
    %v552 = vsel %vm551, %v21, 2
    %v553 = vsel %vm383, %v552, 2147483647
    %v554 = vrot.slane %v553, 4
    %vm555 = vcmp.lt.s32.totalorder %v553, %v554
    %v556 = vsel %vm555, %v553, %v554
    %v557 = vrot.slane %v556, 2
    %vm558 = vcmp.lt.s32.totalorder %v556, %v557
    %v559 = vsel %vm558, %v556, %v557
    %v560 = vrot.slane %v559, 1
    %vm561 = vcmp.lt.s32.totalorder %v559, %v560
    %v562 = vsel %vm561, %v559, %v560
    %vm563 = vcmp.eq.s32.totalorder %v562, %v23
    %v564 = vsel %vm563, 1, 0
    %v565 = vcvt.s32.f32 %v564
    %v566 = vsel %vm417, %v565, 0.0
    %567 = vadd.xlane.f32.xlu0 %v566
    %v568 = vpop.xlane.xlu0 %567
    %v569 = vrot.slane %v568, 4
    %v570 = vadd.f32 %v568, %v569
    %v571 = vrot.slane %v570, 2
    %v572 = vadd.f32 %v570, %v571
    %v573 = vrot.slane %v572, 1
    %v574 = vadd.f32 %v572, %v573
    %s575 = vtos %v574
    %vm576 = vcmp.eq.s32.totalorder %v23, 1
    %v577 = vsel %vm576, 1, 0
    %v578 = vcvt.s32.f32 %v577
    %v579 = vstv %s575
    %v580 = vmul.f32 %v579, %v578
    %v581 = vadd.f32 %v433, %v580
    %v582 = vlog2.pop %v541
    %v583 = vmul.f32 %v582, 0.6931472
    %v584 = vsub.f32 %v536, %v583
    %v585 = vmul.f32 %v584, %v26
    %v586 = vsel %vm383, %v585, 0.0
    %587 = vadd.xlane.f32.xlu0 %v586
    %v588 = vpop.xlane.xlu0 %587
    %v589 = vrot.slane %v588, 4
    %v590 = vadd.f32 %v588, %v589
    %v591 = vrot.slane %v590, 2
    %v592 = vadd.f32 %v590, %v591
    %v593 = vrot.slane %v592, 1
    %v594 = vadd.f32 %v592, %v593
    %s595 = vtos %v594
    %v596 = vstv %s595
    %v597 = vadd.f32 %v449, %v596
    %s598 = scalar_lea.vmem %s0, 8
    %v599 = vld [vmem:[%s598] sm:$0xf]
    %v602 = vunpack.c.l.s4 1983009808
    %v603 = vunpack.c.0.s8 %v602
    %v604 = vlaneseq
    %v605 = vshrl.u32 %v604, 7
    %v606 = vsub.s32 %v603, %v605
    %v607 = vrot.slane %v599, %v606
    %v608 = vcombine.high %v607, %v607
    %611 = vmatprep.subr.mxu0 %v299
    %612 = vmatpush1.xpose.msra.mxu0 %v297
    %613 = vmatprep.subr.mxu0 0.0
    %614 = vmatpush1.xpose.msra.mxu0 0.0
    %615 = vmatprep.subr.mxu0 0.0
    %616 = vmatpush1.xpose.msra.mxu0 0.0
    %617 = vmatprep.subr.mxu0 0.0
    %618 = vmatpush1.xpose.msra.mxu0 0.0
    %619 = vmatprep.subr.mxu0 0.0
    %620 = vmatpush1.xpose.msra.mxu0 0.0
    %621 = vmatprep.subr.mxu0 0.0
    %622 = vmatpush1.xpose.msra.mxu0 0.0
    %623 = vmatprep.subr.mxu0 0.0
    %624 = vmatpush1.xpose.msra.mxu0 0.0
    %625 = vmatprep.subr.mxu0 0.0
    %626 = vmatpush1.xpose.msra.mxu0 0.0
    %627 = vmatprep.subr.mxu0 0.0
    %628 = vmatpush1.xpose.msra.mxu0 0.0
    %629 = vmatprep.subr.mxu0 0.0
    %630 = vmatpush1.xpose.msra.mxu0 0.0
    %631 = vmatprep.subr.mxu0 0.0
    %632 = vmatpush1.xpose.msra.mxu0 0.0
    %633 = vmatprep.subr.mxu0 0.0
    %634 = vmatpush1.xpose.msra.mxu0 0.0
    %635 = vmatprep.subr.mxu0 0.0
    %636 = vmatpush1.xpose.msra.mxu0 0.0
    %637 = vmatprep.subr.mxu0 0.0
    %638 = vmatpush1.xpose.msra.mxu0 0.0
    %639 = vmatprep.subr.mxu0 0.0
    %640 = vmatpush1.xpose.msra.mxu0 0.0
    %641 = vmatprep.subr.mxu0 0.0
    %642 = vmatpush1.xpose.msra.mxu0 0.0
    %643 = vmatprep.subr.mxu0 0.0
    %644 = vmatpush1.xpose.msra.mxu0 0.0
    %645 = vmatprep.subr.mxu0 0.0
    %646 = vmatpush1.xpose.msra.mxu0 0.0
    %647 = vmatprep.subr.mxu0 0.0
    %648 = vmatpush1.xpose.msra.mxu0 0.0
    %649 = vmatprep.subr.mxu0 0.0
    %650 = vmatpush1.xpose.msra.mxu0 0.0
    %651 = vmatprep.subr.mxu0 0.0
    %652 = vmatpush1.xpose.msra.mxu0 0.0
    %653 = vmatprep.subr.mxu0 0.0
    %654 = vmatpush1.xpose.msra.mxu0 0.0
    %655 = vmatprep.subr.mxu0 0.0
    %656 = vmatpush1.xpose.msra.mxu0 0.0
    %657 = vmatprep.subr.mxu0 0.0
    %658 = vmatpush1.xpose.msra.mxu0 0.0
    %659 = vmatprep.subr.mxu0 0.0
    %660 = vmatpush1.xpose.msra.mxu0 0.0
    %661 = vmatprep.subr.mxu0 0.0
    %662 = vmatpush1.xpose.msra.mxu0 0.0
    %663 = vmatprep.subr.mxu0 0.0
    %664 = vmatpush1.xpose.msra.mxu0 0.0
    %665 = vmatprep.subr.mxu0 0.0
    %666 = vmatpush1.xpose.msra.mxu0 0.0
    %667 = vmatprep.subr.mxu0 0.0
    %668 = vmatpush1.xpose.msra.mxu0 0.0
    %669 = vmatprep.subr.mxu0 0.0
    %670 = vmatpush1.xpose.msra.mxu0 0.0
    %671 = vmatprep.subr.mxu0 0.0
    %672 = vmatpush1.xpose.msra.mxu0 0.0
    %673 = vmatprep.subr.mxu0 0.0
    %674 = vmatpush1.xpose.msra.mxu0 0.0
    %675 = vmatprep.mubr.f32.mxu0 %v608
    %676 = vmatmul.mubr.f32.gmra.mrb[0].mxu0 %v607
    %v677 = vpop.f32.mrb[0].mxu0
    %v678 = vadd.f32 0.0, %v677
    %v679 = vpop.f32.mrb[0].mxu0
    %680 = vdwg.mxu0
    %v681 = vsel %vm383, %v678, -inf
    %682 = vmax.xlane.f32.xlu0 %v681
    %v683 = vpop.xlane.xlu0 %682
    %v684 = vsub.f32 %v678, %v683
    %v685 = vmul.f32 %v684, 1.442695
    %v686 = vpow.pop %v685
    %v687 = vsel %vm383, %v686, 0.0
    %688 = vadd.xlane.f32.xlu0 %v687
    %v689 = vpop.xlane.xlu0 %688
    %v690 = vrcp.pop %v689
    %v691 = vmul.f32 %v686, %v690
    %v692 = vsel %vm383, %v691, -inf
    %v693 = vrot.slane %v692, 4
    %v694 = vmax.f32 %v692, %v693
    %v695 = vrot.slane %v694, 2
    %v696 = vmax.f32 %v694, %v695
    %v697 = vrot.slane %v696, 1
    %v698 = vmax.f32 %v696, %v697
    %vm699 = vcmp.ge.f32.partialorder %v691, %v698
    %v700 = vsel %vm699, %v21, 2
    %v701 = vsel %vm383, %v700, 2147483647
    %v702 = vrot.slane %v701, 4
    %vm703 = vcmp.lt.s32.totalorder %v701, %v702
    %v704 = vsel %vm703, %v701, %v702
    %v705 = vrot.slane %v704, 2
    %vm706 = vcmp.lt.s32.totalorder %v704, %v705
    %v707 = vsel %vm706, %v704, %v705
    %v708 = vrot.slane %v707, 1
    %vm709 = vcmp.lt.s32.totalorder %v707, %v708
    %v710 = vsel %vm709, %v707, %v708
    %vm711 = vcmp.eq.s32.totalorder %v710, %v23
    %v712 = vsel %vm711, 1, 0
    %v713 = vcvt.s32.f32 %v712
    %v714 = vsel %vm417, %v713, 0.0
    %715 = vadd.xlane.f32.xlu0 %v714
    %v716 = vpop.xlane.xlu0 %715
    %v717 = vrot.slane %v716, 4
    %v718 = vadd.f32 %v716, %v717
    %v719 = vrot.slane %v718, 2
    %v720 = vadd.f32 %v718, %v719
    %v721 = vrot.slane %v720, 1
    %v722 = vadd.f32 %v720, %v721
    %s723 = vtos %v722
    %vm724 = vcmp.eq.s32.totalorder %v23, 2
    %v725 = vsel %vm724, 1, 0
    %v726 = vcvt.s32.f32 %v725
    %v727 = vstv %s723
    %v728 = vmul.f32 %v727, %v726
    %v729 = vadd.f32 %v581, %v728
    %v730 = vlog2.pop %v689
    %v731 = vmul.f32 %v730, 0.6931472
    %v732 = vsub.f32 %v684, %v731
    %v733 = vmul.f32 %v732, %v26
    %v734 = vsel %vm383, %v733, 0.0
    %735 = vadd.xlane.f32.xlu0 %v734
    %v736 = vpop.xlane.xlu0 %735
    %v737 = vrot.slane %v736, 4
    %v738 = vadd.f32 %v736, %v737
    %v739 = vrot.slane %v738, 2
    %v740 = vadd.f32 %v738, %v739
    %v741 = vrot.slane %v740, 1
    %v742 = vadd.f32 %v740, %v741
    %s743 = vtos %v742
    %v744 = vstv %s743
    %v745 = vadd.f32 %v597, %v744
    %v746 = vrcp.pop -6.0
    %v747 = vmul.f32 %v745, %v746
    %vm748 = vcmask 0
    %749 = vst.msk [vmem:[#allocation2] sm:$0x1] %vm748, %v747
    %vm750 = vcmask 16384
    %751 = vst.msk [vmem:[%s5] sm:$0x1] %vm750, %v729
    // Predicated region
    $region18: #{g_enc_forward.17} parent=1 // pred_check
      _
    $region19: #{g_enc_forward.17} parent=1 // pred_check_branch
      %753 = sbr.rel (0) target = $region21
    $region20: #{g_enc_forward.17} parent=1 // pred_region
      %s755 = ssub.s32 16, 16
      %756 = vsyncadd [#allocation3], %s755
      %s758 = sshll.u32 [#allocation2], 4
      %s759 = int_to_ptr.vmem [resolvable:$true] %s758
      %761 = dma.vmem_to_hbm [thread:$0]  %s759, 16, %s4, [#allocation3]
    $region21: #{g_enc_forward.17} parent=1 // pred_fallthru
      _
    // Predicated region
    $region22: #{g_enc_forward.17} parent=1 // pred_check
      _
    $region23: #{g_enc_forward.17} parent=1 // pred_check_branch
      %763 = sbr.rel (0) target = $region25
    $region24: #{g_enc_forward.17} parent=1 // pred_region
      _
    $region25: #{g_enc_forward.17} parent=1 // pred_fallthru
      _
    // Predicated region
    $region26: #{g_enc_forward.17} parent=1 // pred_check
      _
    $region27: #{g_enc_forward.17} parent=1 // pred_check_branch
      %765 = sbr.rel (0) target = $region29
    $region28: #{g_enc_forward.17} parent=1 // pred_region
      %766 = dma.done [#allocation3], 16
    $region29: #{g_enc_forward.17} parent=1 // pred_fallthru
      _
    // Predicated region
    $region30: #{g_enc_forward.17} parent=1 // pred_check
      _
    $region31: #{g_enc_forward.17} parent=1 // pred_check_branch
      %768 = sbr.rel (0) target = $region33
    $region32: #{g_enc_forward.17} parent=1 // pred_region
      _
    $region33: #{g_enc_forward.17} parent=1 // pred_fallthru
      _
    %769 = vsyncpa [#allocation3], 1

</llo_original>
